<compile_context>
chip_gen: v6e
topology: v6e:2x2x1
jax: 0.10.0
libtpu: 0.0.40
codegen_flags: <defaults>
</compile_context>

<pallas_src>
import functools

import jax
import jax.numpy as jnp
from jax.experimental import pallas as pl
from jax.experimental.pallas import tpu as pltpu

EPS = 1e-5
VMEM_LIMIT_BYTES = 48 * 1024 * 1024  # explicit scoped-VMEM budget; fits v7x's 64 MiB/TC


# --------------------------------------------------------------------------- tiling helpers
def _pick_tile(m, target=512):
    """Largest tile <= target dividing m (multiples of 16 keep bf16 slabs aligned); else m."""
    for t in (512, 256, 128, 64, 32, 16):
        if t <= target and m % t == 0:
            return t
    return m


def _pick_tile_128(m, target=512):
    """Largest multiple-of-128 tile <= target dividing m (lane-dense blocks), or None."""
    for t in (512, 384, 256, 128):
        if t <= target and m % t == 0:
            return t
    return None


# --------------------------------------------------------------------------- kernels
def conv_block_mk_kernel(p_ref, w_ref, b_ref, o_ref, *, merge_phases):
    """(pixels, channels) layout — used when Cout >= 128 or M is too small to lane-tile.

    p_ref: (P, TM, K) bf16   im2col patches (all 4 pool phases of TM pooled pixels)
    w_ref: (K, Cout)  bf16   conv weight matrix with BN scale pre-folded
    b_ref: (1, Cout)  f32    folded BatchNorm bias
    o_ref: (TM, Cout) f32    fused conv+BN+ReLU+maxpool output block
    """
    P, TM, K = p_ref.shape
    if merge_phases:
        # All 4 pool phases in ONE MXU matmul: fewer fill/drain cycles, better systolic fill
        # when per-phase TM is small (deep layers).
        y = jnp.dot(p_ref[...].reshape(P * TM, K), w_ref[...],
                    preferred_element_type=jnp.float32)              # (P*TM, Cout)
        zs = [y[p * TM:(p + 1) * TM, :] for p in range(P)]
    else:
        # Slab-unaligned tiny tile (TM not a multiple of 16): safe per-phase matmuls.
        w = w_ref[...]
        zs = [jnp.dot(p_ref[p], w, preferred_element_type=jnp.float32) for p in range(P)]
    acc = zs[0]
    for zp in zs[1:]:
        acc = jnp.maximum(acc, zp)                                   # 2x2 max-pool (bias-free)
    # Bias + ReLU hoisted out of the phase max: max(z_p) + b == max(z_p + b).
    o_ref[...] = jnp.maximum(acc + b_ref[...], 0.0)


def conv_block_km_kernel(wt_ref, p_ref, b_ref, o_ref):
    """(channels, pixels) layout — used when Cout < 128 so patch loads and output stores are
    lane-dense along the pooled-pixel axis (no masked vst for Cout = 16/32/64).

    grid = (M tiles, 4 pool phases); the phase axis is a reduction accumulated in the
    resident output block.
    wt_ref: (Cout, K) bf16 (BN scale folded) ; p_ref: (K, TM) bf16 ;
    b_ref: (Cout, 1) f32 ; o_ref: (Cout, TM) f32
    """
    ph = pl.program_id(1)
    y = jnp.dot(wt_ref[...], p_ref[...], preferred_element_type=jnp.float32)  # (Cout, TM)

    @pl.when(ph == 0)
    def _():
        o_ref[...] = y

    @pl.when(ph > 0)
    def _():
        o_ref[...] = jnp.maximum(o_ref[...], y)      # 2x2 max-pool over phases

    @pl.when(ph == pl.num_programs(1) - 1)
    def _():
        # Bias + ReLU once, after all phases (valid: max(y_p) + b == max(y_p + b)).
        o_ref[...] = jnp.maximum(o_ref[...] + b_ref[...], 0.0)


def mlp_kernel(x_ref, w1_ref, b1_ref, w2_ref, b2_ref, o_ref):
    """fc1 -> ReLU -> (Dropout eval = identity) -> fc2 -> sigmoid (stable tanh form)."""
    h = jnp.dot(x_ref[...], w1_ref[...], preferred_element_type=jnp.float32) + b1_ref[...]
    h = jnp.maximum(h, 0.0)
    logits = jnp.dot(h.astype(w2_ref.dtype), w2_ref[...],
                     preferred_element_type=jnp.float32) + b2_ref[...]
    # sigmoid(x) == 0.5 * (1 + tanh(x/2)) : no exp overflow for large |x|.
    o_ref[...] = 0.5 * (jnp.tanh(0.5 * logits) + 1.0)


# --------------------------------------------------------------------------- wrappers
def conv_block_mk(patches, w_mat, bias_row):
    P, M, K = patches.shape
    Cout = w_mat.shape[1]
    tm = _pick_tile(M)
    merge = (tm % 16 == 0)  # merged-phase matmul only when the bf16 tile is slab-aligned
    kernel = functools.partial(conv_block_mk_kernel, merge_phases=merge)
    return pl.pallas_call(
        kernel,
        out_shape=jax.ShapeDtypeStruct((M, Cout), jnp.float32),
        grid=(M // tm,),
        in_specs=[
            pl.BlockSpec((P, tm, K), lambda i: (0, i, 0)),
            pl.BlockSpec((K, Cout), lambda i: (0, 0)),
            pl.BlockSpec((1, Cout), lambda i: (0, 0)),
        ],
        out_specs=pl.BlockSpec((tm, Cout), lambda i: (i, 0)),
        compiler_params=pltpu.CompilerParams(
            dimension_semantics=("parallel",),
            vmem_limit_bytes=VMEM_LIMIT_BYTES),
    )(patches, w_mat, bias_row)


def conv_block_km(patches_km, wt_mat, bias_col, m_total, tm):
    K, PM = patches_km.shape
    P = PM // m_total
    Cout = wt_mat.shape[0]
    mtiles = m_total // tm
    return pl.pallas_call(
        conv_block_km_kernel,
        out_shape=jax.ShapeDtypeStruct((Cout, m_total), jnp.float32),
        grid=(mtiles, P),
        in_specs=[
            pl.BlockSpec((Cout, K), lambda i, p: (0, 0)),
            pl.BlockSpec((K, tm), lambda i, p: (0, p * mtiles + i)),
            pl.BlockSpec((Cout, 1), lambda i, p: (0, 0)),
        ],
        out_specs=pl.BlockSpec((Cout, tm), lambda i, p: (0, i)),
        compiler_params=pltpu.CompilerParams(
            dimension_semantics=("parallel", "arbitrary"),
            vmem_limit_bytes=VMEM_LIMIT_BYTES),
    )(wt_mat, patches_km, bias_col)


def mlp_head(x, w1, b1, w2, b2):
    N, C = x.shape
    H1 = w1.shape[1]
    C2 = w2.shape[1]
    tn = _pick_tile(N, target=256)
    return pl.pallas_call(
        mlp_kernel,
        out_shape=jax.ShapeDtypeStruct((N, C2), jnp.float32),
        grid=(N // tn,),
        in_specs=[
            pl.BlockSpec((tn, C), lambda i: (i, 0)),
            pl.BlockSpec((C, H1), lambda i: (0, 0)),
            pl.BlockSpec((1, H1), lambda i: (0, 0)),
            pl.BlockSpec((H1, C2), lambda i: (0, 0)),
            pl.BlockSpec((1, C2), lambda i: (0, 0)),
        ],
        out_specs=pl.BlockSpec((tn, C2), lambda i: (i, 0)),
        compiler_params=pltpu.CompilerParams(
            dimension_semantics=("parallel",),
            vmem_limit_bytes=VMEM_LIMIT_BYTES),
    )(x, w1, b1, w2, b2)


# --------------------------------------------------------------------------- glue (layout only)
def im2col_pool_phases(x):
    """x: (N,H,W,C) f32 -> (4, M, 9C) phase tensor, M = N*(H/2)*(W/2).
    K-axis ordering is (dy, dx, ci), matching conv_weight_to_matrix.  Phase p = py*2+px
    selects conv output pixels (2h'+py, 2w'+px) of each 2x2 pool window."""
    N, H, W, C = x.shape
    xp = jnp.pad(x, ((0, 0), (1, 1), (1, 1), (0, 0)))
    cols = [xp[:, dy:dy + H, dx:dx + W, :] for dy in range(3) for dx in range(3)]
    pat = jnp.concatenate(cols, axis=-1)                     # (N, H, W, 9C)
    K = 9 * C
    phases = [pat[:, py::2, px::2, :].reshape(-1, K) for py in range(2) for px in range(2)]
    return jnp.stack(phases, axis=0)                         # (4, M, K)


def fold_bn(conv_b, gamma, beta, mean, var):
    scale = gamma / jnp.sqrt(var + EPS)
    bias = beta + (conv_b - mean) * scale
    return scale, bias


def conv_weight_to_matrix(w):
    # PyTorch conv weight (Cout, Cin, 3, 3) -> (9*Cin, Cout) with k = (dy*3+dx)*Cin + ci
    Cout, Cin = w.shape[0], w.shape[1]
    return jnp.transpose(w, (2, 3, 1, 0)).reshape(9 * Cin, Cout)


# --------------------------------------------------------------------------- params
def init_params(key):
    channels = [3, 16, 32, 64, 128, 256]
    params = {"conv": []}
    keys = jax.random.split(key, 2 * len(channels) + 4)
    ki = 0
    for layer in range(5):
        cin, cout = channels[layer], channels[layer + 1]
        w = jax.random.normal(keys[ki], (cout, cin, 3, 3), jnp.float32) * jnp.sqrt(2.0 / (cin * 9))
        ki += 1
        b = 0.01 * jax.random.normal(keys[ki], (cout,), jnp.float32)
        ki += 1
        params["conv"].append(dict(
            w=w, b=b,
            gamma=jnp.ones((cout,), jnp.float32),
            beta=jnp.zeros((cout,), jnp.float32),
            mean=jnp.zeros((cout,), jnp.float32),
            var=jnp.ones((cout,), jnp.float32),
        ))
    params["fc1_w"] = jax.random.normal(keys[ki], (256 * 5 * 5, 128), jnp.float32) * jnp.sqrt(2.0 / 6400)
    ki += 1
    params["fc1_b"] = 0.01 * jax.random.normal(keys[ki], (128,), jnp.float32)
    ki += 1
    params["fc2_w"] = jax.random.normal(keys[ki], (128, 2), jnp.float32) * jnp.sqrt(1.0 / 128)
    ki += 1
    params["fc2_b"] = 0.01 * jax.random.normal(keys[ki], (2,), jnp.float32)
    return params


# --------------------------------------------------------------------------- forward
def forward(params, x_nchw):
    x = jnp.transpose(x_nchw, (0, 2, 3, 1)).astype(jnp.float32)   # NCHW -> NHWC
    for lp in params["conv"]:
        N, H, W, Cin = x.shape
        assert H % 2 == 0 and W % 2 == 0, "2x2 max-pool expects even spatial dims"
        Cout = lp["w"].shape[0]
        H2, W2 = H // 2, W // 2
        M = N * H2 * W2
        K = 9 * Cin
        # TODO(synk): patch construction still round-trips an im2col tensor through HBM;
        # building the 9 shifted views in-kernel from the padded activation would cut that
        # traffic further but needs strided in-kernel slicing not attempted here.
        phases = im2col_pool_phases(x)                              # (4, M, K) XLA layout glue
        scale, bias = fold_bn(lp["b"], lp["gamma"], lp["beta"], lp["mean"], lp["var"])
        # Fold the BN scale into the conv weight matrix (per output channel) -> no in-kernel mul.
        w_mat = (conv_weight_to_matrix(lp["w"]) * scale[None, :]).astype(jnp.bfloat16)

        tm128 = _pick_tile_128(M)
        if Cout < 128 and tm128 is not None:
            # Channel-major path: pooled-pixel axis on lanes -> dense patch loads / stores.
            patches_km = jnp.transpose(phases, (2, 0, 1)).reshape(K, 4 * M).astype(jnp.bfloat16)
            y = conv_block_km(patches_km, w_mat.T, bias.reshape(-1, 1), M, tm128)  # (Cout, M)
            x = y.T.reshape(N, H2, W2, Cout)
        else:
            patches = phases.astype(jnp.bfloat16)                    # (4, M, K)
            y = conv_block_mk(patches, w_mat, bias.reshape(1, -1))    # (M, Cout)
            x = y.reshape(N, H2, W2, Cout)

    # Classifier head.
    N, Hf, Wf, Cf = x.shape
    assert Hf == 1 and Wf == 1, "this script assumes 32x32 inputs (1x1 map before avg_pool)"
    # TODO(synk): general AdaptiveAvgPool2d for pre-pool maps larger than 1x1 is not implemented.
    # For a 1x1 map, AdaptiveAvgPool2d((5,5)) is pure replication, so flatten+fc1 on the
    # replicated (N, 6400) vector is EXACTLY fc1 with its weight summed over the 25 spatial
    # taps applied to the (N, 256) vector (25x less fc1 traffic, no (N, 6400) HBM tensor).
    w1_eff = params["fc1_w"].reshape(Cf, 25, -1).sum(axis=1)          # (256, 128)
    v = x.reshape(N, Cf)
    out = mlp_head(v.astype(jnp.bfloat16), w1_eff.astype(jnp.bfloat16),
                   params["fc1_b"].reshape(1, -1),
                   params["fc2_w"].astype(jnp.bfloat16),
                   params["fc2_b"].reshape(1, -1))
    return out  # (N, 2), sigmoid probabilities


# --------------------------------------------------------------------------- main
if __name__ == "__main__":
    key = jax.random.PRNGKey(0)
    pkey, xkey = jax.random.split(key)
    params = init_params(pkey)
    x = jax.random.normal(xkey, (2, 3, 32, 32), jnp.float32)  # NCHW like PyTorch

    out = jax.jit(forward)(params, x)
    out = jax.block_until_ready(out)

    assert out.shape == (2, 2), out.shape
    assert bool(jnp.all(jnp.isfinite(out)))
    assert bool(jnp.all((out >= 0.0) & (out <= 1.0)))
    print("KERNEL_OK")
</pallas_src>

<mosaic_0001>
module attributes {stable_mosaic.version = 11 : i64} {
  func.func @conv_block_km_kernel(%arg0: i32, %arg1: i32, %arg2: memref<16x27xbf16, #tpu.memory_space<vmem>>, %arg3: memref<27x512xbf16, #tpu.memory_space<vmem>>, %arg4: memref<16x1xf32, #tpu.memory_space<vmem>>, %arg5: memref<16x512xf32, #tpu.memory_space<vmem>>) attributes {dimension_semantics = [#tpu.dimension_semantics<parallel>, #tpu.dimension_semantics<arbitrary>], iteration_bounds = array<i64: 1, 4>, scalar_prefetch = 0 : i64, scratch_operands = 0 : i64, tpu.core_type = #tpu.core_type<tc>, window_params = [{pipeline_mode = #tpu.pipeline_mode<synchronous>, transform_indices = @transform_0, window_bounds = array<i64: 16, 27>}, {transform_indices = @transform_1, window_bounds = array<i64: 27, 512>}, {pipeline_mode = #tpu.pipeline_mode<synchronous>, transform_indices = @transform_2, window_bounds = array<i64: 16, 1>}, {transform_indices = @transform_3, window_bounds = array<i64: 16, 512>}]} {
    %c0 = arith.constant 0 : index
    %c0_0 = arith.constant 0 : index
    %0 = vector.load %arg2[%c0, %c0_0] : memref<16x27xbf16, #tpu.memory_space<vmem>>, vector<16x27xbf16>
    %c0_1 = arith.constant 0 : index
    %c0_2 = arith.constant 0 : index
    %1 = vector.load %arg3[%c0_1, %c0_2] : memref<27x512xbf16, #tpu.memory_space<vmem>>, vector<27x512xbf16>
    %cst = arith.constant dense<0.000000e+00> : vector<16x512xf32>
    %2 = tpu.matmul %0, %1, %cst {dimension_numbers = #tpu.dot_dimension_numbers<[1], [0], [0], [1], [0, 0, 1, 1], [], []>} : vector<16x27xbf16>, vector<27x512xbf16>, vector<16x512xf32> -> vector<16x512xf32>
    %c0_i32 = arith.constant 0 : i32
    %3 = arith.cmpi eq, %arg1, %c0_i32 : i32
    %4 = arith.extui %3 : i1 to i32
    %c0_i32_3 = arith.constant 0 : i32
    %5 = arith.cmpi ne, %4, %c0_i32_3 : i32
    scf.if %5 {
      %c0_7 = arith.constant 0 : index
      %c0_8 = arith.constant 0 : index
      %12 = vector.load %arg5[%c0_7, %c0_8] : memref<16x512xf32, #tpu.memory_space<vmem>>, vector<16x512xf32>
      tpu.vector_store %arg5[%c0_7, %c0_8], %2 {strides = array<i32>} : memref<16x512xf32, #tpu.memory_space<vmem>>, vector<16x512xf32>,
    } else {
    }
    %c0_i32_4 = arith.constant 0 : i32
    %6 = arith.cmpi sgt, %arg1, %c0_i32_4 : i32
    %7 = arith.extui %6 : i1 to i32
    %c0_i32_5 = arith.constant 0 : i32
    %8 = arith.cmpi ne, %7, %c0_i32_5 : i32
    scf.if %8 {
      %c0_7 = arith.constant 0 : index
      %c0_8 = arith.constant 0 : index
      %12 = vector.load %arg5[%c0_7, %c0_8] : memref<16x512xf32, #tpu.memory_space<vmem>>, vector<16x512xf32>
      %13 = arith.maximumf %12, %2 : vector<16x512xf32>
      %c0_9 = arith.constant 0 : index
      %c0_10 = arith.constant 0 : index
      %14 = vector.load %arg5[%c0_9, %c0_10] : memref<16x512xf32, #tpu.memory_space<vmem>>, vector<16x512xf32>
      tpu.vector_store %arg5[%c0_9, %c0_10], %13 {strides = array<i32>} : memref<16x512xf32, #tpu.memory_space<vmem>>, vector<16x512xf32>,
    } else {
    }
    %c3_i32 = arith.constant 3 : i32
    %9 = arith.cmpi eq, %arg1, %c3_i32 : i32
    %10 = arith.extui %9 : i1 to i32
    %c0_i32_6 = arith.constant 0 : i32
    %11 = arith.cmpi ne, %10, %c0_i32_6 : i32
    scf.if %11 {
      %c0_7 = arith.constant 0 : index
      %c0_8 = arith.constant 0 : index
      %12 = vector.load %arg5[%c0_7, %c0_8] : memref<16x512xf32, #tpu.memory_space<vmem>>, vector<16x512xf32>
      %c0_9 = arith.constant 0 : index
      %c0_10 = arith.constant 0 : index
      %13 = vector.load %arg4[%c0_9, %c0_10] : memref<16x1xf32, #tpu.memory_space<vmem>>, vector<16x1xf32>
      %14 = vector.broadcast %13 : vector<16x1xf32> to vector<16x512xf32>
      %15 = arith.addf %12, %14 : vector<16x512xf32>
      %cst_11 = arith.constant 0.000000e+00 : f32
      %16 = vector.broadcast %cst_11 : f32 to vector<16x512xf32>
      %17 = arith.maximumf %15, %16 : vector<16x512xf32>
      %c0_12 = arith.constant 0 : index
      %c0_13 = arith.constant 0 : index
      %18 = vector.load %arg5[%c0_12, %c0_13] : memref<16x512xf32, #tpu.memory_space<vmem>>, vector<16x512xf32>
      tpu.vector_store %arg5[%c0_12, %c0_13], %17 {strides = array<i32>} : memref<16x512xf32, #tpu.memory_space<vmem>>, vector<16x512xf32>,
    } else {
    }
    return
  }
  func.func @transform_0(%arg0: i32, %arg1: i32) -> (i32, i32) {
    %c0_i32 = arith.constant 0 : i32
    %c0_i32_0 = arith.constant 0 : i32
    %c0_i32_1 = arith.constant 0 : i32
    return %c0_i32, %c0_i32_0 : i32, i32
  }
  func.func @transform_1(%arg0: i32, %arg1: i32) -> (i32, i32) {
    %c1_i32 = arith.constant 1 : i32
    %0 = arith.muli %arg1, %c1_i32 : i32
    %1 = arith.addi %0, %arg0 : i32
    %c0_i32 = arith.constant 0 : i32
    %c0_i32_0 = arith.constant 0 : i32
    return %c0_i32, %1 : i32, i32
  }
  func.func @transform_2(%arg0: i32, %arg1: i32) -> (i32, i32) {
    %c0_i32 = arith.constant 0 : i32
    %c0_i32_0 = arith.constant 0 : i32
    %c0_i32_1 = arith.constant 0 : i32
    return %c0_i32, %c0_i32_0 : i32, i32
  }
  func.func @transform_3(%arg0: i32, %arg1: i32) -> (i32, i32) {
    %c0_i32 = arith.constant 0 : i32
    %c0_i32_0 = arith.constant 0 : i32
    return %c0_i32, %arg0 : i32, i32
  }
}

module attributes {stable_mosaic.version = 11 : i64} {
  func.func @conv_block_km_kernel(%arg0: i32, %arg1: i32, %arg2: memref<32x144xbf16, #tpu.memory_space<vmem>>, %arg3: memref<144x128xbf16, #tpu.memory_space<vmem>>, %arg4: memref<32x1xf32, #tpu.memory_space<vmem>>, %arg5: memref<32x128xf32, #tpu.memory_space<vmem>>) attributes {dimension_semantics = [#tpu.dimension_semantics<parallel>, #tpu.dimension_semantics<arbitrary>], iteration_bounds = array<i64: 1, 4>, scalar_prefetch = 0 : i64, scratch_operands = 0 : i64, tpu.core_type = #tpu.core_type<tc>, window_params = [{pipeline_mode = #tpu.pipeline_mode<synchronous>, transform_indices = @transform_0, window_bounds = array<i64: 32, 144>}, {transform_indices = @transform_1, window_bounds = array<i64: 144, 128>}, {pipeline_mode = #tpu.pipeline_mode<synchronous>, transform_indices = @transform_2, window_bounds = array<i64: 32, 1>}, {transform_indices = @transform_3, window_bounds = array<i64: 32, 128>}]} {
    %c0 = arith.constant 0 : index
    %c0_0 = arith.constant 0 : index
    %0 = vector.load %arg2[%c0, %c0_0] : memref<32x144xbf16, #tpu.memory_space<vmem>>, vector<32x144xbf16>
    %c0_1 = arith.constant 0 : index
    %c0_2 = arith.constant 0 : index
    %1 = vector.load %arg3[%c0_1, %c0_2] : memref<144x128xbf16, #tpu.memory_space<vmem>>, vector<144x128xbf16>
    %cst = arith.constant dense<0.000000e+00> : vector<32x128xf32>
    %2 = tpu.matmul %0, %1, %cst {dimension_numbers = #tpu.dot_dimension_numbers<[1], [0], [0], [1], [0, 0, 1, 1], [], []>} : vector<32x144xbf16>, vector<144x128xbf16>, vector<32x128xf32> -> vector<32x128xf32>
    %c0_i32 = arith.constant 0 : i32
    %3 = arith.cmpi eq, %arg1, %c0_i32 : i32
    %4 = arith.extui %3 : i1 to i32
    %c0_i32_3 = arith.constant 0 : i32
    %5 = arith.cmpi ne, %4, %c0_i32_3 : i32
    scf.if %5 {
      %c0_7 = arith.constant 0 : index
      %c0_8 = arith.constant 0 : index
      %12 = vector.load %arg5[%c0_7, %c0_8] : memref<32x128xf32, #tpu.memory_space<vmem>>, vector<32x128xf32>
      tpu.vector_store %arg5[%c0_7, %c0_8], %2 {strides = array<i32>} : memref<32x128xf32, #tpu.memory_space<vmem>>, vector<32x128xf32>,
    } else {
    }
    %c0_i32_4 = arith.constant 0 : i32
    %6 = arith.cmpi sgt, %arg1, %c0_i32_4 : i32
    %7 = arith.extui %6 : i1 to i32
    %c0_i32_5 = arith.constant 0 : i32
    %8 = arith.cmpi ne, %7, %c0_i32_5 : i32
    scf.if %8 {
      %c0_7 = arith.constant 0 : index
      %c0_8 = arith.constant 0 : index
      %12 = vector.load %arg5[%c0_7, %c0_8] : memref<32x128xf32, #tpu.memory_space<vmem>>, vector<32x128xf32>
      %13 = arith.maximumf %12, %2 : vector<32x128xf32>
      %c0_9 = arith.constant 0 : index
      %c0_10 = arith.constant 0 : index
      %14 = vector.load %arg5[%c0_9, %c0_10] : memref<32x128xf32, #tpu.memory_space<vmem>>, vector<32x128xf32>
      tpu.vector_store %arg5[%c0_9, %c0_10], %13 {strides = array<i32>} : memref<32x128xf32, #tpu.memory_space<vmem>>, vector<32x128xf32>,
    } else {
    }
    %c3_i32 = arith.constant 3 : i32
    %9 = arith.cmpi eq, %arg1, %c3_i32 : i32
    %10 = arith.extui %9 : i1 to i32
    %c0_i32_6 = arith.constant 0 : i32
    %11 = arith.cmpi ne, %10, %c0_i32_6 : i32
    scf.if %11 {
      %c0_7 = arith.constant 0 : index
      %c0_8 = arith.constant 0 : index
      %12 = vector.load %arg5[%c0_7, %c0_8] : memref<32x128xf32, #tpu.memory_space<vmem>>, vector<32x128xf32>
      %c0_9 = arith.constant 0 : index
      %c0_10 = arith.constant 0 : index
      %13 = vector.load %arg4[%c0_9, %c0_10] : memref<32x1xf32, #tpu.memory_space<vmem>>, vector<32x1xf32>
      %14 = vector.broadcast %13 : vector<32x1xf32> to vector<32x128xf32>
      %15 = arith.addf %12, %14 : vector<32x128xf32>
      %cst_11 = arith.constant 0.000000e+00 : f32
      %16 = vector.broadcast %cst_11 : f32 to vector<32x128xf32>
      %17 = arith.maximumf %15, %16 : vector<32x128xf32>
      %c0_12 = arith.constant 0 : index
      %c0_13 = arith.constant 0 : index
      %18 = vector.load %arg5[%c0_12, %c0_13] : memref<32x128xf32, #tpu.memory_space<vmem>>, vector<32x128xf32>
      tpu.vector_store %arg5[%c0_12, %c0_13], %17 {strides = array<i32>} : memref<32x128xf32, #tpu.memory_space<vmem>>, vector<32x128xf32>,
    } else {
    }
    return
  }
  func.func @transform_0(%arg0: i32, %arg1: i32) -> (i32, i32) {
    %c0_i32 = arith.constant 0 : i32
    %c0_i32_0 = arith.constant 0 : i32
    %c0_i32_1 = arith.constant 0 : i32
    return %c0_i32, %c0_i32_0 : i32, i32
  }
  func.func @transform_1(%arg0: i32, %arg1: i32) -> (i32, i32) {
    %c1_i32 = arith.constant 1 : i32
    %0 = arith.muli %arg1, %c1_i32 : i32
    %1 = arith.addi %0, %arg0 : i32
    %c0_i32 = arith.constant 0 : i32
    %c0_i32_0 = arith.constant 0 : i32
    return %c0_i32, %1 : i32, i32
  }
  func.func @transform_2(%arg0: i32, %arg1: i32) -> (i32, i32) {
    %c0_i32 = arith.constant 0 : i32
    %c0_i32_0 = arith.constant 0 : i32
    %c0_i32_1 = arith.constant 0 : i32
    return %c0_i32, %c0_i32_0 : i32, i32
  }
  func.func @transform_3(%arg0: i32, %arg1: i32) -> (i32, i32) {
    %c0_i32 = arith.constant 0 : i32
    %c0_i32_0 = arith.constant 0 : i32
    return %c0_i32, %arg0 : i32, i32
  }
}

module attributes {stable_mosaic.version = 11 : i64} {
  func.func @conv_block_mk_kernel(%arg0: i32, %arg1: memref<4x32x288xbf16, #tpu.memory_space<vmem>>, %arg2: memref<288x64xbf16, #tpu.memory_space<vmem>>, %arg3: memref<1x64xf32, #tpu.memory_space<vmem>>, %arg4: memref<32x64xf32, #tpu.memory_space<vmem>>) attributes {dimension_semantics = [#tpu.dimension_semantics<parallel>], iteration_bounds = array<i64: 1>, scalar_prefetch = 0 : i64, scratch_operands = 0 : i64, tpu.core_type = #tpu.core_type<tc>, window_params = [{transform_indices = @transform_0, window_bounds = array<i64: 4, 32, 288>}, {pipeline_mode = #tpu.pipeline_mode<synchronous>, transform_indices = @transform_1, window_bounds = array<i64: 288, 64>}, {pipeline_mode = #tpu.pipeline_mode<synchronous>, transform_indices = @transform_2, window_bounds = array<i64: 1, 64>}, {transform_indices = @transform_3, window_bounds = array<i64: 32, 64>}]} {
    %c0 = arith.constant 0 : index
    %c0_0 = arith.constant 0 : index
    %c0_1 = arith.constant 0 : index
    %0 = vector.load %arg1[%c0, %c0_0, %c0_1] : memref<4x32x288xbf16, #tpu.memory_space<vmem>>, vector<4x32x288xbf16>
    %1 = vector.shape_cast %0 : vector<4x32x288xbf16> to vector<128x288xbf16>
    %c0_2 = arith.constant 0 : index
    %c0_3 = arith.constant 0 : index
    %2 = vector.load %arg2[%c0_2, %c0_3] : memref<288x64xbf16, #tpu.memory_space<vmem>>, vector<288x64xbf16>
    %cst = arith.constant dense<0.000000e+00> : vector<128x64xf32>
    %3 = tpu.matmul %1, %2, %cst {dimension_numbers = #tpu.dot_dimension_numbers<[1], [0], [0], [1], [0, 0, 1, 1], [], []>} : vector<128x288xbf16>, vector<288x64xbf16>, vector<128x64xf32> -> vector<128x64xf32>
    %4 = vector.extract_strided_slice %3 {offsets = [0, 0], sizes = [32, 64], strides = [1, 1]} : vector<128x64xf32> to vector<32x64xf32>
    %5 = vector.extract_strided_slice %3 {offsets = [32, 0], sizes = [32, 64], strides = [1, 1]} : vector<128x64xf32> to vector<32x64xf32>
    %6 = vector.extract_strided_slice %3 {offsets = [64, 0], sizes = [32, 64], strides = [1, 1]} : vector<128x64xf32> to vector<32x64xf32>
    %7 = vector.extract_strided_slice %3 {offsets = [96, 0], sizes = [32, 64], strides = [1, 1]} : vector<128x64xf32> to vector<32x64xf32>
    %8 = arith.maximumf %4, %5 : vector<32x64xf32>
    %9 = arith.maximumf %8, %6 : vector<32x64xf32>
    %10 = arith.maximumf %9, %7 : vector<32x64xf32>
    %c0_4 = arith.constant 0 : index
    %c0_5 = arith.constant 0 : index
    %11 = vector.load %arg3[%c0_4, %c0_5] : memref<1x64xf32, #tpu.memory_space<vmem>>, vector<1x64xf32>
    %12 = vector.broadcast %11 : vector<1x64xf32> to vector<32x64xf32>
    %13 = arith.addf %10, %12 : vector<32x64xf32>
    %cst_6 = arith.constant 0.000000e+00 : f32
    %14 = vector.broadcast %cst_6 : f32 to vector<32x64xf32>
    %15 = arith.maximumf %13, %14 : vector<32x64xf32>
    %c0_7 = arith.constant 0 : index
    %c0_8 = arith.constant 0 : index
    %16 = vector.load %arg4[%c0_7, %c0_8] : memref<32x64xf32, #tpu.memory_space<vmem>>, vector<32x64xf32>
    tpu.vector_store %arg4[%c0_7, %c0_8], %15 {strides = array<i32>} : memref<32x64xf32, #tpu.memory_space<vmem>>, vector<32x64xf32>,
    return
  }
  func.func @transform_0(%arg0: i32) -> (i32, i32, i32) {
    %c0_i32 = arith.constant 0 : i32
    %c0_i32_0 = arith.constant 0 : i32
    %c0_i32_1 = arith.constant 0 : i32
    return %c0_i32, %arg0, %c0_i32_0 : i32, i32, i32
  }
  func.func @transform_1(%arg0: i32) -> (i32, i32) {
    %c0_i32 = arith.constant 0 : i32
    %c0_i32_0 = arith.constant 0 : i32
    %c0_i32_1 = arith.constant 0 : i32
    return %c0_i32, %c0_i32_0 : i32, i32
  }
  func.func @transform_2(%arg0: i32) -> (i32, i32) {
    %c0_i32 = arith.constant 0 : i32
    %c0_i32_0 = arith.constant 0 : i32
    %c0_i32_1 = arith.constant 0 : i32
    return %c0_i32, %c0_i32_0 : i32, i32
  }
  func.func @transform_3(%arg0: i32) -> (i32, i32) {
    %c0_i32 = arith.constant 0 : i32
    %c0_i32_0 = arith.constant 0 : i32
    return %arg0, %c0_i32 : i32, i32
  }
}

module attributes {stable_mosaic.version = 11 : i64} {
  func.func @conv_block_mk_kernel(%arg0: i32, %arg1: memref<4x8x576xbf16, #tpu.memory_space<vmem>>, %arg2: memref<576x128xbf16, #tpu.memory_space<vmem>>, %arg3: memref<1x128xf32, #tpu.memory_space<vmem>>, %arg4: memref<8x128xf32, #tpu.memory_space<vmem>>) attributes {dimension_semantics = [#tpu.dimension_semantics<parallel>], iteration_bounds = array<i64: 1>, scalar_prefetch = 0 : i64, scratch_operands = 0 : i64, tpu.core_type = #tpu.core_type<tc>, window_params = [{transform_indices = @transform_0, window_bounds = array<i64: 4, 8, 576>}, {pipeline_mode = #tpu.pipeline_mode<synchronous>, transform_indices = @transform_1, window_bounds = array<i64: 576, 128>}, {pipeline_mode = #tpu.pipeline_mode<synchronous>, transform_indices = @transform_2, window_bounds = array<i64: 1, 128>}, {transform_indices = @transform_3, window_bounds = array<i64: 8, 128>}]} {
    %c0 = arith.constant 0 : index
    %c0_0 = arith.constant 0 : index
    %0 = vector.load %arg2[%c0, %c0_0] : memref<576x128xbf16, #tpu.memory_space<vmem>>, vector<576x128xbf16>
    %c0_1 = arith.constant 0 : index
    %c0_2 = arith.constant 0 : index
    %c0_3 = arith.constant 0 : index
    %1 = vector.load %arg1[%c0_1, %c0_2, %c0_3] : memref<4x8x576xbf16, #tpu.memory_space<vmem>>, vector<1x8x576xbf16>
    %2 = vector.shape_cast %1 : vector<1x8x576xbf16> to vector<8x576xbf16>
    %cst = arith.constant dense<0.000000e+00> : vector<8x128xf32>
    %3 = tpu.matmul %2, %0, %cst {dimension_numbers = #tpu.dot_dimension_numbers<[1], [0], [0], [1], [0, 0, 1, 1], [], []>} : vector<8x576xbf16>, vector<576x128xbf16>, vector<8x128xf32> -> vector<8x128xf32>
    %c1 = arith.constant 1 : index
    %c0_4 = arith.constant 0 : index
    %c0_5 = arith.constant 0 : index
    %4 = vector.load %arg1[%c1, %c0_4, %c0_5] : memref<4x8x576xbf16, #tpu.memory_space<vmem>>, vector<1x8x576xbf16>
    %5 = vector.shape_cast %4 : vector<1x8x576xbf16> to vector<8x576xbf16>
    %cst_6 = arith.constant dense<0.000000e+00> : vector<8x128xf32>
    %6 = tpu.matmul %5, %0, %cst_6 {dimension_numbers = #tpu.dot_dimension_numbers<[1], [0], [0], [1], [0, 0, 1, 1], [], []>} : vector<8x576xbf16>, vector<576x128xbf16>, vector<8x128xf32> -> vector<8x128xf32>
    %c2 = arith.constant 2 : index
    %c0_7 = arith.constant 0 : index
    %c0_8 = arith.constant 0 : index
    %7 = vector.load %arg1[%c2, %c0_7, %c0_8] : memref<4x8x576xbf16, #tpu.memory_space<vmem>>, vector<1x8x576xbf16>
    %8 = vector.shape_cast %7 : vector<1x8x576xbf16> to vector<8x576xbf16>
    %cst_9 = arith.constant dense<0.000000e+00> : vector<8x128xf32>
    %9 = tpu.matmul %8, %0, %cst_9 {dimension_numbers = #tpu.dot_dimension_numbers<[1], [0], [0], [1], [0, 0, 1, 1], [], []>} : vector<8x576xbf16>, vector<576x128xbf16>, vector<8x128xf32> -> vector<8x128xf32>
    %c3 = arith.constant 3 : index
    %c0_10 = arith.constant 0 : index
    %c0_11 = arith.constant 0 : index
    %10 = vector.load %arg1[%c3, %c0_10, %c0_11] : memref<4x8x576xbf16, #tpu.memory_space<vmem>>, vector<1x8x576xbf16>
    %11 = vector.shape_cast %10 : vector<1x8x576xbf16> to vector<8x576xbf16>
    %cst_12 = arith.constant dense<0.000000e+00> : vector<8x128xf32>
    %12 = tpu.matmul %11, %0, %cst_12 {dimension_numbers = #tpu.dot_dimension_numbers<[1], [0], [0], [1], [0, 0, 1, 1], [], []>} : vector<8x576xbf16>, vector<576x128xbf16>, vector<8x128xf32> -> vector<8x128xf32>
    %13 = arith.maximumf %3, %6 : vector<8x128xf32>
    %14 = arith.maximumf %13, %9 : vector<8x128xf32>
    %15 = arith.maximumf %14, %12 : vector<8x128xf32>
    %c0_13 = arith.constant 0 : index
    %c0_14 = arith.constant 0 : index
    %16 = vector.load %arg3[%c0_13, %c0_14] : memref<1x128xf32, #tpu.memory_space<vmem>>, vector<1x128xf32>
    %17 = vector.broadcast %16 : vector<1x128xf32> to vector<8x128xf32>
    %18 = arith.addf %15, %17 : vector<8x128xf32>
    %cst_15 = arith.constant 0.000000e+00 : f32
    %19 = vector.broadcast %cst_15 : f32 to vector<8x128xf32>
    %20 = arith.maximumf %18, %19 : vector<8x128xf32>
    %c0_16 = arith.constant 0 : index
    %c0_17 = arith.constant 0 : index
    %21 = vector.load %arg4[%c0_16, %c0_17] : memref<8x128xf32, #tpu.memory_space<vmem>>, vector<8x128xf32>
    tpu.vector_store %arg4[%c0_16, %c0_17], %20 {strides = array<i32>} : memref<8x128xf32, #tpu.memory_space<vmem>>, vector<8x128xf32>,
    return
  }
  func.func @transform_0(%arg0: i32) -> (i32, i32, i32) {
    %c0_i32 = arith.constant 0 : i32
    %c0_i32_0 = arith.constant 0 : i32
    %c0_i32_1 = arith.constant 0 : i32
    return %c0_i32, %arg0, %c0_i32_0 : i32, i32, i32
  }
  func.func @transform_1(%arg0: i32) -> (i32, i32) {
    %c0_i32 = arith.constant 0 : i32
    %c0_i32_0 = arith.constant 0 : i32
    %c0_i32_1 = arith.constant 0 : i32
    return %c0_i32, %c0_i32_0 : i32, i32
  }
  func.func @transform_2(%arg0: i32) -> (i32, i32) {
    %c0_i32 = arith.constant 0 : i32
    %c0_i32_0 = arith.constant 0 : i32
    %c0_i32_1 = arith.constant 0 : i32
    return %c0_i32, %c0_i32_0 : i32, i32
  }
  func.func @transform_3(%arg0: i32) -> (i32, i32) {
    %c0_i32 = arith.constant 0 : i32
    %c0_i32_0 = arith.constant 0 : i32
    return %arg0, %c0_i32 : i32, i32
  }
}

module attributes {stable_mosaic.version = 11 : i64} {
  func.func @conv_block_mk_kernel(%arg0: i32, %arg1: memref<4x2x1152xbf16, #tpu.memory_space<vmem>>, %arg2: memref<1152x256xbf16, #tpu.memory_space<vmem>>, %arg3: memref<1x256xf32, #tpu.memory_space<vmem>>, %arg4: memref<2x256xf32, #tpu.memory_space<vmem>>) attributes {dimension_semantics = [#tpu.dimension_semantics<parallel>], iteration_bounds = array<i64: 1>, scalar_prefetch = 0 : i64, scratch_operands = 0 : i64, tpu.core_type = #tpu.core_type<tc>, window_params = [{transform_indices = @transform_0, window_bounds = array<i64: 4, 2, 1152>}, {pipeline_mode = #tpu.pipeline_mode<synchronous>, transform_indices = @transform_1, window_bounds = array<i64: 1152, 256>}, {pipeline_mode = #tpu.pipeline_mode<synchronous>, transform_indices = @transform_2, window_bounds = array<i64: 1, 256>}, {transform_indices = @transform_3, window_bounds = array<i64: 2, 256>}]} {
    %c0 = arith.constant 0 : index
    %c0_0 = arith.constant 0 : index
    %0 = vector.load %arg2[%c0, %c0_0] : memref<1152x256xbf16, #tpu.memory_space<vmem>>, vector<1152x256xbf16>
    %c0_1 = arith.constant 0 : index
    %c0_2 = arith.constant 0 : index
    %c0_3 = arith.constant 0 : index
    %1 = vector.load %arg1[%c0_1, %c0_2, %c0_3] : memref<4x2x1152xbf16, #tpu.memory_space<vmem>>, vector<1x2x1152xbf16>
    %2 = vector.shape_cast %1 : vector<1x2x1152xbf16> to vector<2x1152xbf16>
    %cst = arith.constant dense<0.000000e+00> : vector<2x256xf32>
    %3 = tpu.matmul %2, %0, %cst {dimension_numbers = #tpu.dot_dimension_numbers<[1], [0], [0], [1], [0, 0, 1, 1], [], []>} : vector<2x1152xbf16>, vector<1152x256xbf16>, vector<2x256xf32> -> vector<2x256xf32>
    %c1 = arith.constant 1 : index
    %c0_4 = arith.constant 0 : index
    %c0_5 = arith.constant 0 : index
    %4 = vector.load %arg1[%c1, %c0_4, %c0_5] : memref<4x2x1152xbf16, #tpu.memory_space<vmem>>, vector<1x2x1152xbf16>
    %5 = vector.shape_cast %4 : vector<1x2x1152xbf16> to vector<2x1152xbf16>
    %cst_6 = arith.constant dense<0.000000e+00> : vector<2x256xf32>
    %6 = tpu.matmul %5, %0, %cst_6 {dimension_numbers = #tpu.dot_dimension_numbers<[1], [0], [0], [1], [0, 0, 1, 1], [], []>} : vector<2x1152xbf16>, vector<1152x256xbf16>, vector<2x256xf32> -> vector<2x256xf32>
    %c2 = arith.constant 2 : index
    %c0_7 = arith.constant 0 : index
    %c0_8 = arith.constant 0 : index
    %7 = vector.load %arg1[%c2, %c0_7, %c0_8] : memref<4x2x1152xbf16, #tpu.memory_space<vmem>>, vector<1x2x1152xbf16>
    %8 = vector.shape_cast %7 : vector<1x2x1152xbf16> to vector<2x1152xbf16>
    %cst_9 = arith.constant dense<0.000000e+00> : vector<2x256xf32>
    %9 = tpu.matmul %8, %0, %cst_9 {dimension_numbers = #tpu.dot_dimension_numbers<[1], [0], [0], [1], [0, 0, 1, 1], [], []>} : vector<2x1152xbf16>, vector<1152x256xbf16>, vector<2x256xf32> -> vector<2x256xf32>
    %c3 = arith.constant 3 : index
    %c0_10 = arith.constant 0 : index
    %c0_11 = arith.constant 0 : index
    %10 = vector.load %arg1[%c3, %c0_10, %c0_11] : memref<4x2x1152xbf16, #tpu.memory_space<vmem>>, vector<1x2x1152xbf16>
    %11 = vector.shape_cast %10 : vector<1x2x1152xbf16> to vector<2x1152xbf16>
    %cst_12 = arith.constant dense<0.000000e+00> : vector<2x256xf32>
    %12 = tpu.matmul %11, %0, %cst_12 {dimension_numbers = #tpu.dot_dimension_numbers<[1], [0], [0], [1], [0, 0, 1, 1], [], []>} : vector<2x1152xbf16>, vector<1152x256xbf16>, vector<2x256xf32> -> vector<2x256xf32>
    %13 = arith.maximumf %3, %6 : vector<2x256xf32>
    %14 = arith.maximumf %13, %9 : vector<2x256xf32>
    %15 = arith.maximumf %14, %12 : vector<2x256xf32>
    %c0_13 = arith.constant 0 : index
    %c0_14 = arith.constant 0 : index
    %16 = vector.load %arg3[%c0_13, %c0_14] : memref<1x256xf32, #tpu.memory_space<vmem>>, vector<1x256xf32>
    %17 = vector.broadcast %16 : vector<1x256xf32> to vector<2x256xf32>
    %18 = arith.addf %15, %17 : vector<2x256xf32>
    %cst_15 = arith.constant 0.000000e+00 : f32
    %19 = vector.broadcast %cst_15 : f32 to vector<2x256xf32>
    %20 = arith.maximumf %18, %19 : vector<2x256xf32>
    %c0_16 = arith.constant 0 : index
    %c0_17 = arith.constant 0 : index
    %21 = vector.load %arg4[%c0_16, %c0_17] : memref<2x256xf32, #tpu.memory_space<vmem>>, vector<2x256xf32>
    tpu.vector_store %arg4[%c0_16, %c0_17], %20 {strides = array<i32>} : memref<2x256xf32, #tpu.memory_space<vmem>>, vector<2x256xf32>,
    return
  }
  func.func @transform_0(%arg0: i32) -> (i32, i32, i32) {
    %c0_i32 = arith.constant 0 : i32
    %c0_i32_0 = arith.constant 0 : i32
    %c0_i32_1 = arith.constant 0 : i32
    return %c0_i32, %arg0, %c0_i32_0 : i32, i32, i32
  }
  func.func @transform_1(%arg0: i32) -> (i32, i32) {
    %c0_i32 = arith.constant 0 : i32
    %c0_i32_0 = arith.constant 0 : i32
    %c0_i32_1 = arith.constant 0 : i32
    return %c0_i32, %c0_i32_0 : i32, i32
  }
  func.func @transform_2(%arg0: i32) -> (i32, i32) {
    %c0_i32 = arith.constant 0 : i32
    %c0_i32_0 = arith.constant 0 : i32
    %c0_i32_1 = arith.constant 0 : i32
    return %c0_i32, %c0_i32_0 : i32, i32
  }
  func.func @transform_3(%arg0: i32) -> (i32, i32) {
    %c0_i32 = arith.constant 0 : i32
    %c0_i32_0 = arith.constant 0 : i32
    return %arg0, %c0_i32 : i32, i32
  }
}

module attributes {stable_mosaic.version = 11 : i64} {
  func.func @mlp_kernel(%arg0: i32, %arg1: memref<2x256xbf16, #tpu.memory_space<vmem>>, %arg2: memref<256x128xbf16, #tpu.memory_space<vmem>>, %arg3: memref<1x128xf32, #tpu.memory_space<vmem>>, %arg4: memref<128x2xbf16, #tpu.memory_space<vmem>>, %arg5: memref<1x2xf32, #tpu.memory_space<vmem>>, %arg6: memref<2x2xf32, #tpu.memory_space<vmem>>) attributes {dimension_semantics = [#tpu.dimension_semantics<parallel>], iteration_bounds = array<i64: 1>, scalar_prefetch = 0 : i64, scratch_operands = 0 : i64, tpu.core_type = #tpu.core_type<tc>, window_params = [{transform_indices = @transform_0, window_bounds = array<i64: 2, 256>}, {pipeline_mode = #tpu.pipeline_mode<synchronous>, transform_indices = @transform_1, window_bounds = array<i64: 256, 128>}, {pipeline_mode = #tpu.pipeline_mode<synchronous>, transform_indices = @transform_2, window_bounds = array<i64: 1, 128>}, {pipeline_mode = #tpu.pipeline_mode<synchronous>, transform_indices = @transform_3, window_bounds = array<i64: 128, 2>}, {pipeline_mode = #tpu.pipeline_mode<synchronous>, transform_indices = @transform_4, window_bounds = array<i64: 1, 2>}, {transform_indices = @transform_5, window_bounds = array<i64: 2, 2>}]} {
    %c0 = arith.constant 0 : index
    %c0_0 = arith.constant 0 : index
    %0 = vector.load %arg1[%c0, %c0_0] : memref<2x256xbf16, #tpu.memory_space<vmem>>, vector<2x256xbf16>
    %c0_1 = arith.constant 0 : index
    %c0_2 = arith.constant 0 : index
    %1 = vector.load %arg2[%c0_1, %c0_2] : memref<256x128xbf16, #tpu.memory_space<vmem>>, vector<256x128xbf16>
    %cst = arith.constant dense<0.000000e+00> : vector<2x128xf32>
    %2 = tpu.matmul %0, %1, %cst {dimension_numbers = #tpu.dot_dimension_numbers<[1], [0], [0], [1], [0, 0, 1, 1], [], []>} : vector<2x256xbf16>, vector<256x128xbf16>, vector<2x128xf32> -> vector<2x128xf32>
    %c0_3 = arith.constant 0 : index
    %c0_4 = arith.constant 0 : index
    %3 = vector.load %arg3[%c0_3, %c0_4] : memref<1x128xf32, #tpu.memory_space<vmem>>, vector<1x128xf32>
    %4 = vector.broadcast %3 : vector<1x128xf32> to vector<2x128xf32>
    %5 = arith.addf %2, %4 : vector<2x128xf32>
    %cst_5 = arith.constant 0.000000e+00 : f32
    %6 = vector.broadcast %cst_5 : f32 to vector<2x128xf32>
    %7 = arith.maximumf %5, %6 : vector<2x128xf32>
    %8 = arith.truncf %7 : vector<2x128xf32> to vector<2x128xbf16>
    %c0_6 = arith.constant 0 : index
    %c0_7 = arith.constant 0 : index
    %9 = vector.load %arg4[%c0_6, %c0_7] : memref<128x2xbf16, #tpu.memory_space<vmem>>, vector<128x2xbf16>
    %cst_8 = arith.constant dense<0.000000e+00> : vector<2x2xf32>
    %10 = tpu.matmul %8, %9, %cst_8 {dimension_numbers = #tpu.dot_dimension_numbers<[1], [0], [0], [1], [0, 0, 1, 1], [], []>} : vector<2x128xbf16>, vector<128x2xbf16>, vector<2x2xf32> -> vector<2x2xf32>
    %c0_9 = arith.constant 0 : index
    %c0_10 = arith.constant 0 : index
    %11 = vector.load %arg5[%c0_9, %c0_10] : memref<1x2xf32, #tpu.memory_space<vmem>>, vector<1x2xf32>
    %12 = vector.broadcast %11 : vector<1x2xf32> to vector<2x2xf32>
    %13 = arith.addf %10, %12 : vector<2x2xf32>
    %cst_11 = arith.constant 5.000000e-01 : f32
    %14 = vector.broadcast %cst_11 : f32 to vector<2x2xf32>
    %15 = arith.mulf %14, %13 : vector<2x2xf32>
    %16 = math.tanh %15 : vector<2x2xf32>
    %cst_12 = arith.constant 1.000000e+00 : f32
    %17 = vector.broadcast %cst_12 : f32 to vector<2x2xf32>
    %18 = arith.addf %16, %17 : vector<2x2xf32>
    %cst_13 = arith.constant 5.000000e-01 : f32
    %19 = vector.broadcast %cst_13 : f32 to vector<2x2xf32>
    %20 = arith.mulf %19, %18 : vector<2x2xf32>
    %c0_14 = arith.constant 0 : index
    %c0_15 = arith.constant 0 : index
    %21 = vector.load %arg6[%c0_14, %c0_15] : memref<2x2xf32, #tpu.memory_space<vmem>>, vector<2x2xf32>
    tpu.vector_store %arg6[%c0_14, %c0_15], %20 {strides = array<i32>} : memref<2x2xf32, #tpu.memory_space<vmem>>, vector<2x2xf32>,
    return
  }
  func.func @transform_0(%arg0: i32) -> (i32, i32) {
    %c0_i32 = arith.constant 0 : i32
    %c0_i32_0 = arith.constant 0 : i32
    return %arg0, %c0_i32 : i32, i32
  }
  func.func @transform_1(%arg0: i32) -> (i32, i32) {
    %c0_i32 = arith.constant 0 : i32
    %c0_i32_0 = arith.constant 0 : i32
    %c0_i32_1 = arith.constant 0 : i32
    return %c0_i32, %c0_i32_0 : i32, i32
  }
  func.func @transform_2(%arg0: i32) -> (i32, i32) {
    %c0_i32 = arith.constant 0 : i32
    %c0_i32_0 = arith.constant 0 : i32
    %c0_i32_1 = arith.constant 0 : i32
    return %c0_i32, %c0_i32_0 : i32, i32
  }
  func.func @transform_3(%arg0: i32) -> (i32, i32) {
    %c0_i32 = arith.constant 0 : i32
    %c0_i32_0 = arith.constant 0 : i32
    %c0_i32_1 = arith.constant 0 : i32
    return %c0_i32, %c0_i32_0 : i32, i32
  }
  func.func @transform_4(%arg0: i32) -> (i32, i32) {
    %c0_i32 = arith.constant 0 : i32
    %c0_i32_0 = arith.constant 0 : i32
    %c0_i32_1 = arith.constant 0 : i32
    return %c0_i32, %c0_i32_0 : i32, i32
  }
  func.func @transform_5(%arg0: i32) -> (i32, i32) {
    %c0_i32 = arith.constant 0 : i32
    %c0_i32_0 = arith.constant 0 : i32
    return %arg0, %c0_i32 : i32, i32
  }
}

</mosaic_0001>

<llo_original>
// kernel: forward.6
$region0: #{forward.6}
  #allocation0 [shape = 'u32[]', space=smem, size = 0x4, offset = 0x4, fixed_abs, tag = 'smem constant byte address 0x4 - core index']
  #allocation1 [shape = 'u32[144,128]{1,0:T(1,128)}', space=vmem, size = 0x12000, scoped, tag = 'internal scratch']
  %s0 = inlined_call_operand.vmem [shape: bf16[16,27], index: 0, kind: input, shape index: {}]
  %s1 = inlined_call_operand.vmem [shape: bf16[27,2048], index: 1, kind: input, shape index: {}]
  %s2 = inlined_call_operand.vmem [shape: f32[16,1], index: 2, kind: input, shape index: {}]
  %s3 = inlined_call_operand.vmem [shape: f32[16,512], index: 3, kind: output, shape index: {}]
  %s4 = sld [smem:[#allocation0]]
  $region80: #{forward.6} parent=0
    _
  %s6 = ssub.s32 1, %s4
  %s7 = scalar_select 0, %s6, %s4
  $region1: #{forward.6} parent=0
    #allocation2 [shape = 'u8[65536]{0}', space=vmem, size = 0x10000, scoped, tag = 'input window, operand 1']
    loop: start=0, step=1, limit=6
    $region2: #{forward.6} parent=1 // loop_pre_header
      _
    $region3: #{forward.6} parent=1 // loop_header
      %s9 = sphi 0, %s13
      %p10 = scmp.ge.s32.totalorder %s9, 6
      %s16 = sphi 0, %s28
      %s17 = sphi 0, %s24
      %s18 = sphi 0, %s16
      %s19 = sphi 0, %s17
      %s20 = sphi 0, %s18
      %s21 = sphi 0, %s19
      %s29 = sphi 0, %s29
      %s31 = sphi 0, %s29
      %s32 = sphi 0, %s31
      %s46 = sphi 0, %s32
      %s54 = sphi 0, %s56
      %s57 = sphi 0, %s54
      %s58 = sphi 0, %s57
      %s74 = sphi 0, %s58
      %s78 = sphi 0, %s78
      %s80 = sphi 0, %s78
      %s81 = sphi 0, %s80
      %s95 = sphi 0, %s81
      %s101 = sphi 0, %s103
      %s104 = sphi 0, %s101
      %s105 = sphi 0, %s104
      %s121 = sphi 0, %s105
    $region4: #{forward.6} parent=1 // loop_header_branch
      %12 = sbr.rel (%p10) target = $region8
    $region5: #{forward.6} parent=1 // loop_body
      %s14 = ssub.s32 %s9, 1
      %s15 = ssub.s32 %s9, 2
      %s22 = sadd.s32 1, %s17
      %p23 = scmp.ge.s32.totalorder %s22, 4
      %s24 = scalar_select %p23, 0, %s22
      %s25 = sadd.s32 1, %s16
      %s26 = scalar_select %p23, %s25, %s16
      %p27 = scmp.ge.s32.totalorder %s26, 1
      %s28 = scalar_select %p27, 0, %s26
      %s30 = sadd.s32 %s29, 1
      %p33 = scmp.eq.s32.totalorder %s9, 3
      %p34 = scmp.ne.s32.totalorder %s29, %s31
      %p35 = scmp.eq.s32.totalorder %s9, 0
      %p36 = por %p34, %p35
      %p37 = scmp.ne.s32.totalorder %s29, %s31
      %p38 = scmp.eq.s32.totalorder %s14, 3
      %p39 = por %p37, %p38
      %p40 = scmp.ne.s32.totalorder %s31, %s32
      %p41 = scmp.eq.s32.totalorder %s14, 0
      %p42 = por %p40, %p41
      %p43 = scmp.ne.s32.totalorder %s31, %s32
      %p44 = scmp.eq.s32.totalorder %s15, 3
      %p45 = por %p43, %p44
      %p47 = scmp.ne.s32.totalorder %s32, %s46
      %p48 = scmp.eq.s32.totalorder %s15, 0
      %p49 = por %p47, %p48
      %s50 = sadd.s32 %s17, %s16
      %s51 = sadd.s32 %s24, %s28
      %s52 = ssub.s32 %s50, %s51
      %p53 = scmp.eq.s32.totalorder %s52, 0
      %s55 = sadd.s32 %s54, 1
      %s56 = scalar_select %p53, %s54, %s55
      %p59 = pneg %p53
      %p60 = scmp.eq.s32.totalorder %s9, 3
      %p61 = por %p59, %p60
      %p62 = scmp.ne.s32.totalorder %s54, %s57
      %p63 = scmp.eq.s32.totalorder %s9, 0
      %p64 = por %p62, %p63
      %p65 = scmp.ne.s32.totalorder %s54, %s57
      %p66 = scmp.eq.s32.totalorder %s14, 3
      %p67 = por %p65, %p66
      %p68 = scmp.ne.s32.totalorder %s57, %s58
      %p69 = scmp.eq.s32.totalorder %s14, 0
      %p70 = por %p68, %p69
      %p71 = scmp.ne.s32.totalorder %s57, %s58
      %p72 = scmp.eq.s32.totalorder %s15, 3
      %p73 = por %p71, %p72
      %p75 = scmp.ne.s32.totalorder %s58, %s74
      %p76 = scmp.eq.s32.totalorder %s15, 0
      %p77 = por %p75, %p76
      %s79 = sadd.s32 %s78, 1
      %p82 = scmp.eq.s32.totalorder %s9, 3
      %p83 = scmp.ne.s32.totalorder %s78, %s80
      %p84 = scmp.eq.s32.totalorder %s9, 0
      %p85 = por %p83, %p84
      %p86 = scmp.ne.s32.totalorder %s78, %s80
      %p87 = scmp.eq.s32.totalorder %s14, 3
      %p88 = por %p86, %p87
      %p89 = scmp.ne.s32.totalorder %s80, %s81
      %p90 = scmp.eq.s32.totalorder %s14, 0
      %p91 = por %p89, %p90
      %p92 = scmp.ne.s32.totalorder %s80, %s81
      %p93 = scmp.eq.s32.totalorder %s15, 3
      %p94 = por %p92, %p93
      %p96 = scmp.ne.s32.totalorder %s81, %s95
      %p97 = scmp.eq.s32.totalorder %s15, 0
      %p98 = por %p96, %p97
      %s99 = ssub.s32 %s16, %s28
      %p100 = scmp.eq.s32.totalorder %s99, 0
      %s102 = sadd.s32 %s101, 1
      %s103 = scalar_select %p100, %s101, %s102
      %p106 = pneg %p100
      %p107 = scmp.eq.s32.totalorder %s9, 3
      %p108 = por %p106, %p107
      %p109 = scmp.ne.s32.totalorder %s101, %s104
      %p110 = scmp.eq.s32.totalorder %s9, 0
      %p111 = por %p109, %p110
      %p112 = scmp.ne.s32.totalorder %s101, %s104
      %p113 = scmp.eq.s32.totalorder %s14, 3
      %p114 = por %p112, %p113
      %p115 = scmp.ne.s32.totalorder %s104, %s105
      %p116 = scmp.eq.s32.totalorder %s14, 0
      %p117 = por %p115, %p116
      %p118 = scmp.ne.s32.totalorder %s104, %s105
      %p119 = scmp.eq.s32.totalorder %s15, 3
      %p120 = por %p118, %p119
      %p122 = scmp.ne.s32.totalorder %s105, %s121
      %p123 = scmp.eq.s32.totalorder %s15, 0
      %p124 = por %p122, %p123
      %p125 = scmp.le.s32.totalorder 1, %s9
      %p126 = scmp.lt.s32.totalorder %s9, 5
      %p127 = pnand %p125, %p126
      %p128 = pneg %p127
      // Predicated region
      $region9: #{forward.6} parent=5 // pred_check
        _
      $region10: #{forward.6} parent=5 // pred_check_branch
        %130 = sbr.rel (%p127) target = $region12
      $region11: #{forward.6} parent=5 // pred_region
        %s131 = ssub.s32 %s9, 1
        // Predicated region
        $region13: #{forward.6} parent=11 // pred_check
          %p132 = pneg %p42
        $region14: #{forward.6} parent=11 // pred_check_branch
          %134 = sbr.rel (%p132) target = $region16
        $region15: #{forward.6} parent=11 // pred_region
          _
        $region16: #{forward.6} parent=11 // pred_fallthru
          _
        // Predicated region
        $region17: #{forward.6} parent=11 // pred_check
          %p135 = pneg %p91
        $region18: #{forward.6} parent=11 // pred_check_branch
          %137 = sbr.rel (%p135) target = $region20
        $region19: #{forward.6} parent=11 // pred_region
          _
        $region20: #{forward.6} parent=11 // pred_fallthru
          _
      $region12: #{forward.6} parent=5 // pred_fallthru
        _
      %p138 = scmp.lt.s32.totalorder %s9, 4
      // Predicated region
      $region21: #{forward.6} parent=5 // pred_check
        %p139 = pneg %p138
      $region22: #{forward.6} parent=5 // pred_check_branch
        %141 = sbr.rel (%p139) target = $region24
      $region23: #{forward.6} parent=5 // pred_region
        // Predicated region
        $region25: #{forward.6} parent=23 // pred_check
          %p142 = pneg %p64
        $region26: #{forward.6} parent=23 // pred_check_branch
          %144 = sbr.rel (%p142) target = $region28
        $region27: #{forward.6} parent=23 // pred_region
          %s145 = sand.u32 %s54, 1
          %s146 = sand.u32 %s54, 1
          %s147 = smul.addr %s146, 64
          %s148 = scalar_lea.vmem [#allocation2], %s147
          %s149 = sadd.s32 %s17, %s16
          %s150 = smul.u32 4, %s149
          %s151 = smul.addr %s150, 4
          %s152 = scalar_lea.vmem %s1, %s151
          // Predicated region
          $region29: #{forward.6} parent=27 // pred_check
            _
          $region30: #{forward.6} parent=27 // pred_check_branch
            %154 = sbr.rel (0) target = $region32
          $region31: #{forward.6} parent=27 // pred_region
            // Predicated region
            $region33: #{forward.6} parent=31 // pred_check
              _
            $region34: #{forward.6} parent=31 // pred_check_branch
              %156 = sbr.rel (0) target = $region36
            $region35: #{forward.6} parent=31 // pred_region
              loop: start=0, step=1, limit=1
              $region37: #{forward.6} parent=35 // loop_pre_header
                _
              $region38: #{forward.6} parent=35 // loop_header
                %s158 = sphi 0, %s162
                %p159 = scmp.ge.s32.totalorder %s158, 1
                %s163 = sphi %s152, %s152
                %s164 = sphi %s148, %s148
              $region39: #{forward.6} parent=35 // loop_header_branch
                %161 = sbr.rel (%p159) target = $region43
              $region40: #{forward.6} parent=35 // loop_body
                %v165 = vld [vmem:[%s163] sm:$0xff]
                %166 = vst [vmem:[%s164] sm:$0xff] %v165
                %v167 = vld [vmem:[%s163 + $0x8] sm:$0xff]
                %168 = vst [vmem:[%s164 + $0x8] sm:$0xff] %v167
                %v169 = vld [vmem:[%s163 + $0x40] sm:$0xff]
                %170 = vst [vmem:[%s164 + $0x10] sm:$0xff] %v169
                %v171 = vld [vmem:[%s163 + $0x48] sm:$0xff]
                %172 = vst [vmem:[%s164 + $0x18] sm:$0xff] %v171
                %v173 = vld [vmem:[%s163 + $0x80] sm:$0xff]
                %174 = vst [vmem:[%s164 + $0x20] sm:$0xff] %v173
                %v175 = vld [vmem:[%s163 + $0x88] sm:$0xff]
                %176 = vst [vmem:[%s164 + $0x28] sm:$0xff] %v175
                %v177 = vld [vmem:[%s163 + $0xc0] sm:$0xff]
                %178 = vst [vmem:[%s164 + $0x30] sm:$0xff] %v177
                %v179 = vld [vmem:[%s163 + $0xc8] sm:$0xff]
                %180 = vst [vmem:[%s164 + $0x38] sm:$0xff] %v179
              $region41: #{forward.6} parent=35 // loop_footer
                %s162 = sadd.s32 1, %s158
              $region42: #{forward.6} parent=35 // loop_footer_branch
                %157 = sbr.rel target = $region38
              $region43: #{forward.6} parent=35 // loop_exit
                _
            $region36: #{forward.6} parent=31 // pred_fallthru
              _
            // Predicated region
            $region44: #{forward.6} parent=31 // pred_check
              _
            $region45: #{forward.6} parent=31 // pred_check_branch
              %182 = sbr.rel target = $region47
            $region46: #{forward.6} parent=31 // pred_region
              _
            $region47: #{forward.6} parent=31 // pred_fallthru
              _
          $region32: #{forward.6} parent=27 // pred_fallthru
            _
          %183 = vnop
        $region28: #{forward.6} parent=23 // pred_fallthru
          _
      $region24: #{forward.6} parent=5 // pred_fallthru
        _
      %p184 = scmp.le.s32.totalorder 1, %s9
      %p185 = scmp.lt.s32.totalorder %s9, 5
      %p186 = pnand %p184, %p185
      %p187 = pneg %p186
      // Predicated region
      $region48: #{forward.6} parent=5 // pred_check
        _
      $region49: #{forward.6} parent=5 // pred_check_branch
        %189 = sbr.rel (%p186) target = $region51
      $region50: #{forward.6} parent=5 // pred_region
        %s190 = ssub.s32 %s9, 1
        %s191 = sand.u32 %s57, 1
        %s192 = sand.u32 %s57, 1
        %s193 = smul.addr %s192, 64
        %s194 = scalar_lea.vmem [#allocation2], %s193
        // Predicated region
        $region52: #{forward.6} parent=50 // pred_check
          %p195 = pneg %p70
        $region53: #{forward.6} parent=50 // pred_check_branch
          %197 = sbr.rel (%p195) target = $region55
        $region54: #{forward.6} parent=50 // pred_region
          _
        $region55: #{forward.6} parent=50 // pred_fallthru
          _
        %p198 = pneg %p42
        %p199 = pneg %p39
        %s200 = sand.u32 %s57, 1
        %s201 = sand.u32 %s57, 1
        %s202 = smul.addr %s201, 64
        %s203 = scalar_lea.vmem [#allocation2], %s202
        %p204 = pneg %p70
        %p205 = pneg %p67
        %p206 = pneg %p91
        %p207 = pneg %p88
        %p208 = pneg %p117
        %p209 = pneg %p114
        %s210 = smul.u32 4, %s18
        %p211 = scmp.lt.s32.totalorder %s210, 3
        %s212 = scalar_select %p211, %s210, 3
        %s213 = smul.addr %s212, 8
        %s214 = scalar_lea.vmem %s3, %s213
        %s215 = sadd.s32 %s19, %s18
        %s216 = smul.u32 4, %s215
        %s217 = smul.u32 4, %s18
        %p218 = scmp.lt.s32.totalorder %s217, 3
        %s219 = scalar_select %p218, %s217, 3
        %s220 = smul.addr %s219, 8
        %s221 = scalar_lea.vmem %s3, %s220
        %s222 = smul.u32 4, %s18
        %v224 = vld [vmem:[%s0] sm:$0xf]
        %v225 = vld [vmem:[%s0 + $0x4] sm:$0xf]
        %v226 = vld [vmem:[%s194] sm:$0xff]
        %v227 = vld [vmem:[%s194 + $0x8] sm:$0xff]
        %v228 = vld [vmem:[%s194 + $0x10] sm:$0xff]
        %v229 = vld [vmem:[%s194 + $0x18] sm:$0xff]
        %v230 = vld [vmem:[%s194 + $0x20] sm:$0xff]
        %v231 = vld [vmem:[%s194 + $0x28] sm:$0xff]
        %v232 = vld [vmem:[%s194 + $0x30] sm:$0x33]
        %v233 = vld [vmem:[%s194 + $0x38] sm:$0x33]
        %v236 = vunpack.c.l.b16 %v224
        %v237 = vunpack.c.l.b16 %v225
        %v238 = vpack.c.b16 %v237, %v236
        %v247 = vunpack.c.l.b16 %v226
        %v248 = vunpack.c.h.b16 %v226
        %v249 = vunpack.c.l.b16 %v227
        %v250 = vunpack.c.h.b16 %v227
        %v251 = vunpack.c.l.b16 %v228
        %v252 = vunpack.c.h.b16 %v228
        %v253 = vunpack.c.l.b16 %v229
        %v254 = vunpack.c.h.b16 %v229
        %v255 = vunpack.c.l.b16 %v230
        %v256 = vunpack.c.h.b16 %v230
        %v257 = vunpack.c.l.b16 %v231
        %v258 = vunpack.c.h.b16 %v231
        %v259 = vunpack.c.l.b16 %v232
        %v260 = vunpack.c.h.b16 %v232
        %v261 = vunpack.c.l.b16 %v233
        %v262 = vunpack.c.h.b16 %v233
        %v263 = vpack.c.b16 %v251, %v247
        %v264 = vpack.c.b16 %v252, %v248
        %v265 = vpack.c.b16 %v253, %v249
        %v266 = vpack.c.b16 %v254, %v250
        %v267 = vpack.c.b16 %v259, %v255
        %v268 = vpack.c.b16 %v260, %v256
        %v269 = vpack.c.b16 %v261, %v257
        %v270 = vpack.c.b16 %v262, %v258
        %vm275 = vcmask 220160
        %v277 = vsel %vm275, %v238, 0
        %vm279 = vcmask 1044480
        %vm280 = vcmask 1045504
        %v281 = vsel %vm279, 4294967295, 65535
        %v282 = vsel %vm280, %v281, 0
        %v284 = vand.u32 %v267, %v282
        %v287 = vand.u32 %v268, %v282
        %v290 = vand.u32 %v269, %v282
        %v293 = vand.u32 %v270, %v282
        %295 = vmatprep.subr.bf16.mxu0 0
        %296 = vmatpush1.bf16.msra.mxu0 0
        %297 = vmatprep.subr.bf16.mxu0 0
        %298 = vmatpush1.bf16.msra.mxu0 0
        %299 = vmatprep.subr.bf16.mxu0 0
        %300 = vmatpush1.bf16.msra.mxu0 0
        %301 = vmatprep.subr.bf16.mxu0 0
        %302 = vmatpush1.bf16.msra.mxu0 0
        %303 = vmatprep.subr.bf16.mxu0 0
        %304 = vmatpush1.bf16.msra.mxu0 0
        %305 = vmatprep.subr.bf16.mxu0 0
        %306 = vmatpush1.bf16.msra.mxu0 0
        %307 = vmatprep.subr.bf16.mxu0 %v287
        %308 = vmatpush1.bf16.msra.mxu0 %v284
        %309 = vmatprep.subr.bf16.mxu0 %v264
        %310 = vmatpush1.bf16.msra.mxu0 %v263
        %311 = vmatprep.subr.bf16.mxu0 0
        %312 = vmatpush2.bf16.msra.mxu0 0
        %313 = vmatprep.subr.bf16.mxu0 0
        %314 = vmatpush2.bf16.msra.mxu0 0
        %315 = vmatprep.subr.bf16.mxu0 0
        %316 = vmatpush2.bf16.msra.mxu0 0
        %317 = vmatprep.subr.bf16.mxu0 0
        %318 = vmatpush2.bf16.msra.mxu0 0
        %319 = vmatprep.subr.bf16.mxu0 0
        %320 = vmatpush2.bf16.msra.mxu0 0
        %321 = vmatprep.subr.bf16.mxu0 0
        %322 = vmatpush2.bf16.msra.mxu0 0
        %323 = vmatprep.subr.bf16.mxu0 0
        %324 = vmatpush2.bf16.msra.mxu0 0
        %325 = vmatprep.subr.bf16.mxu0 0
        %326 = vmatpush2.bf16.msra.mxu0 0
        %327 = vmatprep.mubr.bf16.mxu0 0
        %328 = vmatmul.mubr.bf16.gmra.mxu0 %v277
        %v329 = vpop.f32.mrf.mxu0
        %v330 = vadd.f32 0.0, %v329
        %v331 = vpop.f32.mrf.mxu0
        %v332 = vadd.f32 0.0, %v331
        %v333 = vpop.f32.mrf.mxu0
        %v334 = vadd.f32 0.0, %v333
        %v335 = vpop.f32.mrf.mxu0
        %v336 = vadd.f32 0.0, %v335
        %337 = vdwg.mxu0
        %338 = vmatprep.subr.bf16.mxu0 0
        %339 = vmatpush1.bf16.msra.mxu0 0
        %340 = vmatprep.subr.bf16.mxu0 0
        %341 = vmatpush1.bf16.msra.mxu0 0
        %342 = vmatprep.subr.bf16.mxu0 0
        %343 = vmatpush1.bf16.msra.mxu0 0
        %344 = vmatprep.subr.bf16.mxu0 0
        %345 = vmatpush1.bf16.msra.mxu0 0
        %346 = vmatprep.subr.bf16.mxu0 0
        %347 = vmatpush1.bf16.msra.mxu0 0
        %348 = vmatprep.subr.bf16.mxu0 0
        %349 = vmatpush1.bf16.msra.mxu0 0
        %350 = vmatprep.subr.bf16.mxu0 %v293
        %351 = vmatpush1.bf16.msra.mxu0 %v290
        %352 = vmatprep.subr.bf16.mxu0 %v266
        %353 = vmatpush1.bf16.msra.mxu0 %v265
        %354 = vmatprep.subr.bf16.mxu0 0
        %355 = vmatpush2.bf16.msra.mxu0 0
        %356 = vmatprep.subr.bf16.mxu0 0
        %357 = vmatpush2.bf16.msra.mxu0 0
        %358 = vmatprep.subr.bf16.mxu0 0
        %359 = vmatpush2.bf16.msra.mxu0 0
        %360 = vmatprep.subr.bf16.mxu0 0
        %361 = vmatpush2.bf16.msra.mxu0 0
        %362 = vmatprep.subr.bf16.mxu0 0
        %363 = vmatpush2.bf16.msra.mxu0 0
        %364 = vmatprep.subr.bf16.mxu0 0
        %365 = vmatpush2.bf16.msra.mxu0 0
        %366 = vmatprep.subr.bf16.mxu0 0
        %367 = vmatpush2.bf16.msra.mxu0 0
        %368 = vmatprep.subr.bf16.mxu0 0
        %369 = vmatpush2.bf16.msra.mxu0 0
        %370 = vmatprep.mubr.bf16.mxu0 0
        %371 = vmatmul.mubr.bf16.gmra.mxu0 %v277
        %v372 = vpop.f32.mrf.mxu0
        %v373 = vadd.f32 0.0, %v372
        %v374 = vpop.f32.mrf.mxu0
        %v375 = vadd.f32 0.0, %v374
        %v376 = vpop.f32.mrf.mxu0
        %v377 = vadd.f32 0.0, %v376
        %v378 = vpop.f32.mrf.mxu0
        %v379 = vadd.f32 0.0, %v378
        %380 = vdwg.mxu0
        %p381 = scmp.eq.s32.totalorder %s19, 0
        // Predicated region
        $region56: #{forward.6} parent=50 // pred_check
          %p382 = pneg %p381
        $region57: #{forward.6} parent=50 // pred_check_branch
          %384 = sbr.rel (%p382) target = $region59
        $region58: #{forward.6} parent=50 // pred_region
          %385 = vst [vmem:[%s221] sm:$0xff] %v330
          %386 = vst [vmem:[%s221 + $0x8] sm:$0xff] %v332
          %387 = vst [vmem:[%s221 + $0x10] sm:$0xff] %v373
          %388 = vst [vmem:[%s221 + $0x18] sm:$0xff] %v375
          %389 = vst [vmem:[%s221 + $0x20] sm:$0xff] %v334
          %390 = vst [vmem:[%s221 + $0x28] sm:$0xff] %v336
          %391 = vst [vmem:[%s221 + $0x30] sm:$0xff] %v377
          %392 = vst [vmem:[%s221 + $0x38] sm:$0xff] %v379
        $region59: #{forward.6} parent=50 // pred_fallthru
          _
        %p393 = scmp.gt.s32.totalorder %s19, 0
        // Predicated region
        $region60: #{forward.6} parent=50 // pred_check
          %p394 = pneg %p393
        $region61: #{forward.6} parent=50 // pred_check_branch
          %396 = sbr.rel (%p394) target = $region63
        $region62: #{forward.6} parent=50 // pred_region
          %v397 = vld [vmem:[%s221] sm:$0xff]
          %v398 = vld [vmem:[%s221 + $0x8] sm:$0xff]
          %v399 = vld [vmem:[%s221 + $0x10] sm:$0xff]
          %v400 = vld [vmem:[%s221 + $0x18] sm:$0xff]
          %v401 = vld [vmem:[%s221 + $0x20] sm:$0xff]
          %v402 = vld [vmem:[%s221 + $0x28] sm:$0xff]
          %v403 = vld [vmem:[%s221 + $0x30] sm:$0xff]
          %v404 = vld [vmem:[%s221 + $0x38] sm:$0xff]
          %v405 = vmax.f32 %v397, %v330
          %v406 = vmax.f32 %v398, %v332
          %v407 = vmax.f32 %v399, %v373
          %v408 = vmax.f32 %v400, %v375
          %v409 = vmax.f32 %v401, %v334
          %v410 = vmax.f32 %v402, %v336
          %v411 = vmax.f32 %v403, %v377
          %v412 = vmax.f32 %v404, %v379
          %413 = vst [vmem:[%s221] sm:$0xff] %v405
          %414 = vst [vmem:[%s221 + $0x8] sm:$0xff] %v406
          %415 = vst [vmem:[%s221 + $0x10] sm:$0xff] %v407
          %416 = vst [vmem:[%s221 + $0x18] sm:$0xff] %v408
          %417 = vst [vmem:[%s221 + $0x20] sm:$0xff] %v409
          %418 = vst [vmem:[%s221 + $0x28] sm:$0xff] %v410
          %419 = vst [vmem:[%s221 + $0x30] sm:$0xff] %v411
          %420 = vst [vmem:[%s221 + $0x38] sm:$0xff] %v412
        $region63: #{forward.6} parent=50 // pred_fallthru
          _
        %p421 = scmp.eq.s32.totalorder %s19, 3
        // Predicated region
        $region64: #{forward.6} parent=50 // pred_check
          %p422 = pneg %p421
        $region65: #{forward.6} parent=50 // pred_check_branch
          %424 = sbr.rel (%p422) target = $region67
        $region66: #{forward.6} parent=50 // pred_region
          %v425 = vld [vmem:[%s221] sm:$0xff]
          %v426 = vld [vmem:[%s221 + $0x8] sm:$0xff]
          %v427 = vld [vmem:[%s221 + $0x10] sm:$0xff]
          %v428 = vld [vmem:[%s221 + $0x18] sm:$0xff]
          %v429 = vld [vmem:[%s221 + $0x20] sm:$0xff]
          %v430 = vld [vmem:[%s221 + $0x28] sm:$0xff]
          %v431 = vld [vmem:[%s221 + $0x30] sm:$0xff]
          %v432 = vld [vmem:[%s221 + $0x38] sm:$0xff]
          %v433 = vld [vmem:[%s2] sm:$0xff]
          %v434 = vld [vmem:[%s2 + $0x8] sm:$0xff]
          %436 = vset.pattern.permute.xlu0 0
          %437 = vperm.xlu0 %436, %v433
          %v438 = vpop.permute.xlu0 %437
          %441 = vset.pattern.permute.xlu0 0
          %442 = vperm.xlu0 %441, %v434
          %v443 = vpop.permute.xlu0 %442
          %v445 = vadd.f32 %v425, %v438
          %v446 = vadd.f32 %v426, %v438
          %v447 = vadd.f32 %v427, %v438
          %v448 = vadd.f32 %v428, %v438
          %v449 = vadd.f32 %v429, %v443
          %v450 = vadd.f32 %v430, %v443
          %v451 = vadd.f32 %v431, %v443
          %v452 = vadd.f32 %v432, %v443
          %v453 = vmax.f32 %v445, 0.0
          %v454 = vmax.f32 %v446, 0.0
          %v455 = vmax.f32 %v447, 0.0
          %v456 = vmax.f32 %v448, 0.0
          %v457 = vmax.f32 %v449, 0.0
          %v458 = vmax.f32 %v450, 0.0
          %v459 = vmax.f32 %v451, 0.0
          %v460 = vmax.f32 %v452, 0.0
          %461 = vst [vmem:[%s221] sm:$0xff] %v453
          %462 = vst [vmem:[%s221 + $0x8] sm:$0xff] %v454
          %463 = vst [vmem:[%s221 + $0x10] sm:$0xff] %v455
          %464 = vst [vmem:[%s221 + $0x18] sm:$0xff] %v456
          %465 = vst [vmem:[%s221 + $0x20] sm:$0xff] %v457
          %466 = vst [vmem:[%s221 + $0x28] sm:$0xff] %v458
          %467 = vst [vmem:[%s221 + $0x30] sm:$0xff] %v459
          %468 = vst [vmem:[%s221 + $0x38] sm:$0xff] %v460
        $region67: #{forward.6} parent=50 // pred_fallthru
          _
        %s469 = smul.u32 4, %s18
        %p470 = scmp.lt.s32.totalorder %s469, 3
        %s471 = scalar_select %p470, %s469, 3
        %s472 = smul.addr %s471, 8
        %s473 = scalar_lea.vmem %s3, %s472
        // Predicated region
        $region68: #{forward.6} parent=50 // pred_check
          %p474 = pneg %p114
        $region69: #{forward.6} parent=50 // pred_check_branch
          %476 = sbr.rel (%p474) target = $region71
        $region70: #{forward.6} parent=50 // pred_region
          %s477 = smul.u32 4, %s18
        $region71: #{forward.6} parent=50 // pred_fallthru
          _
        // Predicated region
        $region72: #{forward.6} parent=50 // pred_check
          %p478 = pneg %p114
        $region73: #{forward.6} parent=50 // pred_check_branch
          %480 = sbr.rel (%p478) target = $region75
        $region74: #{forward.6} parent=50 // pred_region
          %s481 = smul.u32 4, %s18
          %p482 = scmp.lt.s32.totalorder %s481, 3
          %s483 = scalar_select %p482, %s481, 3
          %s484 = smul.addr %s483, 8
          %s485 = scalar_lea.vmem %s3, %s484
        $region75: #{forward.6} parent=50 // pred_fallthru
          _
      $region51: #{forward.6} parent=5 // pred_fallthru
        _
      %p486 = scmp.le.s32.totalorder 2, %s9
      // Predicated region
      $region76: #{forward.6} parent=5 // pred_check
        %p487 = pneg %p486
      $region77: #{forward.6} parent=5 // pred_check_branch
        %489 = sbr.rel (%p487) target = $region79
      $region78: #{forward.6} parent=5 // pred_region
        %s490 = ssub.s32 %s9, 2
      $region79: #{forward.6} parent=5 // pred_fallthru
        _
    $region6: #{forward.6} parent=1 // loop_footer
      %s13 = sadd.s32 1, %s9
    $region7: #{forward.6} parent=1 // loop_footer_branch
      %8 = sbr.rel target = $region3
    $region8: #{forward.6} parent=1 // loop_exit
      _

// kernel: forward.7
$region0: #{forward.7}
  #allocation0 [shape = 'u32[]', space=smem, size = 0x4, offset = 0x4, fixed_abs, tag = 'smem constant byte address 0x4 - core index']
  #allocation1 [shape = 'u32[144,128]{1,0:T(1,128)}', space=vmem, size = 0x12000, scoped, tag = 'internal scratch']
  %s0 = inlined_call_operand.vmem [shape: bf16[32,144], index: 0, kind: input, shape index: {}]
  %s1 = inlined_call_operand.vmem [shape: bf16[144,512], index: 1, kind: input, shape index: {}]
  %s2 = inlined_call_operand.vmem [shape: f32[32,1], index: 2, kind: input, shape index: {}]
  %s3 = inlined_call_operand.vmem [shape: f32[32,128], index: 3, kind: output, shape index: {}]
  %s4 = sld [smem:[#allocation0]]
  $region98: #{forward.7} parent=0
    _
  %s6 = ssub.s32 1, %s4
  %s7 = scalar_select 0, %s6, %s4
  $region1: #{forward.7} parent=0
    #allocation2 [shape = 'u8[73728]{0}', space=vmem, size = 0x12000, scoped, tag = 'input window, operand 1']
    loop: start=0, step=1, limit=6
    $region2: #{forward.7} parent=1 // loop_pre_header
      _
    $region3: #{forward.7} parent=1 // loop_header
      %s9 = sphi 0, %s13
      %p10 = scmp.ge.s32.totalorder %s9, 6
      %s16 = sphi 0, %s28
      %s17 = sphi 0, %s24
      %s18 = sphi 0, %s16
      %s19 = sphi 0, %s17
      %s20 = sphi 0, %s18
      %s21 = sphi 0, %s19
      %s29 = sphi 0, %s29
      %s31 = sphi 0, %s29
      %s32 = sphi 0, %s31
      %s46 = sphi 0, %s32
      %s54 = sphi 0, %s56
      %s57 = sphi 0, %s54
      %s58 = sphi 0, %s57
      %s74 = sphi 0, %s58
      %s78 = sphi 0, %s78
      %s80 = sphi 0, %s78
      %s81 = sphi 0, %s80
      %s95 = sphi 0, %s81
      %s101 = sphi 0, %s103
      %s104 = sphi 0, %s101
      %s105 = sphi 0, %s104
      %s121 = sphi 0, %s105
    $region4: #{forward.7} parent=1 // loop_header_branch
      %12 = sbr.rel (%p10) target = $region8
    $region5: #{forward.7} parent=1 // loop_body
      %s14 = ssub.s32 %s9, 1
      %s15 = ssub.s32 %s9, 2
      %s22 = sadd.s32 1, %s17
      %p23 = scmp.ge.s32.totalorder %s22, 4
      %s24 = scalar_select %p23, 0, %s22
      %s25 = sadd.s32 1, %s16
      %s26 = scalar_select %p23, %s25, %s16
      %p27 = scmp.ge.s32.totalorder %s26, 1
      %s28 = scalar_select %p27, 0, %s26
      %s30 = sadd.s32 %s29, 1
      %p33 = scmp.eq.s32.totalorder %s9, 3
      %p34 = scmp.ne.s32.totalorder %s29, %s31
      %p35 = scmp.eq.s32.totalorder %s9, 0
      %p36 = por %p34, %p35
      %p37 = scmp.ne.s32.totalorder %s29, %s31
      %p38 = scmp.eq.s32.totalorder %s14, 3
      %p39 = por %p37, %p38
      %p40 = scmp.ne.s32.totalorder %s31, %s32
      %p41 = scmp.eq.s32.totalorder %s14, 0
      %p42 = por %p40, %p41
      %p43 = scmp.ne.s32.totalorder %s31, %s32
      %p44 = scmp.eq.s32.totalorder %s15, 3
      %p45 = por %p43, %p44
      %p47 = scmp.ne.s32.totalorder %s32, %s46
      %p48 = scmp.eq.s32.totalorder %s15, 0
      %p49 = por %p47, %p48
      %s50 = sadd.s32 %s17, %s16
      %s51 = sadd.s32 %s24, %s28
      %s52 = ssub.s32 %s50, %s51
      %p53 = scmp.eq.s32.totalorder %s52, 0
      %s55 = sadd.s32 %s54, 1
      %s56 = scalar_select %p53, %s54, %s55
      %p59 = pneg %p53
      %p60 = scmp.eq.s32.totalorder %s9, 3
      %p61 = por %p59, %p60
      %p62 = scmp.ne.s32.totalorder %s54, %s57
      %p63 = scmp.eq.s32.totalorder %s9, 0
      %p64 = por %p62, %p63
      %p65 = scmp.ne.s32.totalorder %s54, %s57
      %p66 = scmp.eq.s32.totalorder %s14, 3
      %p67 = por %p65, %p66
      %p68 = scmp.ne.s32.totalorder %s57, %s58
      %p69 = scmp.eq.s32.totalorder %s14, 0
      %p70 = por %p68, %p69
      %p71 = scmp.ne.s32.totalorder %s57, %s58
      %p72 = scmp.eq.s32.totalorder %s15, 3
      %p73 = por %p71, %p72
      %p75 = scmp.ne.s32.totalorder %s58, %s74
      %p76 = scmp.eq.s32.totalorder %s15, 0
      %p77 = por %p75, %p76
      %s79 = sadd.s32 %s78, 1
      %p82 = scmp.eq.s32.totalorder %s9, 3
      %p83 = scmp.ne.s32.totalorder %s78, %s80
      %p84 = scmp.eq.s32.totalorder %s9, 0
      %p85 = por %p83, %p84
      %p86 = scmp.ne.s32.totalorder %s78, %s80
      %p87 = scmp.eq.s32.totalorder %s14, 3
      %p88 = por %p86, %p87
      %p89 = scmp.ne.s32.totalorder %s80, %s81
      %p90 = scmp.eq.s32.totalorder %s14, 0
      %p91 = por %p89, %p90
      %p92 = scmp.ne.s32.totalorder %s80, %s81
      %p93 = scmp.eq.s32.totalorder %s15, 3
      %p94 = por %p92, %p93
      %p96 = scmp.ne.s32.totalorder %s81, %s95
      %p97 = scmp.eq.s32.totalorder %s15, 0
      %p98 = por %p96, %p97
      %s99 = ssub.s32 %s16, %s28
      %p100 = scmp.eq.s32.totalorder %s99, 0
      %s102 = sadd.s32 %s101, 1
      %s103 = scalar_select %p100, %s101, %s102
      %p106 = pneg %p100
      %p107 = scmp.eq.s32.totalorder %s9, 3
      %p108 = por %p106, %p107
      %p109 = scmp.ne.s32.totalorder %s101, %s104
      %p110 = scmp.eq.s32.totalorder %s9, 0
      %p111 = por %p109, %p110
      %p112 = scmp.ne.s32.totalorder %s101, %s104
      %p113 = scmp.eq.s32.totalorder %s14, 3
      %p114 = por %p112, %p113
      %p115 = scmp.ne.s32.totalorder %s104, %s105
      %p116 = scmp.eq.s32.totalorder %s14, 0
      %p117 = por %p115, %p116
      %p118 = scmp.ne.s32.totalorder %s104, %s105
      %p119 = scmp.eq.s32.totalorder %s15, 3
      %p120 = por %p118, %p119
      %p122 = scmp.ne.s32.totalorder %s105, %s121
      %p123 = scmp.eq.s32.totalorder %s15, 0
      %p124 = por %p122, %p123
      %p125 = scmp.le.s32.totalorder 1, %s9
      %p126 = scmp.lt.s32.totalorder %s9, 5
      %p127 = pnand %p125, %p126
      %p128 = pneg %p127
      // Predicated region
      $region9: #{forward.7} parent=5 // pred_check
        _
      $region10: #{forward.7} parent=5 // pred_check_branch
        %130 = sbr.rel (%p127) target = $region12
      $region11: #{forward.7} parent=5 // pred_region
        %s131 = ssub.s32 %s9, 1
        // Predicated region
        $region13: #{forward.7} parent=11 // pred_check
          %p132 = pneg %p42
        $region14: #{forward.7} parent=11 // pred_check_branch
          %134 = sbr.rel (%p132) target = $region16
        $region15: #{forward.7} parent=11 // pred_region
          _
        $region16: #{forward.7} parent=11 // pred_fallthru
          _
        // Predicated region
        $region17: #{forward.7} parent=11 // pred_check
          %p135 = pneg %p91
        $region18: #{forward.7} parent=11 // pred_check_branch
          %137 = sbr.rel (%p135) target = $region20
        $region19: #{forward.7} parent=11 // pred_region
          _
        $region20: #{forward.7} parent=11 // pred_fallthru
          _
      $region12: #{forward.7} parent=5 // pred_fallthru
        _
      %p138 = scmp.lt.s32.totalorder %s9, 4
      // Predicated region
      $region21: #{forward.7} parent=5 // pred_check
        %p139 = pneg %p138
      $region22: #{forward.7} parent=5 // pred_check_branch
        %141 = sbr.rel (%p139) target = $region24
      $region23: #{forward.7} parent=5 // pred_region
        // Predicated region
        $region25: #{forward.7} parent=23 // pred_check
          %p142 = pneg %p64
        $region26: #{forward.7} parent=23 // pred_check_branch
          %144 = sbr.rel (%p142) target = $region28
        $region27: #{forward.7} parent=23 // pred_region
          %s145 = sand.u32 %s54, 1
          %s146 = sand.u32 %s54, 1
          %s147 = smul.addr %s146, 72
          %s148 = scalar_lea.vmem [#allocation2], %s147
          %s149 = sadd.s32 %s17, %s16
          %s150 = smul.addr %s149, 4
          %s151 = scalar_lea.vmem %s1, %s150
          // Predicated region
          $region29: #{forward.7} parent=27 // pred_check
            _
          $region30: #{forward.7} parent=27 // pred_check_branch
            %153 = sbr.rel (0) target = $region32
          $region31: #{forward.7} parent=27 // pred_region
            // Predicated region
            $region33: #{forward.7} parent=31 // pred_check
              _
            $region34: #{forward.7} parent=31 // pred_check_branch
              %155 = sbr.rel target = $region36
            $region35: #{forward.7} parent=31 // pred_region
              // Predicated region
              $region48: #{forward.7} parent=35 // pred_check
                _
              $region49: #{forward.7} parent=35 // pred_check_branch
                %205 = sbr.rel (0) target = $region51
              $region50: #{forward.7} parent=35 // pred_region
                loop: start=0, step=1, limit=1
                $region52: #{forward.7} parent=50 // loop_pre_header
                  _
                $region53: #{forward.7} parent=50 // loop_header
                  %s207 = sphi 0, %s211
                  %p208 = scmp.ge.s32.totalorder %s207, 1
                  %s212 = sphi %s151, %s151
                  %s213 = sphi %s148, %s148
                $region54: #{forward.7} parent=50 // loop_header_branch
                  %210 = sbr.rel (%p208) target = $region58
                $region55: #{forward.7} parent=50 // loop_body
                  _
                $region56: #{forward.7} parent=50 // loop_footer
                  %s211 = sadd.s32 1, %s207
                $region57: #{forward.7} parent=50 // loop_footer_branch
                  %206 = sbr.rel target = $region53
                $region58: #{forward.7} parent=50 // loop_exit
                  _
                %s215 = ssub.s32 16, 1
                loop: start=0, step=1, limit=1
                $region59: #{forward.7} parent=50 // loop_pre_header
                  _
                $region60: #{forward.7} parent=50 // loop_header
                  %s217 = sphi 0, %s221
                  %p218 = scmp.ge.s32.totalorder %s217, 1
                  %s222 = sphi %s151, %s151
                  %s223 = sphi %s148, %s148
                $region61: #{forward.7} parent=50 // loop_header_branch
                  %220 = sbr.rel (%p218) target = $region65
                $region62: #{forward.7} parent=50 // loop_body
                  %v224 = vld [vmem:[%s222] sm:%s215]
                  %225 = vst [vmem:[%s223] sm:%s215] %v224
                  %v226 = vld [vmem:[%s222 + $0x10] sm:%s215]
                  %227 = vst [vmem:[%s223 + $0x4] sm:%s215] %v226
                  %v228 = vld [vmem:[%s222 + $0x20] sm:%s215]
                  %229 = vst [vmem:[%s223 + $0x8] sm:%s215] %v228
                  %v230 = vld [vmem:[%s222 + $0x30] sm:%s215]
                  %231 = vst [vmem:[%s223 + $0xc] sm:%s215] %v230
                  %v232 = vld [vmem:[%s222 + $0x40] sm:%s215]
                  %233 = vst [vmem:[%s223 + $0x10] sm:%s215] %v232
                  %v234 = vld [vmem:[%s222 + $0x50] sm:%s215]
                  %235 = vst [vmem:[%s223 + $0x14] sm:%s215] %v234
                  %v236 = vld [vmem:[%s222 + $0x60] sm:%s215]
                  %237 = vst [vmem:[%s223 + $0x18] sm:%s215] %v236
                  %v238 = vld [vmem:[%s222 + $0x70] sm:%s215]
                  %239 = vst [vmem:[%s223 + $0x1c] sm:%s215] %v238
                  %v240 = vld [vmem:[%s222 + $0x80] sm:%s215]
                  %241 = vst [vmem:[%s223 + $0x20] sm:%s215] %v240
                  %v242 = vld [vmem:[%s222 + $0x90] sm:%s215]
                  %243 = vst [vmem:[%s223 + $0x24] sm:%s215] %v242
                  %v244 = vld [vmem:[%s222 + $0xa0] sm:%s215]
                  %245 = vst [vmem:[%s223 + $0x28] sm:%s215] %v244
                  %v246 = vld [vmem:[%s222 + $0xb0] sm:%s215]
                  %247 = vst [vmem:[%s223 + $0x2c] sm:%s215] %v246
                  %v248 = vld [vmem:[%s222 + $0xc0] sm:%s215]
                  %249 = vst [vmem:[%s223 + $0x30] sm:%s215] %v248
                  %v250 = vld [vmem:[%s222 + $0xd0] sm:%s215]
                  %251 = vst [vmem:[%s223 + $0x34] sm:%s215] %v250
                  %v252 = vld [vmem:[%s222 + $0xe0] sm:%s215]
                  %253 = vst [vmem:[%s223 + $0x38] sm:%s215] %v252
                  %v254 = vld [vmem:[%s222 + $0xf0] sm:%s215]
                  %255 = vst [vmem:[%s223 + $0x3c] sm:%s215] %v254
                  %v256 = vld [vmem:[%s222 + $0x100] sm:%s215]
                  %257 = vst [vmem:[%s223 + $0x40] sm:%s215] %v256
                  %v258 = vld [vmem:[%s222 + $0x110] sm:%s215]
                  %259 = vst [vmem:[%s223 + $0x44] sm:%s215] %v258
                $region63: #{forward.7} parent=50 // loop_footer
                  %s221 = sadd.s32 1, %s217
                $region64: #{forward.7} parent=50 // loop_footer_branch
                  %216 = sbr.rel target = $region60
                $region65: #{forward.7} parent=50 // loop_exit
                  _
              $region51: #{forward.7} parent=35 // pred_fallthru
                _
            $region36: #{forward.7} parent=31 // pred_fallthru
              _
            // Predicated region
            $region37: #{forward.7} parent=31 // pred_check
              _
            $region38: #{forward.7} parent=31 // pred_check_branch
              %157 = sbr.rel (0) target = $region40
            $region39: #{forward.7} parent=31 // pred_region
              %s159 = ssub.s32 16, 1
              loop: start=0, step=1, limit=1
              $region41: #{forward.7} parent=39 // loop_pre_header
                _
              $region42: #{forward.7} parent=39 // loop_header
                %s161 = sphi 0, %s165
                %p162 = scmp.ge.s32.totalorder %s161, 1
                %s166 = sphi %s151, %s151
                %s167 = sphi %s148, %s148
              $region43: #{forward.7} parent=39 // loop_header_branch
                %164 = sbr.rel (%p162) target = $region47
              $region44: #{forward.7} parent=39 // loop_body
                %v168 = vld [vmem:[%s166] sm:%s159]
                %169 = vst [vmem:[%s167] sm:%s159] %v168
                %v170 = vld [vmem:[%s166 + $0x10] sm:%s159]
                %171 = vst [vmem:[%s167 + $0x4] sm:%s159] %v170
                %v172 = vld [vmem:[%s166 + $0x20] sm:%s159]
                %173 = vst [vmem:[%s167 + $0x8] sm:%s159] %v172
                %v174 = vld [vmem:[%s166 + $0x30] sm:%s159]
                %175 = vst [vmem:[%s167 + $0xc] sm:%s159] %v174
                %v176 = vld [vmem:[%s166 + $0x40] sm:%s159]
                %177 = vst [vmem:[%s167 + $0x10] sm:%s159] %v176
                %v178 = vld [vmem:[%s166 + $0x50] sm:%s159]
                %179 = vst [vmem:[%s167 + $0x14] sm:%s159] %v178
                %v180 = vld [vmem:[%s166 + $0x60] sm:%s159]
                %181 = vst [vmem:[%s167 + $0x18] sm:%s159] %v180
                %v182 = vld [vmem:[%s166 + $0x70] sm:%s159]
                %183 = vst [vmem:[%s167 + $0x1c] sm:%s159] %v182
                %v184 = vld [vmem:[%s166 + $0x80] sm:%s159]
                %185 = vst [vmem:[%s167 + $0x20] sm:%s159] %v184
                %v186 = vld [vmem:[%s166 + $0x90] sm:%s159]
                %187 = vst [vmem:[%s167 + $0x24] sm:%s159] %v186
                %v188 = vld [vmem:[%s166 + $0xa0] sm:%s159]
                %189 = vst [vmem:[%s167 + $0x28] sm:%s159] %v188
                %v190 = vld [vmem:[%s166 + $0xb0] sm:%s159]
                %191 = vst [vmem:[%s167 + $0x2c] sm:%s159] %v190
                %v192 = vld [vmem:[%s166 + $0xc0] sm:%s159]
                %193 = vst [vmem:[%s167 + $0x30] sm:%s159] %v192
                %v194 = vld [vmem:[%s166 + $0xd0] sm:%s159]
                %195 = vst [vmem:[%s167 + $0x34] sm:%s159] %v194
                %v196 = vld [vmem:[%s166 + $0xe0] sm:%s159]
                %197 = vst [vmem:[%s167 + $0x38] sm:%s159] %v196
                %v198 = vld [vmem:[%s166 + $0xf0] sm:%s159]
                %199 = vst [vmem:[%s167 + $0x3c] sm:%s159] %v198
                %v200 = vld [vmem:[%s166 + $0x100] sm:%s159]
                %201 = vst [vmem:[%s167 + $0x40] sm:%s159] %v200
                %v202 = vld [vmem:[%s166 + $0x110] sm:%s159]
                %203 = vst [vmem:[%s167 + $0x44] sm:%s159] %v202
              $region45: #{forward.7} parent=39 // loop_footer
                %s165 = sadd.s32 1, %s161
              $region46: #{forward.7} parent=39 // loop_footer_branch
                %160 = sbr.rel target = $region42
              $region47: #{forward.7} parent=39 // loop_exit
                _
            $region40: #{forward.7} parent=31 // pred_fallthru
              _
          $region32: #{forward.7} parent=27 // pred_fallthru
            _
          %260 = vnop
        $region28: #{forward.7} parent=23 // pred_fallthru
          _
      $region24: #{forward.7} parent=5 // pred_fallthru
        _
      %p261 = scmp.le.s32.totalorder 1, %s9
      %p262 = scmp.lt.s32.totalorder %s9, 5
      %p263 = pnand %p261, %p262
      %p264 = pneg %p263
      // Predicated region
      $region66: #{forward.7} parent=5 // pred_check
        _
      $region67: #{forward.7} parent=5 // pred_check_branch
        %266 = sbr.rel (%p263) target = $region69
      $region68: #{forward.7} parent=5 // pred_region
        %s267 = ssub.s32 %s9, 1
        %s268 = sand.u32 %s57, 1
        %s269 = sand.u32 %s57, 1
        %s270 = smul.addr %s269, 72
        %s271 = scalar_lea.vmem [#allocation2], %s270
        // Predicated region
        $region70: #{forward.7} parent=68 // pred_check
          %p272 = pneg %p70
        $region71: #{forward.7} parent=68 // pred_check_branch
          %274 = sbr.rel (%p272) target = $region73
        $region72: #{forward.7} parent=68 // pred_region
          _
        $region73: #{forward.7} parent=68 // pred_fallthru
          _
        %p275 = pneg %p42
        %p276 = pneg %p39
        %s277 = sand.u32 %s57, 1
        %s278 = sand.u32 %s57, 1
        %s279 = smul.addr %s278, 72
        %s280 = scalar_lea.vmem [#allocation2], %s279
        %p281 = pneg %p70
        %p282 = pneg %p67
        %p283 = pneg %p91
        %p284 = pneg %p88
        %p285 = pneg %p117
        %p286 = pneg %p114
        %p287 = scmp.lt.s32.totalorder %s18, 0
        %s288 = scalar_select %p287, %s18, 0
        %s289 = smul.addr %s288, 8
        %s290 = scalar_lea.vmem %s3, %s289
        %s291 = sadd.s32 %s19, %s18
        %p292 = scmp.lt.s32.totalorder %s18, 0
        %s293 = scalar_select %p292, %s18, 0
        %s294 = smul.addr %s293, 8
        %s295 = scalar_lea.vmem %s3, %s294
        %v297 = vld [vmem:[%s0] sm:$0xff]
        %v298 = vld [vmem:[%s0 + $0x8] sm:$0xff]
        %v299 = vld [vmem:[%s0 + $0x10] sm:$0xff]
        %v300 = vld [vmem:[%s0 + $0x18] sm:$0xff]
        %v301 = vld [vmem:[%s271] sm:$0xf]
        %v302 = vld [vmem:[%s271 + $0x4] sm:$0xf]
        %v303 = vld [vmem:[%s271 + $0x8] sm:$0xf]
        %v304 = vld [vmem:[%s271 + $0xc] sm:$0xf]
        %v305 = vld [vmem:[%s271 + $0x10] sm:$0xf]
        %v306 = vld [vmem:[%s271 + $0x14] sm:$0xf]
        %v307 = vld [vmem:[%s271 + $0x18] sm:$0xf]
        %v308 = vld [vmem:[%s271 + $0x1c] sm:$0xf]
        %v309 = vld [vmem:[%s271 + $0x20] sm:$0xf]
        %v310 = vld [vmem:[%s271 + $0x24] sm:$0xf]
        %v311 = vld [vmem:[%s271 + $0x28] sm:$0xf]
        %v312 = vld [vmem:[%s271 + $0x2c] sm:$0xf]
        %v313 = vld [vmem:[%s271 + $0x30] sm:$0xf]
        %v314 = vld [vmem:[%s271 + $0x34] sm:$0xf]
        %v315 = vld [vmem:[%s271 + $0x38] sm:$0xf]
        %v316 = vld [vmem:[%s271 + $0x3c] sm:$0xf]
        %v317 = vld [vmem:[%s271 + $0x40] sm:$0xf]
        %v318 = vld [vmem:[%s271 + $0x44] sm:$0xf]
        %v323 = vunpack.c.l.b16 %v297
        %v324 = vunpack.c.h.b16 %v297
        %v325 = vunpack.c.l.b16 %v298
        %v326 = vunpack.c.h.b16 %v298
        %v327 = vunpack.c.l.b16 %v299
        %v328 = vunpack.c.h.b16 %v299
        %v329 = vunpack.c.l.b16 %v300
        %v330 = vunpack.c.h.b16 %v300
        %v331 = vpack.c.b16 %v325, %v323
        %v332 = vpack.c.b16 %v326, %v324
        %v333 = vpack.c.b16 %v329, %v327
        %v334 = vpack.c.b16 %v330, %v328
        %v355 = vunpack.c.l.b16 %v301
        %v356 = vunpack.c.l.b16 %v302
        %v357 = vunpack.c.l.b16 %v303
        %v358 = vunpack.c.l.b16 %v304
        %v359 = vunpack.c.l.b16 %v305
        %v360 = vunpack.c.l.b16 %v306
        %v361 = vunpack.c.l.b16 %v307
        %v362 = vunpack.c.l.b16 %v308
        %v363 = vunpack.c.l.b16 %v309
        %v364 = vunpack.c.l.b16 %v310
        %v365 = vunpack.c.l.b16 %v311
        %v366 = vunpack.c.l.b16 %v312
        %v367 = vunpack.c.l.b16 %v313
        %v368 = vunpack.c.l.b16 %v314
        %v369 = vunpack.c.l.b16 %v315
        %v370 = vunpack.c.l.b16 %v316
        %v371 = vunpack.c.l.b16 %v317
        %v372 = vunpack.c.l.b16 %v318
        %v373 = vpack.c.b16 %v356, %v355
        %v374 = vpack.c.b16 %v358, %v357
        %v375 = vpack.c.b16 %v360, %v359
        %v376 = vpack.c.b16 %v362, %v361
        %v377 = vpack.c.b16 %v364, %v363
        %v378 = vpack.c.b16 %v366, %v365
        %v379 = vpack.c.b16 %v368, %v367
        %v380 = vpack.c.b16 %v370, %v369
        %v381 = vpack.c.b16 %v372, %v371
        %vm391 = vcmask 130048
        %v393 = vsel %vm391, %v332, 0
        %v396 = vsel %vm391, %v334, 0
        %398 = vmatprep.subr.bf16.mxu0 0
        %399 = vmatpush1.bf16.msra.mxu0 %v380
        %400 = vmatprep.subr.bf16.mxu0 0
        %401 = vmatpush1.bf16.msra.mxu0 %v379
        %402 = vmatprep.subr.bf16.mxu0 0
        %403 = vmatpush1.bf16.msra.mxu0 %v378
        %404 = vmatprep.subr.bf16.mxu0 0
        %405 = vmatpush1.bf16.msra.mxu0 %v377
        %406 = vmatprep.subr.bf16.mxu0 0
        %407 = vmatpush1.bf16.msra.mxu0 %v376
        %408 = vmatprep.subr.bf16.mxu0 0
        %409 = vmatpush1.bf16.msra.mxu0 %v375
        %410 = vmatprep.subr.bf16.mxu0 0
        %411 = vmatpush1.bf16.msra.mxu0 %v374
        %412 = vmatprep.subr.bf16.mxu0 0
        %413 = vmatpush1.bf16.msra.mxu0 %v373
        %414 = vmatprep.subr.bf16.mxu0 0
        %415 = vmatpush2.bf16.msra.mxu0 0
        %416 = vmatprep.subr.bf16.mxu0 0
        %417 = vmatpush2.bf16.msra.mxu0 0
        %418 = vmatprep.subr.bf16.mxu0 0
        %419 = vmatpush2.bf16.msra.mxu0 0
        %420 = vmatprep.subr.bf16.mxu0 0
        %421 = vmatpush2.bf16.msra.mxu0 0
        %422 = vmatprep.subr.bf16.mxu0 0
        %423 = vmatpush2.bf16.msra.mxu0 0
        %424 = vmatprep.subr.bf16.mxu0 0
        %425 = vmatpush2.bf16.msra.mxu0 0
        %426 = vmatprep.subr.bf16.mxu0 0
        %427 = vmatpush2.bf16.msra.mxu0 0
        %428 = vmatprep.subr.bf16.mxu0 0
        %429 = vmatpush2.bf16.msra.mxu0 %v381
        %430 = vmatprep.mubr.bf16.mxu0 %v393
        %431 = vmatmul.mubr.bf16.gmra.mxu0 %v331
        %v432 = vpop.f32.mrf.mxu0
        %v433 = vadd.f32 0.0, %v432
        %v434 = vpop.f32.mrf.mxu0
        %v435 = vpop.f32.mrf.mxu0
        %v436 = vadd.f32 0.0, %v435
        %v437 = vpop.f32.mrf.mxu0
        %438 = vmatprep.mubr.bf16.mxu0 %v396
        %439 = vmatmul.mubr.bf16.gmra.mxu0 %v333
        %v440 = vpop.f32.mrf.mxu0
        %v441 = vadd.f32 0.0, %v440
        %v442 = vpop.f32.mrf.mxu0
        %v443 = vpop.f32.mrf.mxu0
        %v444 = vadd.f32 0.0, %v443
        %v445 = vpop.f32.mrf.mxu0
        %446 = vdwg.mxu0
        %p447 = scmp.eq.s32.totalorder %s19, 0
        // Predicated region
        $region74: #{forward.7} parent=68 // pred_check
          %p448 = pneg %p447
        $region75: #{forward.7} parent=68 // pred_check_branch
          %450 = sbr.rel (%p448) target = $region77
        $region76: #{forward.7} parent=68 // pred_region
          %451 = vst [vmem:[%s295] sm:$0xff] %v433
          %452 = vst [vmem:[%s295 + $0x8] sm:$0xff] %v436
          %453 = vst [vmem:[%s295 + $0x10] sm:$0xff] %v441
          %454 = vst [vmem:[%s295 + $0x18] sm:$0xff] %v444
        $region77: #{forward.7} parent=68 // pred_fallthru
          _
        %p455 = scmp.gt.s32.totalorder %s19, 0
        // Predicated region
        $region78: #{forward.7} parent=68 // pred_check
          %p456 = pneg %p455
        $region79: #{forward.7} parent=68 // pred_check_branch
          %458 = sbr.rel (%p456) target = $region81
        $region80: #{forward.7} parent=68 // pred_region
          %v459 = vld [vmem:[%s295] sm:$0xff]
          %v460 = vld [vmem:[%s295 + $0x8] sm:$0xff]
          %v461 = vld [vmem:[%s295 + $0x10] sm:$0xff]
          %v462 = vld [vmem:[%s295 + $0x18] sm:$0xff]
          %v463 = vmax.f32 %v459, %v433
          %v464 = vmax.f32 %v460, %v436
          %v465 = vmax.f32 %v461, %v441
          %v466 = vmax.f32 %v462, %v444
          %467 = vst [vmem:[%s295] sm:$0xff] %v463
          %468 = vst [vmem:[%s295 + $0x8] sm:$0xff] %v464
          %469 = vst [vmem:[%s295 + $0x10] sm:$0xff] %v465
          %470 = vst [vmem:[%s295 + $0x18] sm:$0xff] %v466
        $region81: #{forward.7} parent=68 // pred_fallthru
          _
        %p471 = scmp.eq.s32.totalorder %s19, 3
        // Predicated region
        $region82: #{forward.7} parent=68 // pred_check
          %p472 = pneg %p471
        $region83: #{forward.7} parent=68 // pred_check_branch
          %474 = sbr.rel (%p472) target = $region85
        $region84: #{forward.7} parent=68 // pred_region
          %v475 = vld [vmem:[%s295] sm:$0xff]
          %v476 = vld [vmem:[%s295 + $0x8] sm:$0xff]
          %v477 = vld [vmem:[%s295 + $0x10] sm:$0xff]
          %v478 = vld [vmem:[%s295 + $0x18] sm:$0xff]
          %v479 = vld [vmem:[%s2] sm:$0xff]
          %v480 = vld [vmem:[%s2 + $0x8] sm:$0xff]
          %v481 = vld [vmem:[%s2 + $0x10] sm:$0xff]
          %v482 = vld [vmem:[%s2 + $0x18] sm:$0xff]
          %484 = vset.pattern.permute.xlu0 0
          %485 = vperm.xlu0 %484, %v479
          %v486 = vpop.permute.xlu0 %485
          %489 = vset.pattern.permute.xlu0 0
          %490 = vperm.xlu0 %489, %v480
          %v491 = vpop.permute.xlu0 %490
          %494 = vset.pattern.permute.xlu0 0
          %495 = vperm.xlu0 %494, %v481
          %v496 = vpop.permute.xlu0 %495
          %499 = vset.pattern.permute.xlu0 0
          %500 = vperm.xlu0 %499, %v482
          %v501 = vpop.permute.xlu0 %500
          %v503 = vadd.f32 %v475, %v486
          %v504 = vadd.f32 %v476, %v491
          %v505 = vadd.f32 %v477, %v496
          %v506 = vadd.f32 %v478, %v501
          %v507 = vmax.f32 %v503, 0.0
          %v508 = vmax.f32 %v504, 0.0
          %v509 = vmax.f32 %v505, 0.0
          %v510 = vmax.f32 %v506, 0.0
          %511 = vst [vmem:[%s295] sm:$0xff] %v507
          %512 = vst [vmem:[%s295 + $0x8] sm:$0xff] %v508
          %513 = vst [vmem:[%s295 + $0x10] sm:$0xff] %v509
          %514 = vst [vmem:[%s295 + $0x18] sm:$0xff] %v510
        $region85: #{forward.7} parent=68 // pred_fallthru
          _
        %p515 = scmp.lt.s32.totalorder %s18, 0
        %s516 = scalar_select %p515, %s18, 0
        %s517 = smul.addr %s516, 8
        %s518 = scalar_lea.vmem %s3, %s517
        // Predicated region
        $region86: #{forward.7} parent=68 // pred_check
          %p519 = pneg %p114
        $region87: #{forward.7} parent=68 // pred_check_branch
          %521 = sbr.rel (%p519) target = $region89
        $region88: #{forward.7} parent=68 // pred_region
          _
        $region89: #{forward.7} parent=68 // pred_fallthru
          _
        // Predicated region
        $region90: #{forward.7} parent=68 // pred_check
          %p522 = pneg %p114
        $region91: #{forward.7} parent=68 // pred_check_branch
          %524 = sbr.rel (%p522) target = $region93
        $region92: #{forward.7} parent=68 // pred_region
          %p525 = scmp.lt.s32.totalorder %s18, 0
          %s526 = scalar_select %p525, %s18, 0
          %s527 = smul.addr %s526, 8
          %s528 = scalar_lea.vmem %s3, %s527
        $region93: #{forward.7} parent=68 // pred_fallthru
          _
      $region69: #{forward.7} parent=5 // pred_fallthru
        _
      %p529 = scmp.le.s32.totalorder 2, %s9
      // Predicated region
      $region94: #{forward.7} parent=5 // pred_check
        %p530 = pneg %p529
      $region95: #{forward.7} parent=5 // pred_check_branch
        %532 = sbr.rel (%p530) target = $region97
      $region96: #{forward.7} parent=5 // pred_region
        %s533 = ssub.s32 %s9, 2
      $region97: #{forward.7} parent=5 // pred_fallthru
        _
    $region6: #{forward.7} parent=1 // loop_footer
      %s13 = sadd.s32 1, %s9
    $region7: #{forward.7} parent=1 // loop_footer_branch
      %8 = sbr.rel target = $region3
    $region8: #{forward.7} parent=1 // loop_exit
      _

// kernel: forward.8
$region0: #{forward.8}
  #allocation0 [shape = 'u32[]', space=smem, size = 0x4, offset = 0x4, fixed_abs, tag = 'smem constant byte address 0x4 - core index']
  #allocation1 [shape = 'u32[144,128]{1,0:T(1,128)}', space=vmem, size = 0x12000, scoped, tag = 'internal scratch']
  %s0 = inlined_call_operand.vmem [shape: bf16[4,32,288], index: 0, kind: input, shape index: {}]
  %s1 = inlined_call_operand.vmem [shape: bf16[288,64], index: 1, kind: input, shape index: {}]
  %s2 = inlined_call_operand.vmem [shape: f32[1,64], index: 2, kind: input, shape index: {}]
  %s3 = inlined_call_operand.vmem [shape: f32[32,64], index: 3, kind: output, shape index: {}]
  %s4 = sld [smem:[#allocation0]]
  $region22: #{forward.8} parent=0
    _
  %s6 = ssub.s32 1, %s4
  %s7 = scalar_select 0, %s6, %s4
  // Predicated region
  $region2: #{forward.8} parent=0 // pred_check
    _
  $region3: #{forward.8} parent=0 // pred_check_branch
    %9 = sbr.rel (0) target = $region5
  $region4: #{forward.8} parent=0 // pred_region
    _
  $region5: #{forward.8} parent=0 // pred_fallthru
    _
  // Predicated region
  $region6: #{forward.8} parent=0 // pred_check
    _
  $region7: #{forward.8} parent=0 // pred_check_branch
    %11 = sbr.rel (0) target = $region9
  $region8: #{forward.8} parent=0 // pred_region
    _
  $region9: #{forward.8} parent=0 // pred_fallthru
    _
  // Predicated region
  $region10: #{forward.8} parent=0 // pred_check
    _
  $region11: #{forward.8} parent=0 // pred_check_branch
    %13 = sbr.rel (0) target = $region13
  $region12: #{forward.8} parent=0 // pred_region
    _
  $region13: #{forward.8} parent=0 // pred_fallthru
    _
  %v15 = vld [vmem:[%s0] sm:$0xff]
  %v16 = vld [vmem:[%s0 + $0x8] sm:$0xf]
  %v17 = vld [vmem:[%s0 + $0xc] sm:$0xff]
  %v18 = vld [vmem:[%s0 + $0x14] sm:$0xf]
  %v19 = vld [vmem:[%s0 + $0x18] sm:$0xff]
  %v20 = vld [vmem:[%s0 + $0x20] sm:$0xf]
  %v21 = vld [vmem:[%s0 + $0x24] sm:$0xff]
  %v22 = vld [vmem:[%s0 + $0x2c] sm:$0xf]
  %v23 = vld [vmem:[%s0 + $0x30] sm:$0xff]
  %v24 = vld [vmem:[%s0 + $0x38] sm:$0xf]
  %v25 = vld [vmem:[%s0 + $0x3c] sm:$0xff]
  %v26 = vld [vmem:[%s0 + $0x44] sm:$0xf]
  %v27 = vld [vmem:[%s0 + $0x48] sm:$0xff]
  %v28 = vld [vmem:[%s0 + $0x50] sm:$0xf]
  %v29 = vld [vmem:[%s0 + $0x54] sm:$0xff]
  %v30 = vld [vmem:[%s0 + $0x5c] sm:$0xf]
  %v31 = vld [vmem:[%s0 + $0x60] sm:$0xff]
  %v32 = vld [vmem:[%s0 + $0x68] sm:$0xf]
  %v33 = vld [vmem:[%s0 + $0x6c] sm:$0xff]
  %v34 = vld [vmem:[%s0 + $0x74] sm:$0xf]
  %v35 = vld [vmem:[%s0 + $0x78] sm:$0xff]
  %v36 = vld [vmem:[%s0 + $0x80] sm:$0xf]
  %v37 = vld [vmem:[%s0 + $0x84] sm:$0xff]
  %v38 = vld [vmem:[%s0 + $0x8c] sm:$0xf]
  %v39 = vld [vmem:[%s0 + $0x90] sm:$0xff]
  %v40 = vld [vmem:[%s0 + $0x98] sm:$0xf]
  %v41 = vld [vmem:[%s0 + $0x9c] sm:$0xff]
  %v42 = vld [vmem:[%s0 + $0xa4] sm:$0xf]
  %v43 = vld [vmem:[%s0 + $0xa8] sm:$0xff]
  %v44 = vld [vmem:[%s0 + $0xb0] sm:$0xf]
  %v45 = vld [vmem:[%s0 + $0xb4] sm:$0xff]
  %v46 = vld [vmem:[%s0 + $0xbc] sm:$0xf]
  %v47 = vld [vmem:[%s1] sm:$0xf]
  %v48 = vld [vmem:[%s1 + $0x4] sm:$0xf]
  %v49 = vld [vmem:[%s1 + $0x8] sm:$0xf]
  %v50 = vld [vmem:[%s1 + $0xc] sm:$0xf]
  %v51 = vld [vmem:[%s1 + $0x10] sm:$0xf]
  %v52 = vld [vmem:[%s1 + $0x14] sm:$0xf]
  %v53 = vld [vmem:[%s1 + $0x18] sm:$0xf]
  %v54 = vld [vmem:[%s1 + $0x1c] sm:$0xf]
  %v55 = vld [vmem:[%s1 + $0x20] sm:$0xf]
  %v56 = vld [vmem:[%s1 + $0x24] sm:$0xf]
  %v57 = vld [vmem:[%s1 + $0x28] sm:$0xf]
  %v58 = vld [vmem:[%s1 + $0x2c] sm:$0xf]
  %v59 = vld [vmem:[%s1 + $0x30] sm:$0xf]
  %v60 = vld [vmem:[%s1 + $0x34] sm:$0xf]
  %v61 = vld [vmem:[%s1 + $0x38] sm:$0xf]
  %v62 = vld [vmem:[%s1 + $0x3c] sm:$0xf]
  %v63 = vld [vmem:[%s1 + $0x40] sm:$0xf]
  %v64 = vld [vmem:[%s1 + $0x44] sm:$0xf]
  %v65 = vld [vmem:[%s1 + $0x48] sm:$0xf]
  %v66 = vld [vmem:[%s1 + $0x4c] sm:$0xf]
  %v67 = vld [vmem:[%s1 + $0x50] sm:$0xf]
  %v68 = vld [vmem:[%s1 + $0x54] sm:$0xf]
  %v69 = vld [vmem:[%s1 + $0x58] sm:$0xf]
  %v70 = vld [vmem:[%s1 + $0x5c] sm:$0xf]
  %v71 = vld [vmem:[%s1 + $0x60] sm:$0xf]
  %v72 = vld [vmem:[%s1 + $0x64] sm:$0xf]
  %v73 = vld [vmem:[%s1 + $0x68] sm:$0xf]
  %v74 = vld [vmem:[%s1 + $0x6c] sm:$0xf]
  %v75 = vld [vmem:[%s1 + $0x70] sm:$0xf]
  %v76 = vld [vmem:[%s1 + $0x74] sm:$0xf]
  %v77 = vld [vmem:[%s1 + $0x78] sm:$0xf]
  %v78 = vld [vmem:[%s1 + $0x7c] sm:$0xf]
  %v79 = vld [vmem:[%s1 + $0x80] sm:$0xf]
  %v80 = vld [vmem:[%s1 + $0x84] sm:$0xf]
  %v81 = vld [vmem:[%s1 + $0x88] sm:$0xf]
  %v82 = vld [vmem:[%s1 + $0x8c] sm:$0xf]
  %v115 = vunpack.c.l.b16 %v15
  %v116 = vunpack.c.h.b16 %v15
  %v117 = vunpack.c.l.b16 %v16
  %v118 = vunpack.c.l.b16 %v17
  %v119 = vunpack.c.h.b16 %v17
  %v120 = vunpack.c.l.b16 %v18
  %v121 = vunpack.c.l.b16 %v19
  %v122 = vunpack.c.h.b16 %v19
  %v123 = vunpack.c.l.b16 %v20
  %v124 = vunpack.c.l.b16 %v21
  %v125 = vunpack.c.h.b16 %v21
  %v126 = vunpack.c.l.b16 %v22
  %v127 = vunpack.c.l.b16 %v23
  %v128 = vunpack.c.h.b16 %v23
  %v129 = vunpack.c.l.b16 %v24
  %v130 = vunpack.c.l.b16 %v25
  %v131 = vunpack.c.h.b16 %v25
  %v132 = vunpack.c.l.b16 %v26
  %v133 = vunpack.c.l.b16 %v27
  %v134 = vunpack.c.h.b16 %v27
  %v135 = vunpack.c.l.b16 %v28
  %v136 = vunpack.c.l.b16 %v29
  %v137 = vunpack.c.h.b16 %v29
  %v138 = vunpack.c.l.b16 %v30
  %v139 = vunpack.c.l.b16 %v31
  %v140 = vunpack.c.h.b16 %v31
  %v141 = vunpack.c.l.b16 %v32
  %v142 = vunpack.c.l.b16 %v33
  %v143 = vunpack.c.h.b16 %v33
  %v144 = vunpack.c.l.b16 %v34
  %v145 = vunpack.c.l.b16 %v35
  %v146 = vunpack.c.h.b16 %v35
  %v147 = vunpack.c.l.b16 %v36
  %v148 = vunpack.c.l.b16 %v37
  %v149 = vunpack.c.h.b16 %v37
  %v150 = vunpack.c.l.b16 %v38
  %v151 = vunpack.c.l.b16 %v39
  %v152 = vunpack.c.h.b16 %v39
  %v153 = vunpack.c.l.b16 %v40
  %v154 = vunpack.c.l.b16 %v41
  %v155 = vunpack.c.h.b16 %v41
  %v156 = vunpack.c.l.b16 %v42
  %v157 = vunpack.c.l.b16 %v43
  %v158 = vunpack.c.h.b16 %v43
  %v159 = vunpack.c.l.b16 %v44
  %v160 = vunpack.c.l.b16 %v45
  %v161 = vunpack.c.h.b16 %v45
  %v162 = vunpack.c.l.b16 %v46
  %v163 = vpack.c.b16 %v118, %v115
  %v164 = vpack.c.b16 %v119, %v116
  %v165 = vpack.c.b16 %v120, %v117
  %v166 = vpack.c.b16 %v124, %v121
  %v167 = vpack.c.b16 %v125, %v122
  %v168 = vpack.c.b16 %v126, %v123
  %v169 = vpack.c.b16 %v130, %v127
  %v170 = vpack.c.b16 %v131, %v128
  %v171 = vpack.c.b16 %v132, %v129
  %v172 = vpack.c.b16 %v136, %v133
  %v173 = vpack.c.b16 %v137, %v134
  %v174 = vpack.c.b16 %v138, %v135
  %v175 = vpack.c.b16 %v142, %v139
  %v176 = vpack.c.b16 %v143, %v140
  %v177 = vpack.c.b16 %v144, %v141
  %v178 = vpack.c.b16 %v148, %v145
  %v179 = vpack.c.b16 %v149, %v146
  %v180 = vpack.c.b16 %v150, %v147
  %v181 = vpack.c.b16 %v154, %v151
  %v182 = vpack.c.b16 %v155, %v152
  %v183 = vpack.c.b16 %v156, %v153
  %v184 = vpack.c.b16 %v160, %v157
  %v185 = vpack.c.b16 %v161, %v158
  %v186 = vpack.c.b16 %v162, %v159
  %v239 = vunpack.c.l.b16 %v47
  %v240 = vunpack.c.l.b16 %v48
  %v241 = vunpack.c.l.b16 %v49
  %v242 = vunpack.c.l.b16 %v50
  %v243 = vunpack.c.l.b16 %v51
  %v244 = vunpack.c.l.b16 %v52
  %v245 = vunpack.c.l.b16 %v53
  %v246 = vunpack.c.l.b16 %v54
  %v247 = vunpack.c.l.b16 %v55
  %v248 = vunpack.c.l.b16 %v56
  %v249 = vunpack.c.l.b16 %v57
  %v250 = vunpack.c.l.b16 %v58
  %v251 = vunpack.c.l.b16 %v59
  %v252 = vunpack.c.l.b16 %v60
  %v253 = vunpack.c.l.b16 %v61
  %v254 = vunpack.c.l.b16 %v62
  %v255 = vunpack.c.l.b16 %v63
  %v256 = vunpack.c.l.b16 %v64
  %v257 = vunpack.c.l.b16 %v65
  %v258 = vunpack.c.l.b16 %v66
  %v259 = vunpack.c.l.b16 %v67
  %v260 = vunpack.c.l.b16 %v68
  %v261 = vunpack.c.l.b16 %v69
  %v262 = vunpack.c.l.b16 %v70
  %v263 = vunpack.c.l.b16 %v71
  %v264 = vunpack.c.l.b16 %v72
  %v265 = vunpack.c.l.b16 %v73
  %v266 = vunpack.c.l.b16 %v74
  %v267 = vunpack.c.l.b16 %v75
  %v268 = vunpack.c.l.b16 %v76
  %v269 = vunpack.c.l.b16 %v77
  %v270 = vunpack.c.l.b16 %v78
  %v271 = vunpack.c.l.b16 %v79
  %v272 = vunpack.c.l.b16 %v80
  %v273 = vunpack.c.l.b16 %v81
  %v274 = vunpack.c.l.b16 %v82
  %v275 = vpack.c.b16 %v240, %v239
  %v276 = vpack.c.b16 %v242, %v241
  %v277 = vpack.c.b16 %v244, %v243
  %v278 = vpack.c.b16 %v246, %v245
  %v279 = vpack.c.b16 %v248, %v247
  %v280 = vpack.c.b16 %v250, %v249
  %v281 = vpack.c.b16 %v252, %v251
  %v282 = vpack.c.b16 %v254, %v253
  %v283 = vpack.c.b16 %v256, %v255
  %v284 = vpack.c.b16 %v258, %v257
  %v285 = vpack.c.b16 %v260, %v259
  %v286 = vpack.c.b16 %v262, %v261
  %v287 = vpack.c.b16 %v264, %v263
  %v288 = vpack.c.b16 %v266, %v265
  %v289 = vpack.c.b16 %v268, %v267
  %v290 = vpack.c.b16 %v270, %v269
  %v291 = vpack.c.b16 %v272, %v271
  %v292 = vpack.c.b16 %v274, %v273
  %vm311 = vcmask 261120
  %v313 = vsel %vm311, %v165, 0
  %v316 = vsel %vm311, %v168, 0
  %v319 = vsel %vm311, %v171, 0
  %v322 = vsel %vm311, %v174, 0
  %v325 = vsel %vm311, %v177, 0
  %v328 = vsel %vm311, %v180, 0
  %v331 = vsel %vm311, %v183, 0
  %v334 = vsel %vm311, %v186, 0
  %336 = vmatprep.subr.bf16.mxu0 0
  %337 = vmatpush1.bf16.msra.mxu0 %v282
  %338 = vmatprep.subr.bf16.mxu0 0
  %339 = vmatpush1.bf16.msra.mxu0 %v281
  %340 = vmatprep.subr.bf16.mxu0 0
  %341 = vmatpush1.bf16.msra.mxu0 %v280
  %342 = vmatprep.subr.bf16.mxu0 0
  %343 = vmatpush1.bf16.msra.mxu0 %v279
  %344 = vmatprep.subr.bf16.mxu0 0
  %345 = vmatpush1.bf16.msra.mxu0 %v278
  %346 = vmatprep.subr.bf16.mxu0 0
  %347 = vmatpush1.bf16.msra.mxu0 %v277
  %348 = vmatprep.subr.bf16.mxu0 0
  %349 = vmatpush1.bf16.msra.mxu0 %v276
  %350 = vmatprep.subr.bf16.mxu0 0
  %351 = vmatpush1.bf16.msra.mxu0 %v275
  %352 = vmatprep.subr.bf16.mxu0 0
  %353 = vmatpush2.bf16.msra.mxu0 %v290
  %354 = vmatprep.subr.bf16.mxu0 0
  %355 = vmatpush2.bf16.msra.mxu0 %v289
  %356 = vmatprep.subr.bf16.mxu0 0
  %357 = vmatpush2.bf16.msra.mxu0 %v288
  %358 = vmatprep.subr.bf16.mxu0 0
  %359 = vmatpush2.bf16.msra.mxu0 %v287
  %360 = vmatprep.subr.bf16.mxu0 0
  %361 = vmatpush2.bf16.msra.mxu0 %v286
  %362 = vmatprep.subr.bf16.mxu0 0
  %363 = vmatpush2.bf16.msra.mxu0 %v285
  %364 = vmatprep.subr.bf16.mxu0 0
  %365 = vmatpush2.bf16.msra.mxu0 %v284
  %366 = vmatprep.subr.bf16.mxu0 0
  %367 = vmatpush2.bf16.msra.mxu0 %v283
  %368 = vmatprep.mubr.bf16.mxu0 %v164
  %369 = vmatmul.mubr.bf16.gmra.mxu0 %v163
  %v370 = vpop.f32.mrf.mxu0
  %v371 = vadd.f32 0.0, %v370
  %v372 = vpop.f32.mrf.mxu0
  %v373 = vpop.f32.mrf.mxu0
  %v374 = vadd.f32 0.0, %v373
  %v375 = vpop.f32.mrf.mxu0
  %376 = vmatprep.mubr.bf16.mxu0 %v167
  %377 = vmatmul.mubr.bf16.gmra.mxu0 %v166
  %v378 = vpop.f32.mrf.mxu0
  %v379 = vadd.f32 0.0, %v378
  %v380 = vpop.f32.mrf.mxu0
  %v381 = vpop.f32.mrf.mxu0
  %v382 = vadd.f32 0.0, %v381
  %v383 = vpop.f32.mrf.mxu0
  %384 = vmatprep.mubr.bf16.mxu0 %v170
  %385 = vmatmul.mubr.bf16.gmra.mxu0 %v169
  %v386 = vpop.f32.mrf.mxu0
  %v387 = vadd.f32 0.0, %v386
  %v388 = vpop.f32.mrf.mxu0
  %v389 = vpop.f32.mrf.mxu0
  %v390 = vadd.f32 0.0, %v389
  %v391 = vpop.f32.mrf.mxu0
  %392 = vmatprep.mubr.bf16.mxu0 %v173
  %393 = vmatmul.mubr.bf16.gmra.mxu0 %v172
  %v394 = vpop.f32.mrf.mxu0
  %v395 = vadd.f32 0.0, %v394
  %v396 = vpop.f32.mrf.mxu0
  %v397 = vpop.f32.mrf.mxu0
  %v398 = vadd.f32 0.0, %v397
  %v399 = vpop.f32.mrf.mxu0
  %400 = vmatprep.mubr.bf16.mxu0 %v176
  %401 = vmatmul.mubr.bf16.gmra.mxu0 %v175
  %v402 = vpop.f32.mrf.mxu0
  %v403 = vadd.f32 0.0, %v402
  %v404 = vpop.f32.mrf.mxu0
  %v405 = vpop.f32.mrf.mxu0
  %v406 = vadd.f32 0.0, %v405
  %v407 = vpop.f32.mrf.mxu0
  %408 = vmatprep.mubr.bf16.mxu0 %v179
  %409 = vmatmul.mubr.bf16.gmra.mxu0 %v178
  %v410 = vpop.f32.mrf.mxu0
  %v411 = vadd.f32 0.0, %v410
  %v412 = vpop.f32.mrf.mxu0
  %v413 = vpop.f32.mrf.mxu0
  %v414 = vadd.f32 0.0, %v413
  %v415 = vpop.f32.mrf.mxu0
  %416 = vmatprep.mubr.bf16.mxu0 %v182
  %417 = vmatmul.mubr.bf16.gmra.mxu0 %v181
  %v418 = vpop.f32.mrf.mxu0
  %v419 = vadd.f32 0.0, %v418
  %v420 = vpop.f32.mrf.mxu0
  %v421 = vpop.f32.mrf.mxu0
  %v422 = vadd.f32 0.0, %v421
  %v423 = vpop.f32.mrf.mxu0
  %424 = vmatprep.mubr.bf16.mxu0 %v185
  %425 = vmatmul.mubr.bf16.gmra.mxu0 %v184
  %v426 = vpop.f32.mrf.mxu0
  %v427 = vadd.f32 0.0, %v426
  %v428 = vpop.f32.mrf.mxu0
  %v429 = vpop.f32.mrf.mxu0
  %v430 = vadd.f32 0.0, %v429
  %v431 = vpop.f32.mrf.mxu0
  %432 = vdwg.mxu0
  %433 = vmatprep.subr.bf16.mxu0 0
  %434 = vmatpush1.bf16.msra.mxu0 0
  %435 = vmatprep.subr.bf16.mxu0 0
  %436 = vmatpush1.bf16.msra.mxu0 0
  %437 = vmatprep.subr.bf16.mxu0 0
  %438 = vmatpush1.bf16.msra.mxu0 0
  %439 = vmatprep.subr.bf16.mxu0 0
  %440 = vmatpush1.bf16.msra.mxu0 0
  %441 = vmatprep.subr.bf16.mxu0 0
  %442 = vmatpush1.bf16.msra.mxu0 0
  %443 = vmatprep.subr.bf16.mxu0 0
  %444 = vmatpush1.bf16.msra.mxu0 0
  %445 = vmatprep.subr.bf16.mxu0 0
  %446 = vmatpush1.bf16.msra.mxu0 %v292
  %447 = vmatprep.subr.bf16.mxu0 0
  %448 = vmatpush1.bf16.msra.mxu0 %v291
  %449 = vmatprep.subr.bf16.mxu0 0
  %450 = vmatpush2.bf16.msra.mxu0 0
  %451 = vmatprep.subr.bf16.mxu0 0
  %452 = vmatpush2.bf16.msra.mxu0 0
  %453 = vmatprep.subr.bf16.mxu0 0
  %454 = vmatpush2.bf16.msra.mxu0 0
  %455 = vmatprep.subr.bf16.mxu0 0
  %456 = vmatpush2.bf16.msra.mxu0 0
  %457 = vmatprep.subr.bf16.mxu0 0
  %458 = vmatpush2.bf16.msra.mxu0 0
  %459 = vmatprep.subr.bf16.mxu0 0
  %460 = vmatpush2.bf16.msra.mxu0 0
  %461 = vmatprep.subr.bf16.mxu0 0
  %462 = vmatpush2.bf16.msra.mxu0 0
  %463 = vmatprep.subr.bf16.mxu0 0
  %464 = vmatpush2.bf16.msra.mxu0 0
  %465 = vmatprep.mubr.bf16.mxu0 0
  %466 = vmatmul.mubr.bf16.gmra.mxu0 %v313
  %v467 = vpop.f32.mrf.mxu0
  %v468 = vadd.f32 %v371, %v467
  %v469 = vpop.f32.mrf.mxu0
  %v470 = vpop.f32.mrf.mxu0
  %v471 = vadd.f32 %v374, %v470
  %v472 = vpop.f32.mrf.mxu0
  %473 = vmatprep.mubr.bf16.mxu0 0
  %474 = vmatmul.mubr.bf16.gmra.mxu0 %v316
  %v475 = vpop.f32.mrf.mxu0
  %v476 = vadd.f32 %v379, %v475
  %v477 = vpop.f32.mrf.mxu0
  %v478 = vpop.f32.mrf.mxu0
  %v479 = vadd.f32 %v382, %v478
  %v480 = vpop.f32.mrf.mxu0
  %481 = vmatprep.mubr.bf16.mxu0 0
  %482 = vmatmul.mubr.bf16.gmra.mxu0 %v319
  %v483 = vpop.f32.mrf.mxu0
  %v484 = vadd.f32 %v387, %v483
  %v485 = vpop.f32.mrf.mxu0
  %v486 = vpop.f32.mrf.mxu0
  %v487 = vadd.f32 %v390, %v486
  %v488 = vpop.f32.mrf.mxu0
  %489 = vmatprep.mubr.bf16.mxu0 0
  %490 = vmatmul.mubr.bf16.gmra.mxu0 %v322
  %v491 = vpop.f32.mrf.mxu0
  %v492 = vadd.f32 %v395, %v491
  %v493 = vpop.f32.mrf.mxu0
  %v494 = vpop.f32.mrf.mxu0
  %v495 = vadd.f32 %v398, %v494
  %v496 = vpop.f32.mrf.mxu0
  %497 = vmatprep.mubr.bf16.mxu0 0
  %498 = vmatmul.mubr.bf16.gmra.mxu0 %v325
  %v499 = vpop.f32.mrf.mxu0
  %v500 = vadd.f32 %v403, %v499
  %v501 = vpop.f32.mrf.mxu0
  %v502 = vpop.f32.mrf.mxu0
  %v503 = vadd.f32 %v406, %v502
  %v504 = vpop.f32.mrf.mxu0
  %505 = vmatprep.mubr.bf16.mxu0 0
  %506 = vmatmul.mubr.bf16.gmra.mxu0 %v328
  %v507 = vpop.f32.mrf.mxu0
  %v508 = vadd.f32 %v411, %v507
  %v509 = vpop.f32.mrf.mxu0
  %v510 = vpop.f32.mrf.mxu0
  %v511 = vadd.f32 %v414, %v510
  %v512 = vpop.f32.mrf.mxu0
  %513 = vmatprep.mubr.bf16.mxu0 0
  %514 = vmatmul.mubr.bf16.gmra.mxu0 %v331
  %v515 = vpop.f32.mrf.mxu0
  %v516 = vadd.f32 %v419, %v515
  %v517 = vpop.f32.mrf.mxu0
  %v518 = vpop.f32.mrf.mxu0
  %v519 = vadd.f32 %v422, %v518
  %v520 = vpop.f32.mrf.mxu0
  %521 = vmatprep.mubr.bf16.mxu0 0
  %522 = vmatmul.mubr.bf16.gmra.mxu0 %v334
  %v523 = vpop.f32.mrf.mxu0
  %v524 = vadd.f32 %v427, %v523
  %v525 = vpop.f32.mrf.mxu0
  %v526 = vpop.f32.mrf.mxu0
  %v527 = vadd.f32 %v430, %v526
  %v528 = vpop.f32.mrf.mxu0
  %529 = vdwg.mxu0
  %v530 = vmax.f32 %v468, %v484
  %v531 = vmax.f32 %v471, %v487
  %v532 = vmax.f32 %v476, %v492
  %v533 = vmax.f32 %v479, %v495
  %v534 = vmax.f32 %v530, %v500
  %v535 = vmax.f32 %v531, %v503
  %v536 = vmax.f32 %v532, %v508
  %v537 = vmax.f32 %v533, %v511
  %v538 = vmax.f32 %v534, %v516
  %v539 = vmax.f32 %v535, %v519
  %v540 = vmax.f32 %v536, %v524
  %v541 = vmax.f32 %v537, %v527
  %v542 = vld [vmem:[%s2] sm:$0x1]
  %v544 = vlaneseq
  %v545 = vshrl.u32 %v544, 7
  %v546 = vsub.s32 0, %v545
  %v547 = vrot.slane %v542, %v546
  %v549 = vadd.f32 %v538, %v547
  %v550 = vadd.f32 %v539, %v547
  %v551 = vadd.f32 %v540, %v547
  %v552 = vadd.f32 %v541, %v547
  %v553 = vmax.f32 %v549, 0.0
  %v554 = vmax.f32 %v550, 0.0
  %v555 = vmax.f32 %v551, 0.0
  %v556 = vmax.f32 %v552, 0.0
  %vm557 = vcmask 523264
  %558 = vst.msk [vmem:[%s3] sm:$0xff] %vm557, %v553
  %559 = vst.msk [vmem:[%s3 + $0x8] sm:$0xff] %vm557, %v554
  %560 = vst.msk [vmem:[%s3 + $0x10] sm:$0xff] %vm557, %v555
  %561 = vst.msk [vmem:[%s3 + $0x18] sm:$0xff] %vm557, %v556
  // Predicated region
  $region14: #{forward.8} parent=0 // pred_check
    _
  $region15: #{forward.8} parent=0 // pred_check_branch
    %563 = sbr.rel (0) target = $region17
  $region16: #{forward.8} parent=0 // pred_region
    _
  $region17: #{forward.8} parent=0 // pred_fallthru
    _
  // Predicated region
  $region18: #{forward.8} parent=0 // pred_check
    _
  $region19: #{forward.8} parent=0 // pred_check_branch
    %565 = sbr.rel (0) target = $region21
  $region20: #{forward.8} parent=0 // pred_region
    _
  $region21: #{forward.8} parent=0 // pred_fallthru
    _

// kernel: forward.9
$region0: #{forward.9}
  #allocation0 [shape = 'u32[]', space=smem, size = 0x4, offset = 0x4, fixed_abs, tag = 'smem constant byte address 0x4 - core index']
  #allocation1 [shape = 'u32[144,128]{1,0:T(1,128)}', space=vmem, size = 0x12000, scoped, tag = 'internal scratch']
  %s0 = inlined_call_operand.vmem [shape: bf16[4,8,576], index: 0, kind: input, shape index: {}]
  %s1 = inlined_call_operand.vmem [shape: bf16[576,128], index: 1, kind: input, shape index: {}]
  %s2 = inlined_call_operand.vmem [shape: f32[1,128], index: 2, kind: input, shape index: {}]
  %s3 = inlined_call_operand.vmem [shape: f32[8,128], index: 3, kind: output, shape index: {}]
  %s4 = sld [smem:[#allocation0]]
  $region22: #{forward.9} parent=0
    _
  %s6 = ssub.s32 1, %s4
  %s7 = scalar_select 0, %s6, %s4
  // Predicated region
  $region2: #{forward.9} parent=0 // pred_check
    _
  $region3: #{forward.9} parent=0 // pred_check_branch
    %9 = sbr.rel (0) target = $region5
  $region4: #{forward.9} parent=0 // pred_region
    _
  $region5: #{forward.9} parent=0 // pred_fallthru
    _
  // Predicated region
  $region6: #{forward.9} parent=0 // pred_check
    _
  $region7: #{forward.9} parent=0 // pred_check_branch
    %11 = sbr.rel (0) target = $region9
  $region8: #{forward.9} parent=0 // pred_region
    _
  $region9: #{forward.9} parent=0 // pred_fallthru
    _
  // Predicated region
  $region10: #{forward.9} parent=0 // pred_check
    _
  $region11: #{forward.9} parent=0 // pred_check_branch
    %13 = sbr.rel (0) target = $region13
  $region12: #{forward.9} parent=0 // pred_region
    _
  $region13: #{forward.9} parent=0 // pred_fallthru
    _
  %v15 = vld [vmem:[%s1] sm:$0xf]
  %v16 = vld [vmem:[%s1 + $0x4] sm:$0xf]
  %v17 = vld [vmem:[%s1 + $0x8] sm:$0xf]
  %v18 = vld [vmem:[%s1 + $0xc] sm:$0xf]
  %v19 = vld [vmem:[%s1 + $0x10] sm:$0xf]
  %v20 = vld [vmem:[%s1 + $0x14] sm:$0xf]
  %v21 = vld [vmem:[%s1 + $0x18] sm:$0xf]
  %v22 = vld [vmem:[%s1 + $0x1c] sm:$0xf]
  %v23 = vld [vmem:[%s1 + $0x20] sm:$0xf]
  %v24 = vld [vmem:[%s1 + $0x24] sm:$0xf]
  %v25 = vld [vmem:[%s1 + $0x28] sm:$0xf]
  %v26 = vld [vmem:[%s1 + $0x2c] sm:$0xf]
  %v27 = vld [vmem:[%s1 + $0x30] sm:$0xf]
  %v28 = vld [vmem:[%s1 + $0x34] sm:$0xf]
  %v29 = vld [vmem:[%s1 + $0x38] sm:$0xf]
  %v30 = vld [vmem:[%s1 + $0x3c] sm:$0xf]
  %v31 = vld [vmem:[%s1 + $0x40] sm:$0xf]
  %v32 = vld [vmem:[%s1 + $0x44] sm:$0xf]
  %v33 = vld [vmem:[%s1 + $0x48] sm:$0xf]
  %v34 = vld [vmem:[%s1 + $0x4c] sm:$0xf]
  %v35 = vld [vmem:[%s1 + $0x50] sm:$0xf]
  %v36 = vld [vmem:[%s1 + $0x54] sm:$0xf]
  %v37 = vld [vmem:[%s1 + $0x58] sm:$0xf]
  %v38 = vld [vmem:[%s1 + $0x5c] sm:$0xf]
  %v39 = vld [vmem:[%s1 + $0x60] sm:$0xf]
  %v40 = vld [vmem:[%s1 + $0x64] sm:$0xf]
  %v41 = vld [vmem:[%s1 + $0x68] sm:$0xf]
  %v42 = vld [vmem:[%s1 + $0x6c] sm:$0xf]
  %v43 = vld [vmem:[%s1 + $0x70] sm:$0xf]
  %v44 = vld [vmem:[%s1 + $0x74] sm:$0xf]
  %v45 = vld [vmem:[%s1 + $0x78] sm:$0xf]
  %v46 = vld [vmem:[%s1 + $0x7c] sm:$0xf]
  %v47 = vld [vmem:[%s1 + $0x80] sm:$0xf]
  %v48 = vld [vmem:[%s1 + $0x84] sm:$0xf]
  %v49 = vld [vmem:[%s1 + $0x88] sm:$0xf]
  %v50 = vld [vmem:[%s1 + $0x8c] sm:$0xf]
  %v51 = vld [vmem:[%s1 + $0x90] sm:$0xf]
  %v52 = vld [vmem:[%s1 + $0x94] sm:$0xf]
  %v53 = vld [vmem:[%s1 + $0x98] sm:$0xf]
  %v54 = vld [vmem:[%s1 + $0x9c] sm:$0xf]
  %v55 = vld [vmem:[%s1 + $0xa0] sm:$0xf]
  %v56 = vld [vmem:[%s1 + $0xa4] sm:$0xf]
  %v57 = vld [vmem:[%s1 + $0xa8] sm:$0xf]
  %v58 = vld [vmem:[%s1 + $0xac] sm:$0xf]
  %v59 = vld [vmem:[%s1 + $0xb0] sm:$0xf]
  %v60 = vld [vmem:[%s1 + $0xb4] sm:$0xf]
  %v61 = vld [vmem:[%s1 + $0xb8] sm:$0xf]
  %v62 = vld [vmem:[%s1 + $0xbc] sm:$0xf]
  %v63 = vld [vmem:[%s1 + $0xc0] sm:$0xf]
  %v64 = vld [vmem:[%s1 + $0xc4] sm:$0xf]
  %v65 = vld [vmem:[%s1 + $0xc8] sm:$0xf]
  %v66 = vld [vmem:[%s1 + $0xcc] sm:$0xf]
  %v67 = vld [vmem:[%s1 + $0xd0] sm:$0xf]
  %v68 = vld [vmem:[%s1 + $0xd4] sm:$0xf]
  %v69 = vld [vmem:[%s1 + $0xd8] sm:$0xf]
  %v70 = vld [vmem:[%s1 + $0xdc] sm:$0xf]
  %v71 = vld [vmem:[%s1 + $0xe0] sm:$0xf]
  %v72 = vld [vmem:[%s1 + $0xe4] sm:$0xf]
  %v73 = vld [vmem:[%s1 + $0xe8] sm:$0xf]
  %v74 = vld [vmem:[%s1 + $0xec] sm:$0xf]
  %v75 = vld [vmem:[%s1 + $0xf0] sm:$0xf]
  %v76 = vld [vmem:[%s1 + $0xf4] sm:$0xf]
  %v77 = vld [vmem:[%s1 + $0xf8] sm:$0xf]
  %v78 = vld [vmem:[%s1 + $0xfc] sm:$0xf]
  %v79 = vld [vmem:[%s1 + $0x100] sm:$0xf]
  %v80 = vld [vmem:[%s1 + $0x104] sm:$0xf]
  %v81 = vld [vmem:[%s1 + $0x108] sm:$0xf]
  %v82 = vld [vmem:[%s1 + $0x10c] sm:$0xf]
  %v83 = vld [vmem:[%s1 + $0x110] sm:$0xf]
  %v84 = vld [vmem:[%s1 + $0x114] sm:$0xf]
  %v85 = vld [vmem:[%s1 + $0x118] sm:$0xf]
  %v86 = vld [vmem:[%s1 + $0x11c] sm:$0xf]
  %v87 = vld [vmem:[%s0] sm:$0xff]
  %v88 = vld [vmem:[%s0 + $0x8] sm:$0xff]
  %v89 = vld [vmem:[%s0 + $0x10] sm:$0xf]
  %v93 = vunpack.c.l.b16 %v87
  %v94 = vunpack.c.h.b16 %v87
  %v95 = vunpack.c.l.b16 %v88
  %v96 = vunpack.c.h.b16 %v88
  %v97 = vunpack.c.l.b16 %v89
  %v98 = vpack.c.b16 %v93, %v93
  %v99 = vpack.c.b16 %v94, %v94
  %v100 = vpack.c.b16 %v95, %v95
  %v101 = vpack.c.b16 %v96, %v96
  %v102 = vpack.c.b16 %v97, %v97
  %v179 = vunpack.c.l.b16 %v15
  %v180 = vunpack.c.l.b16 %v16
  %v181 = vunpack.c.l.b16 %v17
  %v182 = vunpack.c.l.b16 %v18
  %v183 = vunpack.c.l.b16 %v19
  %v184 = vunpack.c.l.b16 %v20
  %v185 = vunpack.c.l.b16 %v21
  %v186 = vunpack.c.l.b16 %v22
  %v187 = vunpack.c.l.b16 %v23
  %v188 = vunpack.c.l.b16 %v24
  %v189 = vunpack.c.l.b16 %v25
  %v190 = vunpack.c.l.b16 %v26
  %v191 = vunpack.c.l.b16 %v27
  %v192 = vunpack.c.l.b16 %v28
  %v193 = vunpack.c.l.b16 %v29
  %v194 = vunpack.c.l.b16 %v30
  %v195 = vunpack.c.l.b16 %v31
  %v196 = vunpack.c.l.b16 %v32
  %v197 = vunpack.c.l.b16 %v33
  %v198 = vunpack.c.l.b16 %v34
  %v199 = vunpack.c.l.b16 %v35
  %v200 = vunpack.c.l.b16 %v36
  %v201 = vunpack.c.l.b16 %v37
  %v202 = vunpack.c.l.b16 %v38
  %v203 = vunpack.c.l.b16 %v39
  %v204 = vunpack.c.l.b16 %v40
  %v205 = vunpack.c.l.b16 %v41
  %v206 = vunpack.c.l.b16 %v42
  %v207 = vunpack.c.l.b16 %v43
  %v208 = vunpack.c.l.b16 %v44
  %v209 = vunpack.c.l.b16 %v45
  %v210 = vunpack.c.l.b16 %v46
  %v211 = vunpack.c.l.b16 %v47
  %v212 = vunpack.c.l.b16 %v48
  %v213 = vunpack.c.l.b16 %v49
  %v214 = vunpack.c.l.b16 %v50
  %v215 = vunpack.c.l.b16 %v51
  %v216 = vunpack.c.l.b16 %v52
  %v217 = vunpack.c.l.b16 %v53
  %v218 = vunpack.c.l.b16 %v54
  %v219 = vunpack.c.l.b16 %v55
  %v220 = vunpack.c.l.b16 %v56
  %v221 = vunpack.c.l.b16 %v57
  %v222 = vunpack.c.l.b16 %v58
  %v223 = vunpack.c.l.b16 %v59
  %v224 = vunpack.c.l.b16 %v60
  %v225 = vunpack.c.l.b16 %v61
  %v226 = vunpack.c.l.b16 %v62
  %v227 = vunpack.c.l.b16 %v63
  %v228 = vunpack.c.l.b16 %v64
  %v229 = vunpack.c.l.b16 %v65
  %v230 = vunpack.c.l.b16 %v66
  %v231 = vunpack.c.l.b16 %v67
  %v232 = vunpack.c.l.b16 %v68
  %v233 = vunpack.c.l.b16 %v69
  %v234 = vunpack.c.l.b16 %v70
  %v235 = vunpack.c.l.b16 %v71
  %v236 = vunpack.c.l.b16 %v72
  %v237 = vunpack.c.l.b16 %v73
  %v238 = vunpack.c.l.b16 %v74
  %v239 = vunpack.c.l.b16 %v75
  %v240 = vunpack.c.l.b16 %v76
  %v241 = vunpack.c.l.b16 %v77
  %v242 = vunpack.c.l.b16 %v78
  %v243 = vunpack.c.l.b16 %v79
  %v244 = vunpack.c.l.b16 %v80
  %v245 = vunpack.c.l.b16 %v81
  %v246 = vunpack.c.l.b16 %v82
  %v247 = vunpack.c.l.b16 %v83
  %v248 = vunpack.c.l.b16 %v84
  %v249 = vunpack.c.l.b16 %v85
  %v250 = vunpack.c.l.b16 %v86
  %v251 = vpack.c.b16 %v180, %v179
  %v252 = vpack.c.b16 %v182, %v181
  %v253 = vpack.c.b16 %v184, %v183
  %v254 = vpack.c.b16 %v186, %v185
  %v255 = vpack.c.b16 %v188, %v187
  %v256 = vpack.c.b16 %v190, %v189
  %v257 = vpack.c.b16 %v192, %v191
  %v258 = vpack.c.b16 %v194, %v193
  %v259 = vpack.c.b16 %v196, %v195
  %v260 = vpack.c.b16 %v198, %v197
  %v261 = vpack.c.b16 %v200, %v199
  %v262 = vpack.c.b16 %v202, %v201
  %v263 = vpack.c.b16 %v204, %v203
  %v264 = vpack.c.b16 %v206, %v205
  %v265 = vpack.c.b16 %v208, %v207
  %v266 = vpack.c.b16 %v210, %v209
  %v267 = vpack.c.b16 %v212, %v211
  %v268 = vpack.c.b16 %v214, %v213
  %v269 = vpack.c.b16 %v216, %v215
  %v270 = vpack.c.b16 %v218, %v217
  %v271 = vpack.c.b16 %v220, %v219
  %v272 = vpack.c.b16 %v222, %v221
  %v273 = vpack.c.b16 %v224, %v223
  %v274 = vpack.c.b16 %v226, %v225
  %v275 = vpack.c.b16 %v228, %v227
  %v276 = vpack.c.b16 %v230, %v229
  %v277 = vpack.c.b16 %v232, %v231
  %v278 = vpack.c.b16 %v234, %v233
  %v279 = vpack.c.b16 %v236, %v235
  %v280 = vpack.c.b16 %v238, %v237
  %v281 = vpack.c.b16 %v240, %v239
  %v282 = vpack.c.b16 %v242, %v241
  %v283 = vpack.c.b16 %v244, %v243
  %v284 = vpack.c.b16 %v246, %v245
  %v285 = vpack.c.b16 %v248, %v247
  %v286 = vpack.c.b16 %v250, %v249
  %vm323 = vcmask 523264
  %v325 = vsel %vm323, %v102, 0
  %327 = vmatprep.subr.bf16.mxu0 0
  %328 = vmatpush1.bf16.msra.mxu0 %v258
  %329 = vmatprep.subr.bf16.mxu0 0
  %330 = vmatpush1.bf16.msra.mxu0 %v257
  %331 = vmatprep.subr.bf16.mxu0 0
  %332 = vmatpush1.bf16.msra.mxu0 %v256
  %333 = vmatprep.subr.bf16.mxu0 0
  %334 = vmatpush1.bf16.msra.mxu0 %v255
  %335 = vmatprep.subr.bf16.mxu0 0
  %336 = vmatpush1.bf16.msra.mxu0 %v254
  %337 = vmatprep.subr.bf16.mxu0 0
  %338 = vmatpush1.bf16.msra.mxu0 %v253
  %339 = vmatprep.subr.bf16.mxu0 0
  %340 = vmatpush1.bf16.msra.mxu0 %v252
  %341 = vmatprep.subr.bf16.mxu0 0
  %342 = vmatpush1.bf16.msra.mxu0 %v251
  %343 = vmatprep.subr.bf16.mxu0 0
  %344 = vmatpush2.bf16.msra.mxu0 %v266
  %345 = vmatprep.subr.bf16.mxu0 0
  %346 = vmatpush2.bf16.msra.mxu0 %v265
  %347 = vmatprep.subr.bf16.mxu0 0
  %348 = vmatpush2.bf16.msra.mxu0 %v264
  %349 = vmatprep.subr.bf16.mxu0 0
  %350 = vmatpush2.bf16.msra.mxu0 %v263
  %351 = vmatprep.subr.bf16.mxu0 0
  %352 = vmatpush2.bf16.msra.mxu0 %v262
  %353 = vmatprep.subr.bf16.mxu0 0
  %354 = vmatpush2.bf16.msra.mxu0 %v261
  %355 = vmatprep.subr.bf16.mxu0 0
  %356 = vmatpush2.bf16.msra.mxu0 %v260
  %357 = vmatprep.subr.bf16.mxu0 0
  %358 = vmatpush2.bf16.msra.mxu0 %v259
  %359 = vmatprep.mubr.bf16.mxu0 %v99
  %360 = vmatmul.mubr.bf16.gmra.mxu0 %v98
  %v361 = vpop.f32.mrf.mxu0
  %v362 = vadd.f32 0.0, %v361
  %v363 = vpop.f32.mrf.mxu0
  %v364 = vpop.f32.mrf.mxu0
  %v365 = vpop.f32.mrf.mxu0
  %366 = vdwg.mxu0
  %367 = vmatprep.subr.bf16.mxu0 0
  %368 = vmatpush1.bf16.msra.mxu0 %v274
  %369 = vmatprep.subr.bf16.mxu0 0
  %370 = vmatpush1.bf16.msra.mxu0 %v273
  %371 = vmatprep.subr.bf16.mxu0 0
  %372 = vmatpush1.bf16.msra.mxu0 %v272
  %373 = vmatprep.subr.bf16.mxu0 0
  %374 = vmatpush1.bf16.msra.mxu0 %v271
  %375 = vmatprep.subr.bf16.mxu0 0
  %376 = vmatpush1.bf16.msra.mxu0 %v270
  %377 = vmatprep.subr.bf16.mxu0 0
  %378 = vmatpush1.bf16.msra.mxu0 %v269
  %379 = vmatprep.subr.bf16.mxu0 0
  %380 = vmatpush1.bf16.msra.mxu0 %v268
  %381 = vmatprep.subr.bf16.mxu0 0
  %382 = vmatpush1.bf16.msra.mxu0 %v267
  %383 = vmatprep.subr.bf16.mxu0 0
  %384 = vmatpush2.bf16.msra.mxu0 %v282
  %385 = vmatprep.subr.bf16.mxu0 0
  %386 = vmatpush2.bf16.msra.mxu0 %v281
  %387 = vmatprep.subr.bf16.mxu0 0
  %388 = vmatpush2.bf16.msra.mxu0 %v280
  %389 = vmatprep.subr.bf16.mxu0 0
  %390 = vmatpush2.bf16.msra.mxu0 %v279
  %391 = vmatprep.subr.bf16.mxu0 0
  %392 = vmatpush2.bf16.msra.mxu0 %v278
  %393 = vmatprep.subr.bf16.mxu0 0
  %394 = vmatpush2.bf16.msra.mxu0 %v277
  %395 = vmatprep.subr.bf16.mxu0 0
  %396 = vmatpush2.bf16.msra.mxu0 %v276
  %397 = vmatprep.subr.bf16.mxu0 0
  %398 = vmatpush2.bf16.msra.mxu0 %v275
  %399 = vmatprep.mubr.bf16.mxu0 %v101
  %400 = vmatmul.mubr.bf16.gmra.mxu0 %v100
  %v401 = vpop.f32.mrf.mxu0
  %v402 = vadd.f32 %v362, %v401
  %v403 = vpop.f32.mrf.mxu0
  %v404 = vpop.f32.mrf.mxu0
  %v405 = vpop.f32.mrf.mxu0
  %406 = vdwg.mxu0
  %407 = vmatprep.subr.bf16.mxu0 0
  %408 = vmatpush1.bf16.msra.mxu0 0
  %409 = vmatprep.subr.bf16.mxu0 0
  %410 = vmatpush1.bf16.msra.mxu0 0
  %411 = vmatprep.subr.bf16.mxu0 0
  %412 = vmatpush1.bf16.msra.mxu0 0
  %413 = vmatprep.subr.bf16.mxu0 0
  %414 = vmatpush1.bf16.msra.mxu0 0
  %415 = vmatprep.subr.bf16.mxu0 0
  %416 = vmatpush1.bf16.msra.mxu0 %v286
  %417 = vmatprep.subr.bf16.mxu0 0
  %418 = vmatpush1.bf16.msra.mxu0 %v285
  %419 = vmatprep.subr.bf16.mxu0 0
  %420 = vmatpush1.bf16.msra.mxu0 %v284
  %421 = vmatprep.subr.bf16.mxu0 0
  %422 = vmatpush1.bf16.msra.mxu0 %v283
  %423 = vmatprep.subr.bf16.mxu0 0
  %424 = vmatpush2.bf16.msra.mxu0 0
  %425 = vmatprep.subr.bf16.mxu0 0
  %426 = vmatpush2.bf16.msra.mxu0 0
  %427 = vmatprep.subr.bf16.mxu0 0
  %428 = vmatpush2.bf16.msra.mxu0 0
  %429 = vmatprep.subr.bf16.mxu0 0
  %430 = vmatpush2.bf16.msra.mxu0 0
  %431 = vmatprep.subr.bf16.mxu0 0
  %432 = vmatpush2.bf16.msra.mxu0 0
  %433 = vmatprep.subr.bf16.mxu0 0
  %434 = vmatpush2.bf16.msra.mxu0 0
  %435 = vmatprep.subr.bf16.mxu0 0
  %436 = vmatpush2.bf16.msra.mxu0 0
  %437 = vmatprep.subr.bf16.mxu0 0
  %438 = vmatpush2.bf16.msra.mxu0 0
  %439 = vmatprep.mubr.bf16.mxu0 0
  %440 = vmatmul.mubr.bf16.gmra.mxu0 %v325
  %v441 = vpop.f32.mrf.mxu0
  %v442 = vadd.f32 %v402, %v441
  %v443 = vpop.f32.mrf.mxu0
  %v444 = vpop.f32.mrf.mxu0
  %v445 = vpop.f32.mrf.mxu0
  %446 = vdwg.mxu0
  %s447 = scalar_lea.vmem %s0, 20
  %v448 = vld [vmem:[%s447] sm:$0xff]
  %v449 = vld [vmem:[%s447 + $0x8] sm:$0xff]
  %v450 = vld [vmem:[%s447 + $0x10] sm:$0xf]
  %v454 = vunpack.c.l.b16 %v448
  %v455 = vunpack.c.h.b16 %v448
  %v456 = vunpack.c.l.b16 %v449
  %v457 = vunpack.c.h.b16 %v449
  %v458 = vunpack.c.l.b16 %v450
  %v459 = vpack.c.b16 %v454, %v454
  %v460 = vpack.c.b16 %v455, %v455
  %v461 = vpack.c.b16 %v456, %v456
  %v462 = vpack.c.b16 %v457, %v457
  %v463 = vpack.c.b16 %v458, %v458
  %v469 = vsel %vm323, %v463, 0
  %471 = vmatprep.subr.bf16.mxu0 0
  %472 = vmatpush1.bf16.msra.mxu0 %v258
  %473 = vmatprep.subr.bf16.mxu0 0
  %474 = vmatpush1.bf16.msra.mxu0 %v257
  %475 = vmatprep.subr.bf16.mxu0 0
  %476 = vmatpush1.bf16.msra.mxu0 %v256
  %477 = vmatprep.subr.bf16.mxu0 0
  %478 = vmatpush1.bf16.msra.mxu0 %v255
  %479 = vmatprep.subr.bf16.mxu0 0
  %480 = vmatpush1.bf16.msra.mxu0 %v254
  %481 = vmatprep.subr.bf16.mxu0 0
  %482 = vmatpush1.bf16.msra.mxu0 %v253
  %483 = vmatprep.subr.bf16.mxu0 0
  %484 = vmatpush1.bf16.msra.mxu0 %v252
  %485 = vmatprep.subr.bf16.mxu0 0
  %486 = vmatpush1.bf16.msra.mxu0 %v251
  %487 = vmatprep.subr.bf16.mxu0 0
  %488 = vmatpush2.bf16.msra.mxu0 %v266
  %489 = vmatprep.subr.bf16.mxu0 0
  %490 = vmatpush2.bf16.msra.mxu0 %v265
  %491 = vmatprep.subr.bf16.mxu0 0
  %492 = vmatpush2.bf16.msra.mxu0 %v264
  %493 = vmatprep.subr.bf16.mxu0 0
  %494 = vmatpush2.bf16.msra.mxu0 %v263
  %495 = vmatprep.subr.bf16.mxu0 0
  %496 = vmatpush2.bf16.msra.mxu0 %v262
  %497 = vmatprep.subr.bf16.mxu0 0
  %498 = vmatpush2.bf16.msra.mxu0 %v261
  %499 = vmatprep.subr.bf16.mxu0 0
  %500 = vmatpush2.bf16.msra.mxu0 %v260
  %501 = vmatprep.subr.bf16.mxu0 0
  %502 = vmatpush2.bf16.msra.mxu0 %v259
  %503 = vmatprep.mubr.bf16.mxu0 %v460
  %504 = vmatmul.mubr.bf16.gmra.mxu0 %v459
  %v505 = vpop.f32.mrf.mxu0
  %v506 = vadd.f32 0.0, %v505
  %v507 = vpop.f32.mrf.mxu0
  %v508 = vpop.f32.mrf.mxu0
  %v509 = vpop.f32.mrf.mxu0
  %510 = vdwg.mxu0
  %511 = vmatprep.subr.bf16.mxu0 0
  %512 = vmatpush1.bf16.msra.mxu0 %v274
  %513 = vmatprep.subr.bf16.mxu0 0
  %514 = vmatpush1.bf16.msra.mxu0 %v273
  %515 = vmatprep.subr.bf16.mxu0 0
  %516 = vmatpush1.bf16.msra.mxu0 %v272
  %517 = vmatprep.subr.bf16.mxu0 0
  %518 = vmatpush1.bf16.msra.mxu0 %v271
  %519 = vmatprep.subr.bf16.mxu0 0
  %520 = vmatpush1.bf16.msra.mxu0 %v270
  %521 = vmatprep.subr.bf16.mxu0 0
  %522 = vmatpush1.bf16.msra.mxu0 %v269
  %523 = vmatprep.subr.bf16.mxu0 0
  %524 = vmatpush1.bf16.msra.mxu0 %v268
  %525 = vmatprep.subr.bf16.mxu0 0
  %526 = vmatpush1.bf16.msra.mxu0 %v267
  %527 = vmatprep.subr.bf16.mxu0 0
  %528 = vmatpush2.bf16.msra.mxu0 %v282
  %529 = vmatprep.subr.bf16.mxu0 0
  %530 = vmatpush2.bf16.msra.mxu0 %v281
  %531 = vmatprep.subr.bf16.mxu0 0
  %532 = vmatpush2.bf16.msra.mxu0 %v280
  %533 = vmatprep.subr.bf16.mxu0 0
  %534 = vmatpush2.bf16.msra.mxu0 %v279
  %535 = vmatprep.subr.bf16.mxu0 0
  %536 = vmatpush2.bf16.msra.mxu0 %v278
  %537 = vmatprep.subr.bf16.mxu0 0
  %538 = vmatpush2.bf16.msra.mxu0 %v277
  %539 = vmatprep.subr.bf16.mxu0 0
  %540 = vmatpush2.bf16.msra.mxu0 %v276
  %541 = vmatprep.subr.bf16.mxu0 0
  %542 = vmatpush2.bf16.msra.mxu0 %v275
  %543 = vmatprep.mubr.bf16.mxu0 %v462
  %544 = vmatmul.mubr.bf16.gmra.mxu0 %v461
  %v545 = vpop.f32.mrf.mxu0
  %v546 = vadd.f32 %v506, %v545
  %v547 = vpop.f32.mrf.mxu0
  %v548 = vpop.f32.mrf.mxu0
  %v549 = vpop.f32.mrf.mxu0
  %550 = vdwg.mxu0
  %551 = vmatprep.subr.bf16.mxu0 0
  %552 = vmatpush1.bf16.msra.mxu0 0
  %553 = vmatprep.subr.bf16.mxu0 0
  %554 = vmatpush1.bf16.msra.mxu0 0
  %555 = vmatprep.subr.bf16.mxu0 0
  %556 = vmatpush1.bf16.msra.mxu0 0
  %557 = vmatprep.subr.bf16.mxu0 0
  %558 = vmatpush1.bf16.msra.mxu0 0
  %559 = vmatprep.subr.bf16.mxu0 0
  %560 = vmatpush1.bf16.msra.mxu0 %v286
  %561 = vmatprep.subr.bf16.mxu0 0
  %562 = vmatpush1.bf16.msra.mxu0 %v285
  %563 = vmatprep.subr.bf16.mxu0 0
  %564 = vmatpush1.bf16.msra.mxu0 %v284
  %565 = vmatprep.subr.bf16.mxu0 0
  %566 = vmatpush1.bf16.msra.mxu0 %v283
  %567 = vmatprep.subr.bf16.mxu0 0
  %568 = vmatpush2.bf16.msra.mxu0 0
  %569 = vmatprep.subr.bf16.mxu0 0
  %570 = vmatpush2.bf16.msra.mxu0 0
  %571 = vmatprep.subr.bf16.mxu0 0
  %572 = vmatpush2.bf16.msra.mxu0 0
  %573 = vmatprep.subr.bf16.mxu0 0
  %574 = vmatpush2.bf16.msra.mxu0 0
  %575 = vmatprep.subr.bf16.mxu0 0
  %576 = vmatpush2.bf16.msra.mxu0 0
  %577 = vmatprep.subr.bf16.mxu0 0
  %578 = vmatpush2.bf16.msra.mxu0 0
  %579 = vmatprep.subr.bf16.mxu0 0
  %580 = vmatpush2.bf16.msra.mxu0 0
  %581 = vmatprep.subr.bf16.mxu0 0
  %582 = vmatpush2.bf16.msra.mxu0 0
  %583 = vmatprep.mubr.bf16.mxu0 0
  %584 = vmatmul.mubr.bf16.gmra.mxu0 %v469
  %v585 = vpop.f32.mrf.mxu0
  %v586 = vadd.f32 %v546, %v585
  %v587 = vpop.f32.mrf.mxu0
  %v588 = vpop.f32.mrf.mxu0
  %v589 = vpop.f32.mrf.mxu0
  %590 = vdwg.mxu0
  %s591 = scalar_lea.vmem %s0, 40
  %v592 = vld [vmem:[%s591] sm:$0xff]
  %v593 = vld [vmem:[%s591 + $0x8] sm:$0xff]
  %v594 = vld [vmem:[%s591 + $0x10] sm:$0xf]
  %v598 = vunpack.c.l.b16 %v592
  %v599 = vunpack.c.h.b16 %v592
  %v600 = vunpack.c.l.b16 %v593
  %v601 = vunpack.c.h.b16 %v593
  %v602 = vunpack.c.l.b16 %v594
  %v603 = vpack.c.b16 %v598, %v598
  %v604 = vpack.c.b16 %v599, %v599
  %v605 = vpack.c.b16 %v600, %v600
  %v606 = vpack.c.b16 %v601, %v601
  %v607 = vpack.c.b16 %v602, %v602
  %v613 = vsel %vm323, %v607, 0
  %615 = vmatprep.subr.bf16.mxu0 0
  %616 = vmatpush1.bf16.msra.mxu0 %v258
  %617 = vmatprep.subr.bf16.mxu0 0
  %618 = vmatpush1.bf16.msra.mxu0 %v257
  %619 = vmatprep.subr.bf16.mxu0 0
  %620 = vmatpush1.bf16.msra.mxu0 %v256
  %621 = vmatprep.subr.bf16.mxu0 0
  %622 = vmatpush1.bf16.msra.mxu0 %v255
  %623 = vmatprep.subr.bf16.mxu0 0
  %624 = vmatpush1.bf16.msra.mxu0 %v254
  %625 = vmatprep.subr.bf16.mxu0 0
  %626 = vmatpush1.bf16.msra.mxu0 %v253
  %627 = vmatprep.subr.bf16.mxu0 0
  %628 = vmatpush1.bf16.msra.mxu0 %v252
  %629 = vmatprep.subr.bf16.mxu0 0
  %630 = vmatpush1.bf16.msra.mxu0 %v251
  %631 = vmatprep.subr.bf16.mxu0 0
  %632 = vmatpush2.bf16.msra.mxu0 %v266
  %633 = vmatprep.subr.bf16.mxu0 0
  %634 = vmatpush2.bf16.msra.mxu0 %v265
  %635 = vmatprep.subr.bf16.mxu0 0
  %636 = vmatpush2.bf16.msra.mxu0 %v264
  %637 = vmatprep.subr.bf16.mxu0 0
  %638 = vmatpush2.bf16.msra.mxu0 %v263
  %639 = vmatprep.subr.bf16.mxu0 0
  %640 = vmatpush2.bf16.msra.mxu0 %v262
  %641 = vmatprep.subr.bf16.mxu0 0
  %642 = vmatpush2.bf16.msra.mxu0 %v261
  %643 = vmatprep.subr.bf16.mxu0 0
  %644 = vmatpush2.bf16.msra.mxu0 %v260
  %645 = vmatprep.subr.bf16.mxu0 0
  %646 = vmatpush2.bf16.msra.mxu0 %v259
  %647 = vmatprep.mubr.bf16.mxu0 %v604
  %648 = vmatmul.mubr.bf16.gmra.mxu0 %v603
  %v649 = vpop.f32.mrf.mxu0
  %v650 = vadd.f32 0.0, %v649
  %v651 = vpop.f32.mrf.mxu0
  %v652 = vpop.f32.mrf.mxu0
  %v653 = vpop.f32.mrf.mxu0
  %654 = vdwg.mxu0
  %655 = vmatprep.subr.bf16.mxu0 0
  %656 = vmatpush1.bf16.msra.mxu0 %v274
  %657 = vmatprep.subr.bf16.mxu0 0
  %658 = vmatpush1.bf16.msra.mxu0 %v273
  %659 = vmatprep.subr.bf16.mxu0 0
  %660 = vmatpush1.bf16.msra.mxu0 %v272
  %661 = vmatprep.subr.bf16.mxu0 0
  %662 = vmatpush1.bf16.msra.mxu0 %v271
  %663 = vmatprep.subr.bf16.mxu0 0
  %664 = vmatpush1.bf16.msra.mxu0 %v270
  %665 = vmatprep.subr.bf16.mxu0 0
  %666 = vmatpush1.bf16.msra.mxu0 %v269
  %667 = vmatprep.subr.bf16.mxu0 0
  %668 = vmatpush1.bf16.msra.mxu0 %v268
  %669 = vmatprep.subr.bf16.mxu0 0
  %670 = vmatpush1.bf16.msra.mxu0 %v267
  %671 = vmatprep.subr.bf16.mxu0 0
  %672 = vmatpush2.bf16.msra.mxu0 %v282
  %673 = vmatprep.subr.bf16.mxu0 0
  %674 = vmatpush2.bf16.msra.mxu0 %v281
  %675 = vmatprep.subr.bf16.mxu0 0
  %676 = vmatpush2.bf16.msra.mxu0 %v280
  %677 = vmatprep.subr.bf16.mxu0 0
  %678 = vmatpush2.bf16.msra.mxu0 %v279
  %679 = vmatprep.subr.bf16.mxu0 0
  %680 = vmatpush2.bf16.msra.mxu0 %v278
  %681 = vmatprep.subr.bf16.mxu0 0
  %682 = vmatpush2.bf16.msra.mxu0 %v277
  %683 = vmatprep.subr.bf16.mxu0 0
  %684 = vmatpush2.bf16.msra.mxu0 %v276
  %685 = vmatprep.subr.bf16.mxu0 0
  %686 = vmatpush2.bf16.msra.mxu0 %v275
  %687 = vmatprep.mubr.bf16.mxu0 %v606
  %688 = vmatmul.mubr.bf16.gmra.mxu0 %v605
  %v689 = vpop.f32.mrf.mxu0
  %v690 = vadd.f32 %v650, %v689
  %v691 = vpop.f32.mrf.mxu0
  %v692 = vpop.f32.mrf.mxu0
  %v693 = vpop.f32.mrf.mxu0
  %694 = vdwg.mxu0
  %695 = vmatprep.subr.bf16.mxu0 0
  %696 = vmatpush1.bf16.msra.mxu0 0
  %697 = vmatprep.subr.bf16.mxu0 0
  %698 = vmatpush1.bf16.msra.mxu0 0
  %699 = vmatprep.subr.bf16.mxu0 0
  %700 = vmatpush1.bf16.msra.mxu0 0
  %701 = vmatprep.subr.bf16.mxu0 0
  %702 = vmatpush1.bf16.msra.mxu0 0
  %703 = vmatprep.subr.bf16.mxu0 0
  %704 = vmatpush1.bf16.msra.mxu0 %v286
  %705 = vmatprep.subr.bf16.mxu0 0
  %706 = vmatpush1.bf16.msra.mxu0 %v285
  %707 = vmatprep.subr.bf16.mxu0 0
  %708 = vmatpush1.bf16.msra.mxu0 %v284
  %709 = vmatprep.subr.bf16.mxu0 0
  %710 = vmatpush1.bf16.msra.mxu0 %v283
  %711 = vmatprep.subr.bf16.mxu0 0
  %712 = vmatpush2.bf16.msra.mxu0 0
  %713 = vmatprep.subr.bf16.mxu0 0
  %714 = vmatpush2.bf16.msra.mxu0 0
  %715 = vmatprep.subr.bf16.mxu0 0
  %716 = vmatpush2.bf16.msra.mxu0 0
  %717 = vmatprep.subr.bf16.mxu0 0
  %718 = vmatpush2.bf16.msra.mxu0 0
  %719 = vmatprep.subr.bf16.mxu0 0
  %720 = vmatpush2.bf16.msra.mxu0 0
  %721 = vmatprep.subr.bf16.mxu0 0
  %722 = vmatpush2.bf16.msra.mxu0 0
  %723 = vmatprep.subr.bf16.mxu0 0
  %724 = vmatpush2.bf16.msra.mxu0 0
  %725 = vmatprep.subr.bf16.mxu0 0
  %726 = vmatpush2.bf16.msra.mxu0 0
  %727 = vmatprep.mubr.bf16.mxu0 0
  %728 = vmatmul.mubr.bf16.gmra.mxu0 %v613
  %v729 = vpop.f32.mrf.mxu0
  %v730 = vadd.f32 %v690, %v729
  %v731 = vpop.f32.mrf.mxu0
  %v732 = vpop.f32.mrf.mxu0
  %v733 = vpop.f32.mrf.mxu0
  %734 = vdwg.mxu0
  %s735 = scalar_lea.vmem %s0, 60
  %v736 = vld [vmem:[%s735] sm:$0xff]
  %v737 = vld [vmem:[%s735 + $0x8] sm:$0xff]
  %v738 = vld [vmem:[%s735 + $0x10] sm:$0xf]
  %v742 = vunpack.c.l.b16 %v736
  %v743 = vunpack.c.h.b16 %v736
  %v744 = vunpack.c.l.b16 %v737
  %v745 = vunpack.c.h.b16 %v737
  %v746 = vunpack.c.l.b16 %v738
  %v747 = vpack.c.b16 %v742, %v742
  %v748 = vpack.c.b16 %v743, %v743
  %v749 = vpack.c.b16 %v744, %v744
  %v750 = vpack.c.b16 %v745, %v745
  %v751 = vpack.c.b16 %v746, %v746
  %v757 = vsel %vm323, %v751, 0
  %759 = vmatprep.subr.bf16.mxu0 0
  %760 = vmatpush1.bf16.msra.mxu0 %v258
  %761 = vmatprep.subr.bf16.mxu0 0
  %762 = vmatpush1.bf16.msra.mxu0 %v257
  %763 = vmatprep.subr.bf16.mxu0 0
  %764 = vmatpush1.bf16.msra.mxu0 %v256
  %765 = vmatprep.subr.bf16.mxu0 0
  %766 = vmatpush1.bf16.msra.mxu0 %v255
  %767 = vmatprep.subr.bf16.mxu0 0
  %768 = vmatpush1.bf16.msra.mxu0 %v254
  %769 = vmatprep.subr.bf16.mxu0 0
  %770 = vmatpush1.bf16.msra.mxu0 %v253
  %771 = vmatprep.subr.bf16.mxu0 0
  %772 = vmatpush1.bf16.msra.mxu0 %v252
  %773 = vmatprep.subr.bf16.mxu0 0
  %774 = vmatpush1.bf16.msra.mxu0 %v251
  %775 = vmatprep.subr.bf16.mxu0 0
  %776 = vmatpush2.bf16.msra.mxu0 %v266
  %777 = vmatprep.subr.bf16.mxu0 0
  %778 = vmatpush2.bf16.msra.mxu0 %v265
  %779 = vmatprep.subr.bf16.mxu0 0
  %780 = vmatpush2.bf16.msra.mxu0 %v264
  %781 = vmatprep.subr.bf16.mxu0 0
  %782 = vmatpush2.bf16.msra.mxu0 %v263
  %783 = vmatprep.subr.bf16.mxu0 0
  %784 = vmatpush2.bf16.msra.mxu0 %v262
  %785 = vmatprep.subr.bf16.mxu0 0
  %786 = vmatpush2.bf16.msra.mxu0 %v261
  %787 = vmatprep.subr.bf16.mxu0 0
  %788 = vmatpush2.bf16.msra.mxu0 %v260
  %789 = vmatprep.subr.bf16.mxu0 0
  %790 = vmatpush2.bf16.msra.mxu0 %v259
  %791 = vmatprep.mubr.bf16.mxu0 %v748
  %792 = vmatmul.mubr.bf16.gmra.mxu0 %v747
  %v793 = vpop.f32.mrf.mxu0
  %v794 = vadd.f32 0.0, %v793
  %v795 = vpop.f32.mrf.mxu0
  %v796 = vpop.f32.mrf.mxu0
  %v797 = vpop.f32.mrf.mxu0
  %798 = vdwg.mxu0
  %799 = vmatprep.subr.bf16.mxu0 0
  %800 = vmatpush1.bf16.msra.mxu0 %v274
  %801 = vmatprep.subr.bf16.mxu0 0
  %802 = vmatpush1.bf16.msra.mxu0 %v273
  %803 = vmatprep.subr.bf16.mxu0 0
  %804 = vmatpush1.bf16.msra.mxu0 %v272
  %805 = vmatprep.subr.bf16.mxu0 0
  %806 = vmatpush1.bf16.msra.mxu0 %v271
  %807 = vmatprep.subr.bf16.mxu0 0
  %808 = vmatpush1.bf16.msra.mxu0 %v270
  %809 = vmatprep.subr.bf16.mxu0 0
  %810 = vmatpush1.bf16.msra.mxu0 %v269
  %811 = vmatprep.subr.bf16.mxu0 0
  %812 = vmatpush1.bf16.msra.mxu0 %v268
  %813 = vmatprep.subr.bf16.mxu0 0
  %814 = vmatpush1.bf16.msra.mxu0 %v267
  %815 = vmatprep.subr.bf16.mxu0 0
  %816 = vmatpush2.bf16.msra.mxu0 %v282
  %817 = vmatprep.subr.bf16.mxu0 0
  %818 = vmatpush2.bf16.msra.mxu0 %v281
  %819 = vmatprep.subr.bf16.mxu0 0
  %820 = vmatpush2.bf16.msra.mxu0 %v280
  %821 = vmatprep.subr.bf16.mxu0 0
  %822 = vmatpush2.bf16.msra.mxu0 %v279
  %823 = vmatprep.subr.bf16.mxu0 0
  %824 = vmatpush2.bf16.msra.mxu0 %v278
  %825 = vmatprep.subr.bf16.mxu0 0
  %826 = vmatpush2.bf16.msra.mxu0 %v277
  %827 = vmatprep.subr.bf16.mxu0 0
  %828 = vmatpush2.bf16.msra.mxu0 %v276
  %829 = vmatprep.subr.bf16.mxu0 0
  %830 = vmatpush2.bf16.msra.mxu0 %v275
  %831 = vmatprep.mubr.bf16.mxu0 %v750
  %832 = vmatmul.mubr.bf16.gmra.mxu0 %v749
  %v833 = vpop.f32.mrf.mxu0
  %v834 = vadd.f32 %v794, %v833
  %v835 = vpop.f32.mrf.mxu0
  %v836 = vpop.f32.mrf.mxu0
  %v837 = vpop.f32.mrf.mxu0
  %838 = vdwg.mxu0
  %839 = vmatprep.subr.bf16.mxu0 0
  %840 = vmatpush1.bf16.msra.mxu0 0
  %841 = vmatprep.subr.bf16.mxu0 0
  %842 = vmatpush1.bf16.msra.mxu0 0
  %843 = vmatprep.subr.bf16.mxu0 0
  %844 = vmatpush1.bf16.msra.mxu0 0
  %845 = vmatprep.subr.bf16.mxu0 0
  %846 = vmatpush1.bf16.msra.mxu0 0
  %847 = vmatprep.subr.bf16.mxu0 0
  %848 = vmatpush1.bf16.msra.mxu0 %v286
  %849 = vmatprep.subr.bf16.mxu0 0
  %850 = vmatpush1.bf16.msra.mxu0 %v285
  %851 = vmatprep.subr.bf16.mxu0 0
  %852 = vmatpush1.bf16.msra.mxu0 %v284
  %853 = vmatprep.subr.bf16.mxu0 0
  %854 = vmatpush1.bf16.msra.mxu0 %v283
  %855 = vmatprep.subr.bf16.mxu0 0
  %856 = vmatpush2.bf16.msra.mxu0 0
  %857 = vmatprep.subr.bf16.mxu0 0
  %858 = vmatpush2.bf16.msra.mxu0 0
  %859 = vmatprep.subr.bf16.mxu0 0
  %860 = vmatpush2.bf16.msra.mxu0 0
  %861 = vmatprep.subr.bf16.mxu0 0
  %862 = vmatpush2.bf16.msra.mxu0 0
  %863 = vmatprep.subr.bf16.mxu0 0
  %864 = vmatpush2.bf16.msra.mxu0 0
  %865 = vmatprep.subr.bf16.mxu0 0
  %866 = vmatpush2.bf16.msra.mxu0 0
  %867 = vmatprep.subr.bf16.mxu0 0
  %868 = vmatpush2.bf16.msra.mxu0 0
  %869 = vmatprep.subr.bf16.mxu0 0
  %870 = vmatpush2.bf16.msra.mxu0 0
  %871 = vmatprep.mubr.bf16.mxu0 0
  %872 = vmatmul.mubr.bf16.gmra.mxu0 %v757
  %v873 = vpop.f32.mrf.mxu0
  %v874 = vadd.f32 %v834, %v873
  %v875 = vpop.f32.mrf.mxu0
  %v876 = vpop.f32.mrf.mxu0
  %v877 = vpop.f32.mrf.mxu0
  %878 = vdwg.mxu0
  %v879 = vmax.f32 %v442, %v586
  %v880 = vmax.f32 %v879, %v730
  %v881 = vmax.f32 %v880, %v874
  %v882 = vld [vmem:[%s2] sm:$0x1]
  %v884 = vlaneseq
  %v885 = vshrl.u32 %v884, 7
  %v886 = vsub.s32 0, %v885
  %v887 = vrot.slane %v882, %v886
  %v889 = vadd.f32 %v881, %v887
  %v890 = vmax.f32 %v889, 0.0
  %891 = vst [vmem:[%s3] sm:$0xff] %v890
  // Predicated region
  $region14: #{forward.9} parent=0 // pred_check
    _
  $region15: #{forward.9} parent=0 // pred_check_branch
    %893 = sbr.rel (0) target = $region17
  $region16: #{forward.9} parent=0 // pred_region
    _
  $region17: #{forward.9} parent=0 // pred_fallthru
    _
  // Predicated region
  $region18: #{forward.9} parent=0 // pred_check
    _
  $region19: #{forward.9} parent=0 // pred_check_branch
    %895 = sbr.rel (0) target = $region21
  $region20: #{forward.9} parent=0 // pred_region
    _
  $region21: #{forward.9} parent=0 // pred_fallthru
    _

// kernel: forward.10
$region0: #{forward.10}
  #allocation0 [shape = 'u32[]', space=smem, size = 0x4, offset = 0x4, fixed_abs, tag = 'smem constant byte address 0x4 - core index']
  #allocation1 [shape = 'u32[144,128]{1,0:T(1,128)}', space=vmem, size = 0x12000, scoped, tag = 'internal scratch']
  %s0 = inlined_call_operand.vmem [shape: bf16[4,2,1152], index: 0, kind: input, shape index: {}]
  %s1 = inlined_call_operand.vmem [shape: bf16[1152,256], index: 1, kind: input, shape index: {}]
  %s2 = inlined_call_operand.vmem [shape: f32[1,256], index: 2, kind: input, shape index: {}]
  %s3 = inlined_call_operand.vmem [shape: f32[2,256], index: 3, kind: output, shape index: {}]
  %s4 = sld [smem:[#allocation0]]
  $region22: #{forward.10} parent=0
    _
  %s6 = ssub.s32 1, %s4
  %s7 = scalar_select 0, %s6, %s4
  // Predicated region
  $region2: #{forward.10} parent=0 // pred_check
    _
  $region3: #{forward.10} parent=0 // pred_check_branch
    %9 = sbr.rel (0) target = $region5
  $region4: #{forward.10} parent=0 // pred_region
    _
  $region5: #{forward.10} parent=0 // pred_fallthru
    _
  // Predicated region
  $region6: #{forward.10} parent=0 // pred_check
    _
  $region7: #{forward.10} parent=0 // pred_check_branch
    %11 = sbr.rel (0) target = $region9
  $region8: #{forward.10} parent=0 // pred_region
    _
  $region9: #{forward.10} parent=0 // pred_fallthru
    _
  // Predicated region
  $region10: #{forward.10} parent=0 // pred_check
    _
  $region11: #{forward.10} parent=0 // pred_check_branch
    %13 = sbr.rel (0) target = $region13
  $region12: #{forward.10} parent=0 // pred_region
    _
  $region13: #{forward.10} parent=0 // pred_fallthru
    _
  %v15 = vld [vmem:[%s1] sm:$0xff]
  %v16 = vld [vmem:[%s1 + $0x8] sm:$0xff]
  %v17 = vld [vmem:[%s1 + $0x10] sm:$0xff]
  %v18 = vld [vmem:[%s1 + $0x18] sm:$0xff]
  %v19 = vld [vmem:[%s1 + $0x20] sm:$0xff]
  %v20 = vld [vmem:[%s1 + $0x28] sm:$0xff]
  %v21 = vld [vmem:[%s1 + $0x30] sm:$0xff]
  %v22 = vld [vmem:[%s1 + $0x38] sm:$0xff]
  %v23 = vld [vmem:[%s1 + $0x40] sm:$0xff]
  %v24 = vld [vmem:[%s1 + $0x48] sm:$0xff]
  %v25 = vld [vmem:[%s1 + $0x50] sm:$0xff]
  %v26 = vld [vmem:[%s1 + $0x58] sm:$0xff]
  %v27 = vld [vmem:[%s1 + $0x60] sm:$0xff]
  %v28 = vld [vmem:[%s1 + $0x68] sm:$0xff]
  %v29 = vld [vmem:[%s1 + $0x70] sm:$0xff]
  %v30 = vld [vmem:[%s1 + $0x78] sm:$0xff]
  %v31 = vld [vmem:[%s1 + $0x80] sm:$0xff]
  %v32 = vld [vmem:[%s1 + $0x88] sm:$0xff]
  %v33 = vld [vmem:[%s1 + $0x90] sm:$0xff]
  %v34 = vld [vmem:[%s1 + $0x98] sm:$0xff]
  %v35 = vld [vmem:[%s1 + $0xa0] sm:$0xff]
  %v36 = vld [vmem:[%s1 + $0xa8] sm:$0xff]
  %v37 = vld [vmem:[%s1 + $0xb0] sm:$0xff]
  %v38 = vld [vmem:[%s1 + $0xb8] sm:$0xff]
  %v39 = vld [vmem:[%s1 + $0xc0] sm:$0xff]
  %v40 = vld [vmem:[%s1 + $0xc8] sm:$0xff]
  %v41 = vld [vmem:[%s1 + $0xd0] sm:$0xff]
  %v42 = vld [vmem:[%s1 + $0xd8] sm:$0xff]
  %v43 = vld [vmem:[%s1 + $0xe0] sm:$0xff]
  %v44 = vld [vmem:[%s1 + $0xe8] sm:$0xff]
  %v45 = vld [vmem:[%s1 + $0xf0] sm:$0xff]
  %v46 = vld [vmem:[%s1 + $0xf8] sm:$0xff]
  %v47 = vld [vmem:[%s1 + $0x100] sm:$0xff]
  %v48 = vld [vmem:[%s1 + $0x108] sm:$0xff]
  %v49 = vld [vmem:[%s1 + $0x110] sm:$0xff]
  %v50 = vld [vmem:[%s1 + $0x118] sm:$0xff]
  %v51 = vld [vmem:[%s1 + $0x120] sm:$0xff]
  %v52 = vld [vmem:[%s1 + $0x128] sm:$0xff]
  %v53 = vld [vmem:[%s1 + $0x130] sm:$0xff]
  %v54 = vld [vmem:[%s1 + $0x138] sm:$0xff]
  %v55 = vld [vmem:[%s1 + $0x140] sm:$0xff]
  %v56 = vld [vmem:[%s1 + $0x148] sm:$0xff]
  %v57 = vld [vmem:[%s1 + $0x150] sm:$0xff]
  %v58 = vld [vmem:[%s1 + $0x158] sm:$0xff]
  %v59 = vld [vmem:[%s1 + $0x160] sm:$0xff]
  %v60 = vld [vmem:[%s1 + $0x168] sm:$0xff]
  %v61 = vld [vmem:[%s1 + $0x170] sm:$0xff]
  %v62 = vld [vmem:[%s1 + $0x178] sm:$0xff]
  %v63 = vld [vmem:[%s1 + $0x180] sm:$0xff]
  %v64 = vld [vmem:[%s1 + $0x188] sm:$0xff]
  %v65 = vld [vmem:[%s1 + $0x190] sm:$0xff]
  %v66 = vld [vmem:[%s1 + $0x198] sm:$0xff]
  %v67 = vld [vmem:[%s1 + $0x1a0] sm:$0xff]
  %v68 = vld [vmem:[%s1 + $0x1a8] sm:$0xff]
  %v69 = vld [vmem:[%s1 + $0x1b0] sm:$0xff]
  %v70 = vld [vmem:[%s1 + $0x1b8] sm:$0xff]
  %v71 = vld [vmem:[%s1 + $0x1c0] sm:$0xff]
  %v72 = vld [vmem:[%s1 + $0x1c8] sm:$0xff]
  %v73 = vld [vmem:[%s1 + $0x1d0] sm:$0xff]
  %v74 = vld [vmem:[%s1 + $0x1d8] sm:$0xff]
  %v75 = vld [vmem:[%s1 + $0x1e0] sm:$0xff]
  %v76 = vld [vmem:[%s1 + $0x1e8] sm:$0xff]
  %v77 = vld [vmem:[%s1 + $0x1f0] sm:$0xff]
  %v78 = vld [vmem:[%s1 + $0x1f8] sm:$0xff]
  %v79 = vld [vmem:[%s1 + $0x200] sm:$0xff]
  %v80 = vld [vmem:[%s1 + $0x208] sm:$0xff]
  %v81 = vld [vmem:[%s1 + $0x210] sm:$0xff]
  %v82 = vld [vmem:[%s1 + $0x218] sm:$0xff]
  %v83 = vld [vmem:[%s1 + $0x220] sm:$0xff]
  %v84 = vld [vmem:[%s1 + $0x228] sm:$0xff]
  %v85 = vld [vmem:[%s1 + $0x230] sm:$0xff]
  %v86 = vld [vmem:[%s1 + $0x238] sm:$0xff]
  %v87 = vld [vmem:[%s1 + $0x240] sm:$0xff]
  %v88 = vld [vmem:[%s1 + $0x248] sm:$0xff]
  %v89 = vld [vmem:[%s1 + $0x250] sm:$0xff]
  %v90 = vld [vmem:[%s1 + $0x258] sm:$0xff]
  %v91 = vld [vmem:[%s1 + $0x260] sm:$0xff]
  %v92 = vld [vmem:[%s1 + $0x268] sm:$0xff]
  %v93 = vld [vmem:[%s1 + $0x270] sm:$0xff]
  %v94 = vld [vmem:[%s1 + $0x278] sm:$0xff]
  %v95 = vld [vmem:[%s1 + $0x280] sm:$0xff]
  %v96 = vld [vmem:[%s1 + $0x288] sm:$0xff]
  %v97 = vld [vmem:[%s1 + $0x290] sm:$0xff]
  %v98 = vld [vmem:[%s1 + $0x298] sm:$0xff]
  %v99 = vld [vmem:[%s1 + $0x2a0] sm:$0xff]
  %v100 = vld [vmem:[%s1 + $0x2a8] sm:$0xff]
  %v101 = vld [vmem:[%s1 + $0x2b0] sm:$0xff]
  %v102 = vld [vmem:[%s1 + $0x2b8] sm:$0xff]
  %v103 = vld [vmem:[%s1 + $0x2c0] sm:$0xff]
  %v104 = vld [vmem:[%s1 + $0x2c8] sm:$0xff]
  %v105 = vld [vmem:[%s1 + $0x2d0] sm:$0xff]
  %v106 = vld [vmem:[%s1 + $0x2d8] sm:$0xff]
  %v107 = vld [vmem:[%s1 + $0x2e0] sm:$0xff]
  %v108 = vld [vmem:[%s1 + $0x2e8] sm:$0xff]
  %v109 = vld [vmem:[%s1 + $0x2f0] sm:$0xff]
  %v110 = vld [vmem:[%s1 + $0x2f8] sm:$0xff]
  %v111 = vld [vmem:[%s1 + $0x300] sm:$0xff]
  %v112 = vld [vmem:[%s1 + $0x308] sm:$0xff]
  %v113 = vld [vmem:[%s1 + $0x310] sm:$0xff]
  %v114 = vld [vmem:[%s1 + $0x318] sm:$0xff]
  %v115 = vld [vmem:[%s1 + $0x320] sm:$0xff]
  %v116 = vld [vmem:[%s1 + $0x328] sm:$0xff]
  %v117 = vld [vmem:[%s1 + $0x330] sm:$0xff]
  %v118 = vld [vmem:[%s1 + $0x338] sm:$0xff]
  %v119 = vld [vmem:[%s1 + $0x340] sm:$0xff]
  %v120 = vld [vmem:[%s1 + $0x348] sm:$0xff]
  %v121 = vld [vmem:[%s1 + $0x350] sm:$0xff]
  %v122 = vld [vmem:[%s1 + $0x358] sm:$0xff]
  %v123 = vld [vmem:[%s1 + $0x360] sm:$0xff]
  %v124 = vld [vmem:[%s1 + $0x368] sm:$0xff]
  %v125 = vld [vmem:[%s1 + $0x370] sm:$0xff]
  %v126 = vld [vmem:[%s1 + $0x378] sm:$0xff]
  %v127 = vld [vmem:[%s1 + $0x380] sm:$0xff]
  %v128 = vld [vmem:[%s1 + $0x388] sm:$0xff]
  %v129 = vld [vmem:[%s1 + $0x390] sm:$0xff]
  %v130 = vld [vmem:[%s1 + $0x398] sm:$0xff]
  %v131 = vld [vmem:[%s1 + $0x3a0] sm:$0xff]
  %v132 = vld [vmem:[%s1 + $0x3a8] sm:$0xff]
  %v133 = vld [vmem:[%s1 + $0x3b0] sm:$0xff]
  %v134 = vld [vmem:[%s1 + $0x3b8] sm:$0xff]
  %v135 = vld [vmem:[%s1 + $0x3c0] sm:$0xff]
  %v136 = vld [vmem:[%s1 + $0x3c8] sm:$0xff]
  %v137 = vld [vmem:[%s1 + $0x3d0] sm:$0xff]
  %v138 = vld [vmem:[%s1 + $0x3d8] sm:$0xff]
  %v139 = vld [vmem:[%s1 + $0x3e0] sm:$0xff]
  %v140 = vld [vmem:[%s1 + $0x3e8] sm:$0xff]
  %v141 = vld [vmem:[%s1 + $0x3f0] sm:$0xff]
  %v142 = vld [vmem:[%s1 + $0x3f8] sm:$0xff]
  %v143 = vld [vmem:[%s1 + $0x400] sm:$0xff]
  %v144 = vld [vmem:[%s1 + $0x408] sm:$0xff]
  %v145 = vld [vmem:[%s1 + $0x410] sm:$0xff]
  %v146 = vld [vmem:[%s1 + $0x418] sm:$0xff]
  %v147 = vld [vmem:[%s1 + $0x420] sm:$0xff]
  %v148 = vld [vmem:[%s1 + $0x428] sm:$0xff]
  %v149 = vld [vmem:[%s1 + $0x430] sm:$0xff]
  %v150 = vld [vmem:[%s1 + $0x438] sm:$0xff]
  %v151 = vld [vmem:[%s1 + $0x440] sm:$0xff]
  %v152 = vld [vmem:[%s1 + $0x448] sm:$0xff]
  %v153 = vld [vmem:[%s1 + $0x450] sm:$0xff]
  %v154 = vld [vmem:[%s1 + $0x458] sm:$0xff]
  %v155 = vld [vmem:[%s1 + $0x460] sm:$0xff]
  %v156 = vld [vmem:[%s1 + $0x468] sm:$0xff]
  %v157 = vld [vmem:[%s1 + $0x470] sm:$0xff]
  %v158 = vld [vmem:[%s1 + $0x478] sm:$0xff]
  %v159 = vld [vmem:[%s0] sm:$0xff]
  %v160 = vld [vmem:[%s0 + $0x8] sm:$0x1]
  %v163 = vcombine.high %v159, %v159
  %v165 = vunpack.c.l.s4 1966171168
  %v166 = vunpack.c.0.s8 %v165
  %v167 = vlaneseq
  %v168 = vshrl.u32 %v167, 7
  %v169 = vsub.s32 %v166, %v168
  %v170 = vrot.slane %v159, %v169
  %v172 = vunpack.c.l.s4 1966171168
  %v173 = vunpack.c.0.s8 %v172
  %v174 = vlaneseq
  %v175 = vshrl.u32 %v174, 7
  %v176 = vsub.s32 %v173, %v175
  %v177 = vrot.slane %v163, %v176
  %v178 = vcombine.high %v170, %v170
  %v179 = vcombine.high %v177, %v177
  %v181 = vunpack.c.l.s4 1966171168
  %v182 = vunpack.c.0.s8 %v181
  %v183 = vlaneseq
  %v184 = vshrl.u32 %v183, 7
  %v185 = vsub.s32 %v182, %v184
  %v186 = vrot.slane %v170, %v185
  %v188 = vunpack.c.l.s4 1966171168
  %v189 = vunpack.c.0.s8 %v188
  %v190 = vlaneseq
  %v191 = vshrl.u32 %v190, 7
  %v192 = vsub.s32 %v189, %v191
  %v193 = vrot.slane %v177, %v192
  %v195 = vunpack.c.l.s4 1966171168
  %v196 = vunpack.c.0.s8 %v195
  %v197 = vlaneseq
  %v198 = vshrl.u32 %v197, 7
  %v199 = vsub.s32 %v196, %v198
  %v200 = vrot.slane %v178, %v199
  %v202 = vunpack.c.l.s4 1966171168
  %v203 = vunpack.c.0.s8 %v202
  %v204 = vlaneseq
  %v205 = vshrl.u32 %v204, 7
  %v206 = vsub.s32 %v203, %v205
  %v207 = vrot.slane %v179, %v206
  %v208 = vcombine.high %v186, %v186
  %v209 = vcombine.high %v193, %v193
  %v210 = vcombine.high %v200, %v200
  %v211 = vcombine.high %v207, %v207
  %v213 = vunpack.c.l.s4 1966171168
  %v214 = vunpack.c.0.s8 %v213
  %v215 = vlaneseq
  %v216 = vshrl.u32 %v215, 7
  %v217 = vsub.s32 %v214, %v216
  %v218 = vrot.slane %v160, %v217
  %v220 = vunpack.c.l.s4 1966171168
  %v221 = vunpack.c.0.s8 %v220
  %v222 = vlaneseq
  %v223 = vshrl.u32 %v222, 7
  %v224 = vsub.s32 %v221, %v223
  %v225 = vrot.slane %v218, %v224
  %v379 = vunpack.c.l.b16 %v15
  %v380 = vunpack.c.h.b16 %v15
  %v381 = vunpack.c.l.b16 %v16
  %v382 = vunpack.c.h.b16 %v16
  %v383 = vunpack.c.l.b16 %v17
  %v384 = vunpack.c.h.b16 %v17
  %v385 = vunpack.c.l.b16 %v18
  %v386 = vunpack.c.h.b16 %v18
  %v387 = vunpack.c.l.b16 %v19
  %v388 = vunpack.c.h.b16 %v19
  %v389 = vunpack.c.l.b16 %v20
  %v390 = vunpack.c.h.b16 %v20
  %v391 = vunpack.c.l.b16 %v21
  %v392 = vunpack.c.h.b16 %v21
  %v393 = vunpack.c.l.b16 %v22
  %v394 = vunpack.c.h.b16 %v22
  %v395 = vunpack.c.l.b16 %v23
  %v396 = vunpack.c.h.b16 %v23
  %v397 = vunpack.c.l.b16 %v24
  %v398 = vunpack.c.h.b16 %v24
  %v399 = vunpack.c.l.b16 %v25
  %v400 = vunpack.c.h.b16 %v25
  %v401 = vunpack.c.l.b16 %v26
  %v402 = vunpack.c.h.b16 %v26
  %v403 = vunpack.c.l.b16 %v27
  %v404 = vunpack.c.h.b16 %v27
  %v405 = vunpack.c.l.b16 %v28
  %v406 = vunpack.c.h.b16 %v28
  %v407 = vunpack.c.l.b16 %v29
  %v408 = vunpack.c.h.b16 %v29
  %v409 = vunpack.c.l.b16 %v30
  %v410 = vunpack.c.h.b16 %v30
  %v411 = vunpack.c.l.b16 %v31
  %v412 = vunpack.c.h.b16 %v31
  %v413 = vunpack.c.l.b16 %v32
  %v414 = vunpack.c.h.b16 %v32
  %v415 = vunpack.c.l.b16 %v33
  %v416 = vunpack.c.h.b16 %v33
  %v417 = vunpack.c.l.b16 %v34
  %v418 = vunpack.c.h.b16 %v34
  %v419 = vunpack.c.l.b16 %v35
  %v420 = vunpack.c.h.b16 %v35
  %v421 = vunpack.c.l.b16 %v36
  %v422 = vunpack.c.h.b16 %v36
  %v423 = vunpack.c.l.b16 %v37
  %v424 = vunpack.c.h.b16 %v37
  %v425 = vunpack.c.l.b16 %v38
  %v426 = vunpack.c.h.b16 %v38
  %v427 = vunpack.c.l.b16 %v39
  %v428 = vunpack.c.h.b16 %v39
  %v429 = vunpack.c.l.b16 %v40
  %v430 = vunpack.c.h.b16 %v40
  %v431 = vunpack.c.l.b16 %v41
  %v432 = vunpack.c.h.b16 %v41
  %v433 = vunpack.c.l.b16 %v42
  %v434 = vunpack.c.h.b16 %v42
  %v435 = vunpack.c.l.b16 %v43
  %v436 = vunpack.c.h.b16 %v43
  %v437 = vunpack.c.l.b16 %v44
  %v438 = vunpack.c.h.b16 %v44
  %v439 = vunpack.c.l.b16 %v45
  %v440 = vunpack.c.h.b16 %v45
  %v441 = vunpack.c.l.b16 %v46
  %v442 = vunpack.c.h.b16 %v46
  %v443 = vunpack.c.l.b16 %v47
  %v444 = vunpack.c.h.b16 %v47
  %v445 = vunpack.c.l.b16 %v48
  %v446 = vunpack.c.h.b16 %v48
  %v447 = vunpack.c.l.b16 %v49
  %v448 = vunpack.c.h.b16 %v49
  %v449 = vunpack.c.l.b16 %v50
  %v450 = vunpack.c.h.b16 %v50
  %v451 = vunpack.c.l.b16 %v51
  %v452 = vunpack.c.h.b16 %v51
  %v453 = vunpack.c.l.b16 %v52
  %v454 = vunpack.c.h.b16 %v52
  %v455 = vunpack.c.l.b16 %v53
  %v456 = vunpack.c.h.b16 %v53
  %v457 = vunpack.c.l.b16 %v54
  %v458 = vunpack.c.h.b16 %v54
  %v459 = vunpack.c.l.b16 %v55
  %v460 = vunpack.c.h.b16 %v55
  %v461 = vunpack.c.l.b16 %v56
  %v462 = vunpack.c.h.b16 %v56
  %v463 = vunpack.c.l.b16 %v57
  %v464 = vunpack.c.h.b16 %v57
  %v465 = vunpack.c.l.b16 %v58
  %v466 = vunpack.c.h.b16 %v58
  %v467 = vunpack.c.l.b16 %v59
  %v468 = vunpack.c.h.b16 %v59
  %v469 = vunpack.c.l.b16 %v60
  %v470 = vunpack.c.h.b16 %v60
  %v471 = vunpack.c.l.b16 %v61
  %v472 = vunpack.c.h.b16 %v61
  %v473 = vunpack.c.l.b16 %v62
  %v474 = vunpack.c.h.b16 %v62
  %v475 = vunpack.c.l.b16 %v63
  %v476 = vunpack.c.h.b16 %v63
  %v477 = vunpack.c.l.b16 %v64
  %v478 = vunpack.c.h.b16 %v64
  %v479 = vunpack.c.l.b16 %v65
  %v480 = vunpack.c.h.b16 %v65
  %v481 = vunpack.c.l.b16 %v66
  %v482 = vunpack.c.h.b16 %v66
  %v483 = vunpack.c.l.b16 %v67
  %v484 = vunpack.c.h.b16 %v67
  %v485 = vunpack.c.l.b16 %v68
  %v486 = vunpack.c.h.b16 %v68
  %v487 = vunpack.c.l.b16 %v69
  %v488 = vunpack.c.h.b16 %v69
  %v489 = vunpack.c.l.b16 %v70
  %v490 = vunpack.c.h.b16 %v70
  %v491 = vunpack.c.l.b16 %v71
  %v492 = vunpack.c.h.b16 %v71
  %v493 = vunpack.c.l.b16 %v72
  %v494 = vunpack.c.h.b16 %v72
  %v495 = vunpack.c.l.b16 %v73
  %v496 = vunpack.c.h.b16 %v73
  %v497 = vunpack.c.l.b16 %v74
  %v498 = vunpack.c.h.b16 %v74
  %v499 = vunpack.c.l.b16 %v75
  %v500 = vunpack.c.h.b16 %v75
  %v501 = vunpack.c.l.b16 %v76
  %v502 = vunpack.c.h.b16 %v76
  %v503 = vunpack.c.l.b16 %v77
  %v504 = vunpack.c.h.b16 %v77
  %v505 = vunpack.c.l.b16 %v78
  %v506 = vunpack.c.h.b16 %v78
  %v507 = vunpack.c.l.b16 %v79
  %v508 = vunpack.c.h.b16 %v79
  %v509 = vunpack.c.l.b16 %v80
  %v510 = vunpack.c.h.b16 %v80
  %v511 = vunpack.c.l.b16 %v81
  %v512 = vunpack.c.h.b16 %v81
  %v513 = vunpack.c.l.b16 %v82
  %v514 = vunpack.c.h.b16 %v82
  %v515 = vunpack.c.l.b16 %v83
  %v516 = vunpack.c.h.b16 %v83
  %v517 = vunpack.c.l.b16 %v84
  %v518 = vunpack.c.h.b16 %v84
  %v519 = vunpack.c.l.b16 %v85
  %v520 = vunpack.c.h.b16 %v85
  %v521 = vunpack.c.l.b16 %v86
  %v522 = vunpack.c.h.b16 %v86
  %v523 = vunpack.c.l.b16 %v87
  %v524 = vunpack.c.h.b16 %v87
  %v525 = vunpack.c.l.b16 %v88
  %v526 = vunpack.c.h.b16 %v88
  %v527 = vunpack.c.l.b16 %v89
  %v528 = vunpack.c.h.b16 %v89
  %v529 = vunpack.c.l.b16 %v90
  %v530 = vunpack.c.h.b16 %v90
  %v531 = vunpack.c.l.b16 %v91
  %v532 = vunpack.c.h.b16 %v91
  %v533 = vunpack.c.l.b16 %v92
  %v534 = vunpack.c.h.b16 %v92
  %v535 = vunpack.c.l.b16 %v93
  %v536 = vunpack.c.h.b16 %v93
  %v537 = vunpack.c.l.b16 %v94
  %v538 = vunpack.c.h.b16 %v94
  %v539 = vunpack.c.l.b16 %v95
  %v540 = vunpack.c.h.b16 %v95
  %v541 = vunpack.c.l.b16 %v96
  %v542 = vunpack.c.h.b16 %v96
  %v543 = vunpack.c.l.b16 %v97
  %v544 = vunpack.c.h.b16 %v97
  %v545 = vunpack.c.l.b16 %v98
  %v546 = vunpack.c.h.b16 %v98
  %v547 = vunpack.c.l.b16 %v99
  %v548 = vunpack.c.h.b16 %v99
  %v549 = vunpack.c.l.b16 %v100
  %v550 = vunpack.c.h.b16 %v100
  %v551 = vunpack.c.l.b16 %v101
  %v552 = vunpack.c.h.b16 %v101
  %v553 = vunpack.c.l.b16 %v102
  %v554 = vunpack.c.h.b16 %v102
  %v555 = vunpack.c.l.b16 %v103
  %v556 = vunpack.c.h.b16 %v103
  %v557 = vunpack.c.l.b16 %v104
  %v558 = vunpack.c.h.b16 %v104
  %v559 = vunpack.c.l.b16 %v105
  %v560 = vunpack.c.h.b16 %v105
  %v561 = vunpack.c.l.b16 %v106
  %v562 = vunpack.c.h.b16 %v106
  %v563 = vunpack.c.l.b16 %v107
  %v564 = vunpack.c.h.b16 %v107
  %v565 = vunpack.c.l.b16 %v108
  %v566 = vunpack.c.h.b16 %v108
  %v567 = vunpack.c.l.b16 %v109
  %v568 = vunpack.c.h.b16 %v109
  %v569 = vunpack.c.l.b16 %v110
  %v570 = vunpack.c.h.b16 %v110
  %v571 = vunpack.c.l.b16 %v111
  %v572 = vunpack.c.h.b16 %v111
  %v573 = vunpack.c.l.b16 %v112
  %v574 = vunpack.c.h.b16 %v112
  %v575 = vunpack.c.l.b16 %v113
  %v576 = vunpack.c.h.b16 %v113
  %v577 = vunpack.c.l.b16 %v114
  %v578 = vunpack.c.h.b16 %v114
  %v579 = vunpack.c.l.b16 %v115
  %v580 = vunpack.c.h.b16 %v115
  %v581 = vunpack.c.l.b16 %v116
  %v582 = vunpack.c.h.b16 %v116
  %v583 = vunpack.c.l.b16 %v117
  %v584 = vunpack.c.h.b16 %v117
  %v585 = vunpack.c.l.b16 %v118
  %v586 = vunpack.c.h.b16 %v118
  %v587 = vunpack.c.l.b16 %v119
  %v588 = vunpack.c.h.b16 %v119
  %v589 = vunpack.c.l.b16 %v120
  %v590 = vunpack.c.h.b16 %v120
  %v591 = vunpack.c.l.b16 %v121
  %v592 = vunpack.c.h.b16 %v121
  %v593 = vunpack.c.l.b16 %v122
  %v594 = vunpack.c.h.b16 %v122
  %v595 = vunpack.c.l.b16 %v123
  %v596 = vunpack.c.h.b16 %v123
  %v597 = vunpack.c.l.b16 %v124
  %v598 = vunpack.c.h.b16 %v124
  %v599 = vunpack.c.l.b16 %v125
  %v600 = vunpack.c.h.b16 %v125
  %v601 = vunpack.c.l.b16 %v126
  %v602 = vunpack.c.h.b16 %v126
  %v603 = vunpack.c.l.b16 %v127
  %v604 = vunpack.c.h.b16 %v127
  %v605 = vunpack.c.l.b16 %v128
  %v606 = vunpack.c.h.b16 %v128
  %v607 = vunpack.c.l.b16 %v129
  %v608 = vunpack.c.h.b16 %v129
  %v609 = vunpack.c.l.b16 %v130
  %v610 = vunpack.c.h.b16 %v130
  %v611 = vunpack.c.l.b16 %v131
  %v612 = vunpack.c.h.b16 %v131
  %v613 = vunpack.c.l.b16 %v132
  %v614 = vunpack.c.h.b16 %v132
  %v615 = vunpack.c.l.b16 %v133
  %v616 = vunpack.c.h.b16 %v133
  %v617 = vunpack.c.l.b16 %v134
  %v618 = vunpack.c.h.b16 %v134
  %v619 = vunpack.c.l.b16 %v135
  %v620 = vunpack.c.h.b16 %v135
  %v621 = vunpack.c.l.b16 %v136
  %v622 = vunpack.c.h.b16 %v136
  %v623 = vunpack.c.l.b16 %v137
  %v624 = vunpack.c.h.b16 %v137
  %v625 = vunpack.c.l.b16 %v138
  %v626 = vunpack.c.h.b16 %v138
  %v627 = vunpack.c.l.b16 %v139
  %v628 = vunpack.c.h.b16 %v139
  %v629 = vunpack.c.l.b16 %v140
  %v630 = vunpack.c.h.b16 %v140
  %v631 = vunpack.c.l.b16 %v141
  %v632 = vunpack.c.h.b16 %v141
  %v633 = vunpack.c.l.b16 %v142
  %v634 = vunpack.c.h.b16 %v142
  %v635 = vunpack.c.l.b16 %v143
  %v636 = vunpack.c.h.b16 %v143
  %v637 = vunpack.c.l.b16 %v144
  %v638 = vunpack.c.h.b16 %v144
  %v639 = vunpack.c.l.b16 %v145
  %v640 = vunpack.c.h.b16 %v145
  %v641 = vunpack.c.l.b16 %v146
  %v642 = vunpack.c.h.b16 %v146
  %v643 = vunpack.c.l.b16 %v147
  %v644 = vunpack.c.h.b16 %v147
  %v645 = vunpack.c.l.b16 %v148
  %v646 = vunpack.c.h.b16 %v148
  %v647 = vunpack.c.l.b16 %v149
  %v648 = vunpack.c.h.b16 %v149
  %v649 = vunpack.c.l.b16 %v150
  %v650 = vunpack.c.h.b16 %v150
  %v651 = vunpack.c.l.b16 %v151
  %v652 = vunpack.c.h.b16 %v151
  %v653 = vunpack.c.l.b16 %v152
  %v654 = vunpack.c.h.b16 %v152
  %v655 = vunpack.c.l.b16 %v153
  %v656 = vunpack.c.h.b16 %v153
  %v657 = vunpack.c.l.b16 %v154
  %v658 = vunpack.c.h.b16 %v154
  %v659 = vunpack.c.l.b16 %v155
  %v660 = vunpack.c.h.b16 %v155
  %v661 = vunpack.c.l.b16 %v156
  %v662 = vunpack.c.h.b16 %v156
  %v663 = vunpack.c.l.b16 %v157
  %v664 = vunpack.c.h.b16 %v157
  %v665 = vunpack.c.l.b16 %v158
  %v666 = vunpack.c.h.b16 %v158
  %v667 = vpack.c.b16 %v381, %v379
  %v668 = vpack.c.b16 %v382, %v380
  %v669 = vpack.c.b16 %v385, %v383
  %v670 = vpack.c.b16 %v386, %v384
  %v671 = vpack.c.b16 %v389, %v387
  %v672 = vpack.c.b16 %v390, %v388
  %v673 = vpack.c.b16 %v393, %v391
  %v674 = vpack.c.b16 %v394, %v392
  %v675 = vpack.c.b16 %v397, %v395
  %v676 = vpack.c.b16 %v398, %v396
  %v677 = vpack.c.b16 %v401, %v399
  %v678 = vpack.c.b16 %v402, %v400
  %v679 = vpack.c.b16 %v405, %v403
  %v680 = vpack.c.b16 %v406, %v404
  %v681 = vpack.c.b16 %v409, %v407
  %v682 = vpack.c.b16 %v410, %v408
  %v683 = vpack.c.b16 %v413, %v411
  %v684 = vpack.c.b16 %v414, %v412
  %v685 = vpack.c.b16 %v417, %v415
  %v686 = vpack.c.b16 %v418, %v416
  %v687 = vpack.c.b16 %v421, %v419
  %v688 = vpack.c.b16 %v422, %v420
  %v689 = vpack.c.b16 %v425, %v423
  %v690 = vpack.c.b16 %v426, %v424
  %v691 = vpack.c.b16 %v429, %v427
  %v692 = vpack.c.b16 %v430, %v428
  %v693 = vpack.c.b16 %v433, %v431
  %v694 = vpack.c.b16 %v434, %v432
  %v695 = vpack.c.b16 %v437, %v435
  %v696 = vpack.c.b16 %v438, %v436
  %v697 = vpack.c.b16 %v441, %v439
  %v698 = vpack.c.b16 %v442, %v440
  %v699 = vpack.c.b16 %v445, %v443
  %v700 = vpack.c.b16 %v446, %v444
  %v701 = vpack.c.b16 %v449, %v447
  %v702 = vpack.c.b16 %v450, %v448
  %v703 = vpack.c.b16 %v453, %v451
  %v704 = vpack.c.b16 %v454, %v452
  %v705 = vpack.c.b16 %v457, %v455
  %v706 = vpack.c.b16 %v458, %v456
  %v707 = vpack.c.b16 %v461, %v459
  %v708 = vpack.c.b16 %v462, %v460
  %v709 = vpack.c.b16 %v465, %v463
  %v710 = vpack.c.b16 %v466, %v464
  %v711 = vpack.c.b16 %v469, %v467
  %v712 = vpack.c.b16 %v470, %v468
  %v713 = vpack.c.b16 %v473, %v471
  %v714 = vpack.c.b16 %v474, %v472
  %v715 = vpack.c.b16 %v477, %v475
  %v716 = vpack.c.b16 %v478, %v476
  %v717 = vpack.c.b16 %v481, %v479
  %v718 = vpack.c.b16 %v482, %v480
  %v719 = vpack.c.b16 %v485, %v483
  %v720 = vpack.c.b16 %v486, %v484
  %v721 = vpack.c.b16 %v489, %v487
  %v722 = vpack.c.b16 %v490, %v488
  %v723 = vpack.c.b16 %v493, %v491
  %v724 = vpack.c.b16 %v494, %v492
  %v725 = vpack.c.b16 %v497, %v495
  %v726 = vpack.c.b16 %v498, %v496
  %v727 = vpack.c.b16 %v501, %v499
  %v728 = vpack.c.b16 %v502, %v500
  %v729 = vpack.c.b16 %v505, %v503
  %v730 = vpack.c.b16 %v506, %v504
  %v731 = vpack.c.b16 %v509, %v507
  %v732 = vpack.c.b16 %v510, %v508
  %v733 = vpack.c.b16 %v513, %v511
  %v734 = vpack.c.b16 %v514, %v512
  %v735 = vpack.c.b16 %v517, %v515
  %v736 = vpack.c.b16 %v518, %v516
  %v737 = vpack.c.b16 %v521, %v519
  %v738 = vpack.c.b16 %v522, %v520
  %v739 = vpack.c.b16 %v525, %v523
  %v740 = vpack.c.b16 %v526, %v524
  %v741 = vpack.c.b16 %v529, %v527
  %v742 = vpack.c.b16 %v530, %v528
  %v743 = vpack.c.b16 %v533, %v531
  %v744 = vpack.c.b16 %v534, %v532
  %v745 = vpack.c.b16 %v537, %v535
  %v746 = vpack.c.b16 %v538, %v536
  %v747 = vpack.c.b16 %v541, %v539
  %v748 = vpack.c.b16 %v542, %v540
  %v749 = vpack.c.b16 %v545, %v543
  %v750 = vpack.c.b16 %v546, %v544
  %v751 = vpack.c.b16 %v549, %v547
  %v752 = vpack.c.b16 %v550, %v548
  %v753 = vpack.c.b16 %v553, %v551
  %v754 = vpack.c.b16 %v554, %v552
  %v755 = vpack.c.b16 %v557, %v555
  %v756 = vpack.c.b16 %v558, %v556
  %v757 = vpack.c.b16 %v561, %v559
  %v758 = vpack.c.b16 %v562, %v560
  %v759 = vpack.c.b16 %v565, %v563
  %v760 = vpack.c.b16 %v566, %v564
  %v761 = vpack.c.b16 %v569, %v567
  %v762 = vpack.c.b16 %v570, %v568
  %v763 = vpack.c.b16 %v573, %v571
  %v764 = vpack.c.b16 %v574, %v572
  %v765 = vpack.c.b16 %v577, %v575
  %v766 = vpack.c.b16 %v578, %v576
  %v767 = vpack.c.b16 %v581, %v579
  %v768 = vpack.c.b16 %v582, %v580
  %v769 = vpack.c.b16 %v585, %v583
  %v770 = vpack.c.b16 %v586, %v584
  %v771 = vpack.c.b16 %v589, %v587
  %v772 = vpack.c.b16 %v590, %v588
  %v773 = vpack.c.b16 %v593, %v591
  %v774 = vpack.c.b16 %v594, %v592
  %v775 = vpack.c.b16 %v597, %v595
  %v776 = vpack.c.b16 %v598, %v596
  %v777 = vpack.c.b16 %v601, %v599
  %v778 = vpack.c.b16 %v602, %v600
  %v779 = vpack.c.b16 %v605, %v603
  %v780 = vpack.c.b16 %v606, %v604
  %v781 = vpack.c.b16 %v609, %v607
  %v782 = vpack.c.b16 %v610, %v608
  %v783 = vpack.c.b16 %v613, %v611
  %v784 = vpack.c.b16 %v614, %v612
  %v785 = vpack.c.b16 %v617, %v615
  %v786 = vpack.c.b16 %v618, %v616
  %v787 = vpack.c.b16 %v621, %v619
  %v788 = vpack.c.b16 %v622, %v620
  %v789 = vpack.c.b16 %v625, %v623
  %v790 = vpack.c.b16 %v626, %v624
  %v791 = vpack.c.b16 %v629, %v627
  %v792 = vpack.c.b16 %v630, %v628
  %v793 = vpack.c.b16 %v633, %v631
  %v794 = vpack.c.b16 %v634, %v632
  %v795 = vpack.c.b16 %v637, %v635
  %v796 = vpack.c.b16 %v638, %v636
  %v797 = vpack.c.b16 %v641, %v639
  %v798 = vpack.c.b16 %v642, %v640
  %v799 = vpack.c.b16 %v645, %v643
  %v800 = vpack.c.b16 %v646, %v644
  %v801 = vpack.c.b16 %v649, %v647
  %v802 = vpack.c.b16 %v650, %v648
  %v803 = vpack.c.b16 %v653, %v651
  %v804 = vpack.c.b16 %v654, %v652
  %v805 = vpack.c.b16 %v657, %v655
  %v806 = vpack.c.b16 %v658, %v656
  %v807 = vpack.c.b16 %v661, %v659
  %v808 = vpack.c.b16 %v662, %v660
  %v809 = vpack.c.b16 %v665, %v663
  %v810 = vpack.c.b16 %v666, %v664
  %955 = vmatprep.subr.bf16.mxu0 %v682
  %956 = vmatpush1.bf16.msra.mxu0 %v681
  %957 = vmatprep.subr.bf16.mxu0 %v680
  %958 = vmatpush1.bf16.msra.mxu0 %v679
  %959 = vmatprep.subr.bf16.mxu0 %v678
  %960 = vmatpush1.bf16.msra.mxu0 %v677
  %961 = vmatprep.subr.bf16.mxu0 %v676
  %962 = vmatpush1.bf16.msra.mxu0 %v675
  %963 = vmatprep.subr.bf16.mxu0 %v674
  %964 = vmatpush1.bf16.msra.mxu0 %v673
  %965 = vmatprep.subr.bf16.mxu0 %v672
  %966 = vmatpush1.bf16.msra.mxu0 %v671
  %967 = vmatprep.subr.bf16.mxu0 %v670
  %968 = vmatpush1.bf16.msra.mxu0 %v669
  %969 = vmatprep.subr.bf16.mxu0 %v668
  %970 = vmatpush1.bf16.msra.mxu0 %v667
  %971 = vmatprep.subr.bf16.mxu0 %v698
  %972 = vmatpush2.bf16.msra.mxu0 %v697
  %973 = vmatprep.subr.bf16.mxu0 %v696
  %974 = vmatpush2.bf16.msra.mxu0 %v695
  %975 = vmatprep.subr.bf16.mxu0 %v694
  %976 = vmatpush2.bf16.msra.mxu0 %v693
  %977 = vmatprep.subr.bf16.mxu0 %v692
  %978 = vmatpush2.bf16.msra.mxu0 %v691
  %979 = vmatprep.subr.bf16.mxu0 %v690
  %980 = vmatpush2.bf16.msra.mxu0 %v689
  %981 = vmatprep.subr.bf16.mxu0 %v688
  %982 = vmatpush2.bf16.msra.mxu0 %v687
  %983 = vmatprep.subr.bf16.mxu0 %v686
  %984 = vmatpush2.bf16.msra.mxu0 %v685
  %985 = vmatprep.subr.bf16.mxu0 %v684
  %986 = vmatpush2.bf16.msra.mxu0 %v683
  %987 = vmatprep.mubr.bf16.mxu0 %v200
  %988 = vmatmul.mubr.bf16.gmra.mxu0 %v186
  %v989 = vpop.f32.mrf.mxu0
  %v990 = vadd.f32 0.0, %v989
  %v991 = vpop.f32.mrf.mxu0
  %v992 = vadd.f32 0.0, %v991
  %v993 = vpop.f32.mrf.mxu0
  %v994 = vpop.f32.mrf.mxu0
  %995 = vdwg.mxu0
  %996 = vmatprep.subr.bf16.mxu0 %v714
  %997 = vmatpush1.bf16.msra.mxu0 %v713
  %998 = vmatprep.subr.bf16.mxu0 %v712
  %999 = vmatpush1.bf16.msra.mxu0 %v711
  %1000 = vmatprep.subr.bf16.mxu0 %v710
  %1001 = vmatpush1.bf16.msra.mxu0 %v709
  %1002 = vmatprep.subr.bf16.mxu0 %v708
  %1003 = vmatpush1.bf16.msra.mxu0 %v707
  %1004 = vmatprep.subr.bf16.mxu0 %v706
  %1005 = vmatpush1.bf16.msra.mxu0 %v705
  %1006 = vmatprep.subr.bf16.mxu0 %v704
  %1007 = vmatpush1.bf16.msra.mxu0 %v703
  %1008 = vmatprep.subr.bf16.mxu0 %v702
  %1009 = vmatpush1.bf16.msra.mxu0 %v701
  %1010 = vmatprep.subr.bf16.mxu0 %v700
  %1011 = vmatpush1.bf16.msra.mxu0 %v699
  %1012 = vmatprep.subr.bf16.mxu0 %v730
  %1013 = vmatpush2.bf16.msra.mxu0 %v729
  %1014 = vmatprep.subr.bf16.mxu0 %v728
  %1015 = vmatpush2.bf16.msra.mxu0 %v727
  %1016 = vmatprep.subr.bf16.mxu0 %v726
  %1017 = vmatpush2.bf16.msra.mxu0 %v725
  %1018 = vmatprep.subr.bf16.mxu0 %v724
  %1019 = vmatpush2.bf16.msra.mxu0 %v723
  %1020 = vmatprep.subr.bf16.mxu0 %v722
  %1021 = vmatpush2.bf16.msra.mxu0 %v721
  %1022 = vmatprep.subr.bf16.mxu0 %v720
  %1023 = vmatpush2.bf16.msra.mxu0 %v719
  %1024 = vmatprep.subr.bf16.mxu0 %v718
  %1025 = vmatpush2.bf16.msra.mxu0 %v717
  %1026 = vmatprep.subr.bf16.mxu0 %v716
  %1027 = vmatpush2.bf16.msra.mxu0 %v715
  %1028 = vmatprep.mubr.bf16.mxu0 %v210
  %1029 = vmatmul.mubr.bf16.gmra.mxu0 %v208
  %v1030 = vpop.f32.mrf.mxu0
  %v1031 = vadd.f32 %v990, %v1030
  %v1032 = vpop.f32.mrf.mxu0
  %v1033 = vadd.f32 %v992, %v1032
  %v1034 = vpop.f32.mrf.mxu0
  %v1035 = vpop.f32.mrf.mxu0
  %1036 = vdwg.mxu0
  %1037 = vmatprep.subr.bf16.mxu0 %v746
  %1038 = vmatpush1.bf16.msra.mxu0 %v745
  %1039 = vmatprep.subr.bf16.mxu0 %v744
  %1040 = vmatpush1.bf16.msra.mxu0 %v743
  %1041 = vmatprep.subr.bf16.mxu0 %v742
  %1042 = vmatpush1.bf16.msra.mxu0 %v741
  %1043 = vmatprep.subr.bf16.mxu0 %v740
  %1044 = vmatpush1.bf16.msra.mxu0 %v739
  %1045 = vmatprep.subr.bf16.mxu0 %v738
  %1046 = vmatpush1.bf16.msra.mxu0 %v737
  %1047 = vmatprep.subr.bf16.mxu0 %v736
  %1048 = vmatpush1.bf16.msra.mxu0 %v735
  %1049 = vmatprep.subr.bf16.mxu0 %v734
  %1050 = vmatpush1.bf16.msra.mxu0 %v733
  %1051 = vmatprep.subr.bf16.mxu0 %v732
  %1052 = vmatpush1.bf16.msra.mxu0 %v731
  %1053 = vmatprep.subr.bf16.mxu0 %v762
  %1054 = vmatpush2.bf16.msra.mxu0 %v761
  %1055 = vmatprep.subr.bf16.mxu0 %v760
  %1056 = vmatpush2.bf16.msra.mxu0 %v759
  %1057 = vmatprep.subr.bf16.mxu0 %v758
  %1058 = vmatpush2.bf16.msra.mxu0 %v757
  %1059 = vmatprep.subr.bf16.mxu0 %v756
  %1060 = vmatpush2.bf16.msra.mxu0 %v755
  %1061 = vmatprep.subr.bf16.mxu0 %v754
  %1062 = vmatpush2.bf16.msra.mxu0 %v753
  %1063 = vmatprep.subr.bf16.mxu0 %v752
  %1064 = vmatpush2.bf16.msra.mxu0 %v751
  %1065 = vmatprep.subr.bf16.mxu0 %v750
  %1066 = vmatpush2.bf16.msra.mxu0 %v749
  %1067 = vmatprep.subr.bf16.mxu0 %v748
  %1068 = vmatpush2.bf16.msra.mxu0 %v747
  %1069 = vmatprep.mubr.bf16.mxu0 %v207
  %1070 = vmatmul.mubr.bf16.gmra.mxu0 %v193
  %v1071 = vpop.f32.mrf.mxu0
  %v1072 = vadd.f32 %v1031, %v1071
  %v1073 = vpop.f32.mrf.mxu0
  %v1074 = vadd.f32 %v1033, %v1073
  %v1075 = vpop.f32.mrf.mxu0
  %v1076 = vpop.f32.mrf.mxu0
  %1077 = vdwg.mxu0
  %1078 = vmatprep.subr.bf16.mxu0 %v778
  %1079 = vmatpush1.bf16.msra.mxu0 %v777
  %1080 = vmatprep.subr.bf16.mxu0 %v776
  %1081 = vmatpush1.bf16.msra.mxu0 %v775
  %1082 = vmatprep.subr.bf16.mxu0 %v774
  %1083 = vmatpush1.bf16.msra.mxu0 %v773
  %1084 = vmatprep.subr.bf16.mxu0 %v772
  %1085 = vmatpush1.bf16.msra.mxu0 %v771
  %1086 = vmatprep.subr.bf16.mxu0 %v770
  %1087 = vmatpush1.bf16.msra.mxu0 %v769
  %1088 = vmatprep.subr.bf16.mxu0 %v768
  %1089 = vmatpush1.bf16.msra.mxu0 %v767
  %1090 = vmatprep.subr.bf16.mxu0 %v766
  %1091 = vmatpush1.bf16.msra.mxu0 %v765
  %1092 = vmatprep.subr.bf16.mxu0 %v764
  %1093 = vmatpush1.bf16.msra.mxu0 %v763
  %1094 = vmatprep.subr.bf16.mxu0 %v794
  %1095 = vmatpush2.bf16.msra.mxu0 %v793
  %1096 = vmatprep.subr.bf16.mxu0 %v792
  %1097 = vmatpush2.bf16.msra.mxu0 %v791
  %1098 = vmatprep.subr.bf16.mxu0 %v790
  %1099 = vmatpush2.bf16.msra.mxu0 %v789
  %1100 = vmatprep.subr.bf16.mxu0 %v788
  %1101 = vmatpush2.bf16.msra.mxu0 %v787
  %1102 = vmatprep.subr.bf16.mxu0 %v786
  %1103 = vmatpush2.bf16.msra.mxu0 %v785
  %1104 = vmatprep.subr.bf16.mxu0 %v784
  %1105 = vmatpush2.bf16.msra.mxu0 %v783
  %1106 = vmatprep.subr.bf16.mxu0 %v782
  %1107 = vmatpush2.bf16.msra.mxu0 %v781
  %1108 = vmatprep.subr.bf16.mxu0 %v780
  %1109 = vmatpush2.bf16.msra.mxu0 %v779
  %1110 = vmatprep.mubr.bf16.mxu0 %v211
  %1111 = vmatmul.mubr.bf16.gmra.mxu0 %v209
  %v1112 = vpop.f32.mrf.mxu0
  %v1113 = vadd.f32 %v1072, %v1112
  %v1114 = vpop.f32.mrf.mxu0
  %v1115 = vadd.f32 %v1074, %v1114
  %v1116 = vpop.f32.mrf.mxu0
  %v1117 = vpop.f32.mrf.mxu0
  %1118 = vdwg.mxu0
  %1119 = vmatprep.subr.bf16.mxu0 %v810
  %1120 = vmatpush1.bf16.msra.mxu0 %v809
  %1121 = vmatprep.subr.bf16.mxu0 %v808
  %1122 = vmatpush1.bf16.msra.mxu0 %v807
  %1123 = vmatprep.subr.bf16.mxu0 %v806
  %1124 = vmatpush1.bf16.msra.mxu0 %v805
  %1125 = vmatprep.subr.bf16.mxu0 %v804
  %1126 = vmatpush1.bf16.msra.mxu0 %v803
  %1127 = vmatprep.subr.bf16.mxu0 %v802
  %1128 = vmatpush1.bf16.msra.mxu0 %v801
  %1129 = vmatprep.subr.bf16.mxu0 %v800
  %1130 = vmatpush1.bf16.msra.mxu0 %v799
  %1131 = vmatprep.subr.bf16.mxu0 %v798
  %1132 = vmatpush1.bf16.msra.mxu0 %v797
  %1133 = vmatprep.subr.bf16.mxu0 %v796
  %1134 = vmatpush1.bf16.msra.mxu0 %v795
  %1135 = vmatprep.subr.bf16.mxu0 0
  %1136 = vmatpush2.bf16.msra.mxu0 0
  %1137 = vmatprep.subr.bf16.mxu0 0
  %1138 = vmatpush2.bf16.msra.mxu0 0
  %1139 = vmatprep.subr.bf16.mxu0 0
  %1140 = vmatpush2.bf16.msra.mxu0 0
  %1141 = vmatprep.subr.bf16.mxu0 0
  %1142 = vmatpush2.bf16.msra.mxu0 0
  %1143 = vmatprep.subr.bf16.mxu0 0
  %1144 = vmatpush2.bf16.msra.mxu0 0
  %1145 = vmatprep.subr.bf16.mxu0 0
  %1146 = vmatpush2.bf16.msra.mxu0 0
  %1147 = vmatprep.subr.bf16.mxu0 0
  %1148 = vmatpush2.bf16.msra.mxu0 0
  %1149 = vmatprep.subr.bf16.mxu0 0
  %1150 = vmatpush2.bf16.msra.mxu0 0
  %1151 = vmatprep.mubr.bf16.mxu0 0
  %1152 = vmatmul.mubr.bf16.gmra.mxu0 %v225
  %v1153 = vpop.f32.mrf.mxu0
  %v1154 = vadd.f32 %v1113, %v1153
  %v1155 = vpop.f32.mrf.mxu0
  %v1156 = vadd.f32 %v1115, %v1155
  %v1157 = vpop.f32.mrf.mxu0
  %v1158 = vpop.f32.mrf.mxu0
  %1159 = vdwg.mxu0
  %s1160 = scalar_lea.vmem %s0, 9
  %v1161 = vld [vmem:[%s1160] sm:$0xff]
  %v1162 = vld [vmem:[%s1160 + $0x8] sm:$0x1]
  %v1165 = vcombine.high %v1161, %v1161
  %v1167 = vunpack.c.l.s4 1966171168
  %v1168 = vunpack.c.0.s8 %v1167
  %v1169 = vlaneseq
  %v1170 = vshrl.u32 %v1169, 7
  %v1171 = vsub.s32 %v1168, %v1170
  %v1172 = vrot.slane %v1161, %v1171
  %v1174 = vunpack.c.l.s4 1966171168
  %v1175 = vunpack.c.0.s8 %v1174
  %v1176 = vlaneseq
  %v1177 = vshrl.u32 %v1176, 7
  %v1178 = vsub.s32 %v1175, %v1177
  %v1179 = vrot.slane %v1165, %v1178
  %v1180 = vcombine.high %v1172, %v1172
  %v1181 = vcombine.high %v1179, %v1179
  %v1183 = vunpack.c.l.s4 1966171168
  %v1184 = vunpack.c.0.s8 %v1183
  %v1185 = vlaneseq
  %v1186 = vshrl.u32 %v1185, 7
  %v1187 = vsub.s32 %v1184, %v1186
  %v1188 = vrot.slane %v1172, %v1187
  %v1190 = vunpack.c.l.s4 1966171168
  %v1191 = vunpack.c.0.s8 %v1190
  %v1192 = vlaneseq
  %v1193 = vshrl.u32 %v1192, 7
  %v1194 = vsub.s32 %v1191, %v1193
  %v1195 = vrot.slane %v1179, %v1194
  %v1197 = vunpack.c.l.s4 1966171168
  %v1198 = vunpack.c.0.s8 %v1197
  %v1199 = vlaneseq
  %v1200 = vshrl.u32 %v1199, 7
  %v1201 = vsub.s32 %v1198, %v1200
  %v1202 = vrot.slane %v1180, %v1201
  %v1204 = vunpack.c.l.s4 1966171168
  %v1205 = vunpack.c.0.s8 %v1204
  %v1206 = vlaneseq
  %v1207 = vshrl.u32 %v1206, 7
  %v1208 = vsub.s32 %v1205, %v1207
  %v1209 = vrot.slane %v1181, %v1208
  %v1210 = vcombine.high %v1188, %v1188
  %v1211 = vcombine.high %v1195, %v1195
  %v1212 = vcombine.high %v1202, %v1202
  %v1213 = vcombine.high %v1209, %v1209
  %v1215 = vunpack.c.l.s4 1966171168
  %v1216 = vunpack.c.0.s8 %v1215
  %v1217 = vlaneseq
  %v1218 = vshrl.u32 %v1217, 7
  %v1219 = vsub.s32 %v1216, %v1218
  %v1220 = vrot.slane %v1162, %v1219
  %v1222 = vunpack.c.l.s4 1966171168
  %v1223 = vunpack.c.0.s8 %v1222
  %v1224 = vlaneseq
  %v1225 = vshrl.u32 %v1224, 7
  %v1226 = vsub.s32 %v1223, %v1225
  %v1227 = vrot.slane %v1220, %v1226
  %1237 = vmatprep.subr.bf16.mxu0 %v682
  %1238 = vmatpush1.bf16.msra.mxu0 %v681
  %1239 = vmatprep.subr.bf16.mxu0 %v680
  %1240 = vmatpush1.bf16.msra.mxu0 %v679
  %1241 = vmatprep.subr.bf16.mxu0 %v678
  %1242 = vmatpush1.bf16.msra.mxu0 %v677
  %1243 = vmatprep.subr.bf16.mxu0 %v676
  %1244 = vmatpush1.bf16.msra.mxu0 %v675
  %1245 = vmatprep.subr.bf16.mxu0 %v674
  %1246 = vmatpush1.bf16.msra.mxu0 %v673
  %1247 = vmatprep.subr.bf16.mxu0 %v672
  %1248 = vmatpush1.bf16.msra.mxu0 %v671
  %1249 = vmatprep.subr.bf16.mxu0 %v670
  %1250 = vmatpush1.bf16.msra.mxu0 %v669
  %1251 = vmatprep.subr.bf16.mxu0 %v668
  %1252 = vmatpush1.bf16.msra.mxu0 %v667
  %1253 = vmatprep.subr.bf16.mxu0 %v698
  %1254 = vmatpush2.bf16.msra.mxu0 %v697
  %1255 = vmatprep.subr.bf16.mxu0 %v696
  %1256 = vmatpush2.bf16.msra.mxu0 %v695
  %1257 = vmatprep.subr.bf16.mxu0 %v694
  %1258 = vmatpush2.bf16.msra.mxu0 %v693
  %1259 = vmatprep.subr.bf16.mxu0 %v692
  %1260 = vmatpush2.bf16.msra.mxu0 %v691
  %1261 = vmatprep.subr.bf16.mxu0 %v690
  %1262 = vmatpush2.bf16.msra.mxu0 %v689
  %1263 = vmatprep.subr.bf16.mxu0 %v688
  %1264 = vmatpush2.bf16.msra.mxu0 %v687
  %1265 = vmatprep.subr.bf16.mxu0 %v686
  %1266 = vmatpush2.bf16.msra.mxu0 %v685
  %1267 = vmatprep.subr.bf16.mxu0 %v684
  %1268 = vmatpush2.bf16.msra.mxu0 %v683
  %1269 = vmatprep.mubr.bf16.mxu0 %v1202
  %1270 = vmatmul.mubr.bf16.gmra.mxu0 %v1188
  %v1271 = vpop.f32.mrf.mxu0
  %v1272 = vadd.f32 0.0, %v1271
  %v1273 = vpop.f32.mrf.mxu0
  %v1274 = vadd.f32 0.0, %v1273
  %v1275 = vpop.f32.mrf.mxu0
  %v1276 = vpop.f32.mrf.mxu0
  %1277 = vdwg.mxu0
  %1278 = vmatprep.subr.bf16.mxu0 %v714
  %1279 = vmatpush1.bf16.msra.mxu0 %v713
  %1280 = vmatprep.subr.bf16.mxu0 %v712
  %1281 = vmatpush1.bf16.msra.mxu0 %v711
  %1282 = vmatprep.subr.bf16.mxu0 %v710
  %1283 = vmatpush1.bf16.msra.mxu0 %v709
  %1284 = vmatprep.subr.bf16.mxu0 %v708
  %1285 = vmatpush1.bf16.msra.mxu0 %v707
  %1286 = vmatprep.subr.bf16.mxu0 %v706
  %1287 = vmatpush1.bf16.msra.mxu0 %v705
  %1288 = vmatprep.subr.bf16.mxu0 %v704
  %1289 = vmatpush1.bf16.msra.mxu0 %v703
  %1290 = vmatprep.subr.bf16.mxu0 %v702
  %1291 = vmatpush1.bf16.msra.mxu0 %v701
  %1292 = vmatprep.subr.bf16.mxu0 %v700
  %1293 = vmatpush1.bf16.msra.mxu0 %v699
  %1294 = vmatprep.subr.bf16.mxu0 %v730
  %1295 = vmatpush2.bf16.msra.mxu0 %v729
  %1296 = vmatprep.subr.bf16.mxu0 %v728
  %1297 = vmatpush2.bf16.msra.mxu0 %v727
  %1298 = vmatprep.subr.bf16.mxu0 %v726
  %1299 = vmatpush2.bf16.msra.mxu0 %v725
  %1300 = vmatprep.subr.bf16.mxu0 %v724
  %1301 = vmatpush2.bf16.msra.mxu0 %v723
  %1302 = vmatprep.subr.bf16.mxu0 %v722
  %1303 = vmatpush2.bf16.msra.mxu0 %v721
  %1304 = vmatprep.subr.bf16.mxu0 %v720
  %1305 = vmatpush2.bf16.msra.mxu0 %v719
  %1306 = vmatprep.subr.bf16.mxu0 %v718
  %1307 = vmatpush2.bf16.msra.mxu0 %v717
  %1308 = vmatprep.subr.bf16.mxu0 %v716
  %1309 = vmatpush2.bf16.msra.mxu0 %v715
  %1310 = vmatprep.mubr.bf16.mxu0 %v1212
  %1311 = vmatmul.mubr.bf16.gmra.mxu0 %v1210
  %v1312 = vpop.f32.mrf.mxu0
  %v1313 = vadd.f32 %v1272, %v1312
  %v1314 = vpop.f32.mrf.mxu0
  %v1315 = vadd.f32 %v1274, %v1314
  %v1316 = vpop.f32.mrf.mxu0
  %v1317 = vpop.f32.mrf.mxu0
  %1318 = vdwg.mxu0
  %1319 = vmatprep.subr.bf16.mxu0 %v746
  %1320 = vmatpush1.bf16.msra.mxu0 %v745
  %1321 = vmatprep.subr.bf16.mxu0 %v744
  %1322 = vmatpush1.bf16.msra.mxu0 %v743
  %1323 = vmatprep.subr.bf16.mxu0 %v742
  %1324 = vmatpush1.bf16.msra.mxu0 %v741
  %1325 = vmatprep.subr.bf16.mxu0 %v740
  %1326 = vmatpush1.bf16.msra.mxu0 %v739
  %1327 = vmatprep.subr.bf16.mxu0 %v738
  %1328 = vmatpush1.bf16.msra.mxu0 %v737
  %1329 = vmatprep.subr.bf16.mxu0 %v736
  %1330 = vmatpush1.bf16.msra.mxu0 %v735
  %1331 = vmatprep.subr.bf16.mxu0 %v734
  %1332 = vmatpush1.bf16.msra.mxu0 %v733
  %1333 = vmatprep.subr.bf16.mxu0 %v732
  %1334 = vmatpush1.bf16.msra.mxu0 %v731
  %1335 = vmatprep.subr.bf16.mxu0 %v762
  %1336 = vmatpush2.bf16.msra.mxu0 %v761
  %1337 = vmatprep.subr.bf16.mxu0 %v760
  %1338 = vmatpush2.bf16.msra.mxu0 %v759
  %1339 = vmatprep.subr.bf16.mxu0 %v758
  %1340 = vmatpush2.bf16.msra.mxu0 %v757
  %1341 = vmatprep.subr.bf16.mxu0 %v756
  %1342 = vmatpush2.bf16.msra.mxu0 %v755
  %1343 = vmatprep.subr.bf16.mxu0 %v754
  %1344 = vmatpush2.bf16.msra.mxu0 %v753
  %1345 = vmatprep.subr.bf16.mxu0 %v752
  %1346 = vmatpush2.bf16.msra.mxu0 %v751
  %1347 = vmatprep.subr.bf16.mxu0 %v750
  %1348 = vmatpush2.bf16.msra.mxu0 %v749
  %1349 = vmatprep.subr.bf16.mxu0 %v748
  %1350 = vmatpush2.bf16.msra.mxu0 %v747
  %1351 = vmatprep.mubr.bf16.mxu0 %v1209
  %1352 = vmatmul.mubr.bf16.gmra.mxu0 %v1195
  %v1353 = vpop.f32.mrf.mxu0
  %v1354 = vadd.f32 %v1313, %v1353
  %v1355 = vpop.f32.mrf.mxu0
  %v1356 = vadd.f32 %v1315, %v1355
  %v1357 = vpop.f32.mrf.mxu0
  %v1358 = vpop.f32.mrf.mxu0
  %1359 = vdwg.mxu0
  %1360 = vmatprep.subr.bf16.mxu0 %v778
  %1361 = vmatpush1.bf16.msra.mxu0 %v777
  %1362 = vmatprep.subr.bf16.mxu0 %v776
  %1363 = vmatpush1.bf16.msra.mxu0 %v775
  %1364 = vmatprep.subr.bf16.mxu0 %v774
  %1365 = vmatpush1.bf16.msra.mxu0 %v773
  %1366 = vmatprep.subr.bf16.mxu0 %v772
  %1367 = vmatpush1.bf16.msra.mxu0 %v771
  %1368 = vmatprep.subr.bf16.mxu0 %v770
  %1369 = vmatpush1.bf16.msra.mxu0 %v769
  %1370 = vmatprep.subr.bf16.mxu0 %v768
  %1371 = vmatpush1.bf16.msra.mxu0 %v767
  %1372 = vmatprep.subr.bf16.mxu0 %v766
  %1373 = vmatpush1.bf16.msra.mxu0 %v765
  %1374 = vmatprep.subr.bf16.mxu0 %v764
  %1375 = vmatpush1.bf16.msra.mxu0 %v763
  %1376 = vmatprep.subr.bf16.mxu0 %v794
  %1377 = vmatpush2.bf16.msra.mxu0 %v793
  %1378 = vmatprep.subr.bf16.mxu0 %v792
  %1379 = vmatpush2.bf16.msra.mxu0 %v791
  %1380 = vmatprep.subr.bf16.mxu0 %v790
  %1381 = vmatpush2.bf16.msra.mxu0 %v789
  %1382 = vmatprep.subr.bf16.mxu0 %v788
  %1383 = vmatpush2.bf16.msra.mxu0 %v787
  %1384 = vmatprep.subr.bf16.mxu0 %v786
  %1385 = vmatpush2.bf16.msra.mxu0 %v785
  %1386 = vmatprep.subr.bf16.mxu0 %v784
  %1387 = vmatpush2.bf16.msra.mxu0 %v783
  %1388 = vmatprep.subr.bf16.mxu0 %v782
  %1389 = vmatpush2.bf16.msra.mxu0 %v781
  %1390 = vmatprep.subr.bf16.mxu0 %v780
  %1391 = vmatpush2.bf16.msra.mxu0 %v779
  %1392 = vmatprep.mubr.bf16.mxu0 %v1213
  %1393 = vmatmul.mubr.bf16.gmra.mxu0 %v1211
  %v1394 = vpop.f32.mrf.mxu0
  %v1395 = vadd.f32 %v1354, %v1394
  %v1396 = vpop.f32.mrf.mxu0
  %v1397 = vadd.f32 %v1356, %v1396
  %v1398 = vpop.f32.mrf.mxu0
  %v1399 = vpop.f32.mrf.mxu0
  %1400 = vdwg.mxu0
  %1401 = vmatprep.subr.bf16.mxu0 %v810
  %1402 = vmatpush1.bf16.msra.mxu0 %v809
  %1403 = vmatprep.subr.bf16.mxu0 %v808
  %1404 = vmatpush1.bf16.msra.mxu0 %v807
  %1405 = vmatprep.subr.bf16.mxu0 %v806
  %1406 = vmatpush1.bf16.msra.mxu0 %v805
  %1407 = vmatprep.subr.bf16.mxu0 %v804
  %1408 = vmatpush1.bf16.msra.mxu0 %v803
  %1409 = vmatprep.subr.bf16.mxu0 %v802
  %1410 = vmatpush1.bf16.msra.mxu0 %v801
  %1411 = vmatprep.subr.bf16.mxu0 %v800
  %1412 = vmatpush1.bf16.msra.mxu0 %v799
  %1413 = vmatprep.subr.bf16.mxu0 %v798
  %1414 = vmatpush1.bf16.msra.mxu0 %v797
  %1415 = vmatprep.subr.bf16.mxu0 %v796
  %1416 = vmatpush1.bf16.msra.mxu0 %v795
  %1417 = vmatprep.subr.bf16.mxu0 0
  %1418 = vmatpush2.bf16.msra.mxu0 0
  %1419 = vmatprep.subr.bf16.mxu0 0
  %1420 = vmatpush2.bf16.msra.mxu0 0
  %1421 = vmatprep.subr.bf16.mxu0 0
  %1422 = vmatpush2.bf16.msra.mxu0 0
  %1423 = vmatprep.subr.bf16.mxu0 0
  %1424 = vmatpush2.bf16.msra.mxu0 0
  %1425 = vmatprep.subr.bf16.mxu0 0
  %1426 = vmatpush2.bf16.msra.mxu0 0
  %1427 = vmatprep.subr.bf16.mxu0 0
  %1428 = vmatpush2.bf16.msra.mxu0 0
  %1429 = vmatprep.subr.bf16.mxu0 0
  %1430 = vmatpush2.bf16.msra.mxu0 0
  %1431 = vmatprep.subr.bf16.mxu0 0
  %1432 = vmatpush2.bf16.msra.mxu0 0
  %1433 = vmatprep.mubr.bf16.mxu0 0
  %1434 = vmatmul.mubr.bf16.gmra.mxu0 %v1227
  %v1435 = vpop.f32.mrf.mxu0
  %v1436 = vadd.f32 %v1395, %v1435
  %v1437 = vpop.f32.mrf.mxu0
  %v1438 = vadd.f32 %v1397, %v1437
  %v1439 = vpop.f32.mrf.mxu0
  %v1440 = vpop.f32.mrf.mxu0
  %1441 = vdwg.mxu0
  %s1442 = scalar_lea.vmem %s0, 18
  %v1443 = vld [vmem:[%s1442] sm:$0xff]
  %v1444 = vld [vmem:[%s1442 + $0x8] sm:$0x1]
  %v1447 = vcombine.high %v1443, %v1443
  %v1449 = vunpack.c.l.s4 1966171168
  %v1450 = vunpack.c.0.s8 %v1449
  %v1451 = vlaneseq
  %v1452 = vshrl.u32 %v1451, 7
  %v1453 = vsub.s32 %v1450, %v1452
  %v1454 = vrot.slane %v1443, %v1453
  %v1456 = vunpack.c.l.s4 1966171168
  %v1457 = vunpack.c.0.s8 %v1456
  %v1458 = vlaneseq
  %v1459 = vshrl.u32 %v1458, 7
  %v1460 = vsub.s32 %v1457, %v1459
  %v1461 = vrot.slane %v1447, %v1460
  %v1462 = vcombine.high %v1454, %v1454
  %v1463 = vcombine.high %v1461, %v1461
  %v1465 = vunpack.c.l.s4 1966171168
  %v1466 = vunpack.c.0.s8 %v1465
  %v1467 = vlaneseq
  %v1468 = vshrl.u32 %v1467, 7
  %v1469 = vsub.s32 %v1466, %v1468
  %v1470 = vrot.slane %v1454, %v1469
  %v1472 = vunpack.c.l.s4 1966171168
  %v1473 = vunpack.c.0.s8 %v1472
  %v1474 = vlaneseq
  %v1475 = vshrl.u32 %v1474, 7
  %v1476 = vsub.s32 %v1473, %v1475
  %v1477 = vrot.slane %v1461, %v1476
  %v1479 = vunpack.c.l.s4 1966171168
  %v1480 = vunpack.c.0.s8 %v1479
  %v1481 = vlaneseq
  %v1482 = vshrl.u32 %v1481, 7
  %v1483 = vsub.s32 %v1480, %v1482
  %v1484 = vrot.slane %v1462, %v1483
  %v1486 = vunpack.c.l.s4 1966171168
  %v1487 = vunpack.c.0.s8 %v1486
  %v1488 = vlaneseq
  %v1489 = vshrl.u32 %v1488, 7
  %v1490 = vsub.s32 %v1487, %v1489
  %v1491 = vrot.slane %v1463, %v1490
  %v1492 = vcombine.high %v1470, %v1470
  %v1493 = vcombine.high %v1477, %v1477
  %v1494 = vcombine.high %v1484, %v1484
  %v1495 = vcombine.high %v1491, %v1491
  %v1497 = vunpack.c.l.s4 1966171168
  %v1498 = vunpack.c.0.s8 %v1497
  %v1499 = vlaneseq
  %v1500 = vshrl.u32 %v1499, 7
  %v1501 = vsub.s32 %v1498, %v1500
  %v1502 = vrot.slane %v1444, %v1501
  %v1504 = vunpack.c.l.s4 1966171168
  %v1505 = vunpack.c.0.s8 %v1504
  %v1506 = vlaneseq
  %v1507 = vshrl.u32 %v1506, 7
  %v1508 = vsub.s32 %v1505, %v1507
  %v1509 = vrot.slane %v1502, %v1508
  %1519 = vmatprep.subr.bf16.mxu0 %v682
  %1520 = vmatpush1.bf16.msra.mxu0 %v681
  %1521 = vmatprep.subr.bf16.mxu0 %v680
  %1522 = vmatpush1.bf16.msra.mxu0 %v679
  %1523 = vmatprep.subr.bf16.mxu0 %v678
  %1524 = vmatpush1.bf16.msra.mxu0 %v677
  %1525 = vmatprep.subr.bf16.mxu0 %v676
  %1526 = vmatpush1.bf16.msra.mxu0 %v675
  %1527 = vmatprep.subr.bf16.mxu0 %v674
  %1528 = vmatpush1.bf16.msra.mxu0 %v673
  %1529 = vmatprep.subr.bf16.mxu0 %v672
  %1530 = vmatpush1.bf16.msra.mxu0 %v671
  %1531 = vmatprep.subr.bf16.mxu0 %v670
  %1532 = vmatpush1.bf16.msra.mxu0 %v669
  %1533 = vmatprep.subr.bf16.mxu0 %v668
  %1534 = vmatpush1.bf16.msra.mxu0 %v667
  %1535 = vmatprep.subr.bf16.mxu0 %v698
  %1536 = vmatpush2.bf16.msra.mxu0 %v697
  %1537 = vmatprep.subr.bf16.mxu0 %v696
  %1538 = vmatpush2.bf16.msra.mxu0 %v695
  %1539 = vmatprep.subr.bf16.mxu0 %v694
  %1540 = vmatpush2.bf16.msra.mxu0 %v693
  %1541 = vmatprep.subr.bf16.mxu0 %v692
  %1542 = vmatpush2.bf16.msra.mxu0 %v691
  %1543 = vmatprep.subr.bf16.mxu0 %v690
  %1544 = vmatpush2.bf16.msra.mxu0 %v689
  %1545 = vmatprep.subr.bf16.mxu0 %v688
  %1546 = vmatpush2.bf16.msra.mxu0 %v687
  %1547 = vmatprep.subr.bf16.mxu0 %v686
  %1548 = vmatpush2.bf16.msra.mxu0 %v685
  %1549 = vmatprep.subr.bf16.mxu0 %v684
  %1550 = vmatpush2.bf16.msra.mxu0 %v683
  %1551 = vmatprep.mubr.bf16.mxu0 %v1484
  %1552 = vmatmul.mubr.bf16.gmra.mxu0 %v1470
  %v1553 = vpop.f32.mrf.mxu0
  %v1554 = vadd.f32 0.0, %v1553
  %v1555 = vpop.f32.mrf.mxu0
  %v1556 = vadd.f32 0.0, %v1555
  %v1557 = vpop.f32.mrf.mxu0
  %v1558 = vpop.f32.mrf.mxu0
  %1559 = vdwg.mxu0
  %1560 = vmatprep.subr.bf16.mxu0 %v714
  %1561 = vmatpush1.bf16.msra.mxu0 %v713
  %1562 = vmatprep.subr.bf16.mxu0 %v712
  %1563 = vmatpush1.bf16.msra.mxu0 %v711
  %1564 = vmatprep.subr.bf16.mxu0 %v710
  %1565 = vmatpush1.bf16.msra.mxu0 %v709
  %1566 = vmatprep.subr.bf16.mxu0 %v708
  %1567 = vmatpush1.bf16.msra.mxu0 %v707
  %1568 = vmatprep.subr.bf16.mxu0 %v706
  %1569 = vmatpush1.bf16.msra.mxu0 %v705
  %1570 = vmatprep.subr.bf16.mxu0 %v704
  %1571 = vmatpush1.bf16.msra.mxu0 %v703
  %1572 = vmatprep.subr.bf16.mxu0 %v702
  %1573 = vmatpush1.bf16.msra.mxu0 %v701
  %1574 = vmatprep.subr.bf16.mxu0 %v700
  %1575 = vmatpush1.bf16.msra.mxu0 %v699
  %1576 = vmatprep.subr.bf16.mxu0 %v730
  %1577 = vmatpush2.bf16.msra.mxu0 %v729
  %1578 = vmatprep.subr.bf16.mxu0 %v728
  %1579 = vmatpush2.bf16.msra.mxu0 %v727
  %1580 = vmatprep.subr.bf16.mxu0 %v726
  %1581 = vmatpush2.bf16.msra.mxu0 %v725
  %1582 = vmatprep.subr.bf16.mxu0 %v724
  %1583 = vmatpush2.bf16.msra.mxu0 %v723
  %1584 = vmatprep.subr.bf16.mxu0 %v722
  %1585 = vmatpush2.bf16.msra.mxu0 %v721
  %1586 = vmatprep.subr.bf16.mxu0 %v720
  %1587 = vmatpush2.bf16.msra.mxu0 %v719
  %1588 = vmatprep.subr.bf16.mxu0 %v718
  %1589 = vmatpush2.bf16.msra.mxu0 %v717
  %1590 = vmatprep.subr.bf16.mxu0 %v716
  %1591 = vmatpush2.bf16.msra.mxu0 %v715
  %1592 = vmatprep.mubr.bf16.mxu0 %v1494
  %1593 = vmatmul.mubr.bf16.gmra.mxu0 %v1492
  %v1594 = vpop.f32.mrf.mxu0
  %v1595 = vadd.f32 %v1554, %v1594
  %v1596 = vpop.f32.mrf.mxu0
  %v1597 = vadd.f32 %v1556, %v1596
  %v1598 = vpop.f32.mrf.mxu0
  %v1599 = vpop.f32.mrf.mxu0
  %1600 = vdwg.mxu0
  %1601 = vmatprep.subr.bf16.mxu0 %v746
  %1602 = vmatpush1.bf16.msra.mxu0 %v745
  %1603 = vmatprep.subr.bf16.mxu0 %v744
  %1604 = vmatpush1.bf16.msra.mxu0 %v743
  %1605 = vmatprep.subr.bf16.mxu0 %v742
  %1606 = vmatpush1.bf16.msra.mxu0 %v741
  %1607 = vmatprep.subr.bf16.mxu0 %v740
  %1608 = vmatpush1.bf16.msra.mxu0 %v739
  %1609 = vmatprep.subr.bf16.mxu0 %v738
  %1610 = vmatpush1.bf16.msra.mxu0 %v737
  %1611 = vmatprep.subr.bf16.mxu0 %v736
  %1612 = vmatpush1.bf16.msra.mxu0 %v735
  %1613 = vmatprep.subr.bf16.mxu0 %v734
  %1614 = vmatpush1.bf16.msra.mxu0 %v733
  %1615 = vmatprep.subr.bf16.mxu0 %v732
  %1616 = vmatpush1.bf16.msra.mxu0 %v731
  %1617 = vmatprep.subr.bf16.mxu0 %v762
  %1618 = vmatpush2.bf16.msra.mxu0 %v761
  %1619 = vmatprep.subr.bf16.mxu0 %v760
  %1620 = vmatpush2.bf16.msra.mxu0 %v759
  %1621 = vmatprep.subr.bf16.mxu0 %v758
  %1622 = vmatpush2.bf16.msra.mxu0 %v757
  %1623 = vmatprep.subr.bf16.mxu0 %v756
  %1624 = vmatpush2.bf16.msra.mxu0 %v755
  %1625 = vmatprep.subr.bf16.mxu0 %v754
  %1626 = vmatpush2.bf16.msra.mxu0 %v753
  %1627 = vmatprep.subr.bf16.mxu0 %v752
  %1628 = vmatpush2.bf16.msra.mxu0 %v751
  %1629 = vmatprep.subr.bf16.mxu0 %v750
  %1630 = vmatpush2.bf16.msra.mxu0 %v749
  %1631 = vmatprep.subr.bf16.mxu0 %v748
  %1632 = vmatpush2.bf16.msra.mxu0 %v747
  %1633 = vmatprep.mubr.bf16.mxu0 %v1491
  %1634 = vmatmul.mubr.bf16.gmra.mxu0 %v1477
  %v1635 = vpop.f32.mrf.mxu0
  %v1636 = vadd.f32 %v1595, %v1635
  %v1637 = vpop.f32.mrf.mxu0
  %v1638 = vadd.f32 %v1597, %v1637
  %v1639 = vpop.f32.mrf.mxu0
  %v1640 = vpop.f32.mrf.mxu0
  %1641 = vdwg.mxu0
  %1642 = vmatprep.subr.bf16.mxu0 %v778
  %1643 = vmatpush1.bf16.msra.mxu0 %v777
  %1644 = vmatprep.subr.bf16.mxu0 %v776
  %1645 = vmatpush1.bf16.msra.mxu0 %v775
  %1646 = vmatprep.subr.bf16.mxu0 %v774
  %1647 = vmatpush1.bf16.msra.mxu0 %v773
  %1648 = vmatprep.subr.bf16.mxu0 %v772
  %1649 = vmatpush1.bf16.msra.mxu0 %v771
  %1650 = vmatprep.subr.bf16.mxu0 %v770
  %1651 = vmatpush1.bf16.msra.mxu0 %v769
  %1652 = vmatprep.subr.bf16.mxu0 %v768
  %1653 = vmatpush1.bf16.msra.mxu0 %v767
  %1654 = vmatprep.subr.bf16.mxu0 %v766
  %1655 = vmatpush1.bf16.msra.mxu0 %v765
  %1656 = vmatprep.subr.bf16.mxu0 %v764
  %1657 = vmatpush1.bf16.msra.mxu0 %v763
  %1658 = vmatprep.subr.bf16.mxu0 %v794
  %1659 = vmatpush2.bf16.msra.mxu0 %v793
  %1660 = vmatprep.subr.bf16.mxu0 %v792
  %1661 = vmatpush2.bf16.msra.mxu0 %v791
  %1662 = vmatprep.subr.bf16.mxu0 %v790
  %1663 = vmatpush2.bf16.msra.mxu0 %v789
  %1664 = vmatprep.subr.bf16.mxu0 %v788
  %1665 = vmatpush2.bf16.msra.mxu0 %v787
  %1666 = vmatprep.subr.bf16.mxu0 %v786
  %1667 = vmatpush2.bf16.msra.mxu0 %v785
  %1668 = vmatprep.subr.bf16.mxu0 %v784
  %1669 = vmatpush2.bf16.msra.mxu0 %v783
  %1670 = vmatprep.subr.bf16.mxu0 %v782
  %1671 = vmatpush2.bf16.msra.mxu0 %v781
  %1672 = vmatprep.subr.bf16.mxu0 %v780
  %1673 = vmatpush2.bf16.msra.mxu0 %v779
  %1674 = vmatprep.mubr.bf16.mxu0 %v1495
  %1675 = vmatmul.mubr.bf16.gmra.mxu0 %v1493
  %v1676 = vpop.f32.mrf.mxu0
  %v1677 = vadd.f32 %v1636, %v1676
  %v1678 = vpop.f32.mrf.mxu0
  %v1679 = vadd.f32 %v1638, %v1678
  %v1680 = vpop.f32.mrf.mxu0
  %v1681 = vpop.f32.mrf.mxu0
  %1682 = vdwg.mxu0
  %1683 = vmatprep.subr.bf16.mxu0 %v810
  %1684 = vmatpush1.bf16.msra.mxu0 %v809
  %1685 = vmatprep.subr.bf16.mxu0 %v808
  %1686 = vmatpush1.bf16.msra.mxu0 %v807
  %1687 = vmatprep.subr.bf16.mxu0 %v806
  %1688 = vmatpush1.bf16.msra.mxu0 %v805
  %1689 = vmatprep.subr.bf16.mxu0 %v804
  %1690 = vmatpush1.bf16.msra.mxu0 %v803
  %1691 = vmatprep.subr.bf16.mxu0 %v802
  %1692 = vmatpush1.bf16.msra.mxu0 %v801
  %1693 = vmatprep.subr.bf16.mxu0 %v800
  %1694 = vmatpush1.bf16.msra.mxu0 %v799
  %1695 = vmatprep.subr.bf16.mxu0 %v798
  %1696 = vmatpush1.bf16.msra.mxu0 %v797
  %1697 = vmatprep.subr.bf16.mxu0 %v796
  %1698 = vmatpush1.bf16.msra.mxu0 %v795
  %1699 = vmatprep.subr.bf16.mxu0 0
  %1700 = vmatpush2.bf16.msra.mxu0 0
  %1701 = vmatprep.subr.bf16.mxu0 0
  %1702 = vmatpush2.bf16.msra.mxu0 0
  %1703 = vmatprep.subr.bf16.mxu0 0
  %1704 = vmatpush2.bf16.msra.mxu0 0
  %1705 = vmatprep.subr.bf16.mxu0 0
  %1706 = vmatpush2.bf16.msra.mxu0 0
  %1707 = vmatprep.subr.bf16.mxu0 0
  %1708 = vmatpush2.bf16.msra.mxu0 0
  %1709 = vmatprep.subr.bf16.mxu0 0
  %1710 = vmatpush2.bf16.msra.mxu0 0
  %1711 = vmatprep.subr.bf16.mxu0 0
  %1712 = vmatpush2.bf16.msra.mxu0 0
  %1713 = vmatprep.subr.bf16.mxu0 0
  %1714 = vmatpush2.bf16.msra.mxu0 0
  %1715 = vmatprep.mubr.bf16.mxu0 0
  %1716 = vmatmul.mubr.bf16.gmra.mxu0 %v1509
  %v1717 = vpop.f32.mrf.mxu0
  %v1718 = vadd.f32 %v1677, %v1717
  %v1719 = vpop.f32.mrf.mxu0
  %v1720 = vadd.f32 %v1679, %v1719
  %v1721 = vpop.f32.mrf.mxu0
  %v1722 = vpop.f32.mrf.mxu0
  %1723 = vdwg.mxu0
  %s1724 = scalar_lea.vmem %s0, 27
  %v1725 = vld [vmem:[%s1724] sm:$0xff]
  %v1726 = vld [vmem:[%s1724 + $0x8] sm:$0x1]
  %v1729 = vcombine.high %v1725, %v1725
  %v1731 = vunpack.c.l.s4 1966171168
  %v1732 = vunpack.c.0.s8 %v1731
  %v1733 = vlaneseq
  %v1734 = vshrl.u32 %v1733, 7
  %v1735 = vsub.s32 %v1732, %v1734
  %v1736 = vrot.slane %v1725, %v1735
  %v1738 = vunpack.c.l.s4 1966171168
  %v1739 = vunpack.c.0.s8 %v1738
  %v1740 = vlaneseq
  %v1741 = vshrl.u32 %v1740, 7
  %v1742 = vsub.s32 %v1739, %v1741
  %v1743 = vrot.slane %v1729, %v1742
  %v1744 = vcombine.high %v1736, %v1736
  %v1745 = vcombine.high %v1743, %v1743
  %v1747 = vunpack.c.l.s4 1966171168
  %v1748 = vunpack.c.0.s8 %v1747
  %v1749 = vlaneseq
  %v1750 = vshrl.u32 %v1749, 7
  %v1751 = vsub.s32 %v1748, %v1750
  %v1752 = vrot.slane %v1736, %v1751
  %v1754 = vunpack.c.l.s4 1966171168
  %v1755 = vunpack.c.0.s8 %v1754
  %v1756 = vlaneseq
  %v1757 = vshrl.u32 %v1756, 7
  %v1758 = vsub.s32 %v1755, %v1757
  %v1759 = vrot.slane %v1743, %v1758
  %v1761 = vunpack.c.l.s4 1966171168
  %v1762 = vunpack.c.0.s8 %v1761
  %v1763 = vlaneseq
  %v1764 = vshrl.u32 %v1763, 7
  %v1765 = vsub.s32 %v1762, %v1764
  %v1766 = vrot.slane %v1744, %v1765
  %v1768 = vunpack.c.l.s4 1966171168
  %v1769 = vunpack.c.0.s8 %v1768
  %v1770 = vlaneseq
  %v1771 = vshrl.u32 %v1770, 7
  %v1772 = vsub.s32 %v1769, %v1771
  %v1773 = vrot.slane %v1745, %v1772
  %v1774 = vcombine.high %v1752, %v1752
  %v1775 = vcombine.high %v1759, %v1759
  %v1776 = vcombine.high %v1766, %v1766
  %v1777 = vcombine.high %v1773, %v1773
  %v1779 = vunpack.c.l.s4 1966171168
  %v1780 = vunpack.c.0.s8 %v1779
  %v1781 = vlaneseq
  %v1782 = vshrl.u32 %v1781, 7
  %v1783 = vsub.s32 %v1780, %v1782
  %v1784 = vrot.slane %v1726, %v1783
  %v1786 = vunpack.c.l.s4 1966171168
  %v1787 = vunpack.c.0.s8 %v1786
  %v1788 = vlaneseq
  %v1789 = vshrl.u32 %v1788, 7
  %v1790 = vsub.s32 %v1787, %v1789
  %v1791 = vrot.slane %v1784, %v1790
  %1801 = vmatprep.subr.bf16.mxu0 %v682
  %1802 = vmatpush1.bf16.msra.mxu0 %v681
  %1803 = vmatprep.subr.bf16.mxu0 %v680
  %1804 = vmatpush1.bf16.msra.mxu0 %v679
  %1805 = vmatprep.subr.bf16.mxu0 %v678
  %1806 = vmatpush1.bf16.msra.mxu0 %v677
  %1807 = vmatprep.subr.bf16.mxu0 %v676
  %1808 = vmatpush1.bf16.msra.mxu0 %v675
  %1809 = vmatprep.subr.bf16.mxu0 %v674
  %1810 = vmatpush1.bf16.msra.mxu0 %v673
  %1811 = vmatprep.subr.bf16.mxu0 %v672
  %1812 = vmatpush1.bf16.msra.mxu0 %v671
  %1813 = vmatprep.subr.bf16.mxu0 %v670
  %1814 = vmatpush1.bf16.msra.mxu0 %v669
  %1815 = vmatprep.subr.bf16.mxu0 %v668
  %1816 = vmatpush1.bf16.msra.mxu0 %v667
  %1817 = vmatprep.subr.bf16.mxu0 %v698
  %1818 = vmatpush2.bf16.msra.mxu0 %v697
  %1819 = vmatprep.subr.bf16.mxu0 %v696
  %1820 = vmatpush2.bf16.msra.mxu0 %v695
  %1821 = vmatprep.subr.bf16.mxu0 %v694
  %1822 = vmatpush2.bf16.msra.mxu0 %v693
  %1823 = vmatprep.subr.bf16.mxu0 %v692
  %1824 = vmatpush2.bf16.msra.mxu0 %v691
  %1825 = vmatprep.subr.bf16.mxu0 %v690
  %1826 = vmatpush2.bf16.msra.mxu0 %v689
  %1827 = vmatprep.subr.bf16.mxu0 %v688
  %1828 = vmatpush2.bf16.msra.mxu0 %v687
  %1829 = vmatprep.subr.bf16.mxu0 %v686
  %1830 = vmatpush2.bf16.msra.mxu0 %v685
  %1831 = vmatprep.subr.bf16.mxu0 %v684
  %1832 = vmatpush2.bf16.msra.mxu0 %v683
  %1833 = vmatprep.mubr.bf16.mxu0 %v1766
  %1834 = vmatmul.mubr.bf16.gmra.mxu0 %v1752
  %v1835 = vpop.f32.mrf.mxu0
  %v1836 = vadd.f32 0.0, %v1835
  %v1837 = vpop.f32.mrf.mxu0
  %v1838 = vadd.f32 0.0, %v1837
  %v1839 = vpop.f32.mrf.mxu0
  %v1840 = vpop.f32.mrf.mxu0
  %1841 = vdwg.mxu0
  %1842 = vmatprep.subr.bf16.mxu0 %v714
  %1843 = vmatpush1.bf16.msra.mxu0 %v713
  %1844 = vmatprep.subr.bf16.mxu0 %v712
  %1845 = vmatpush1.bf16.msra.mxu0 %v711
  %1846 = vmatprep.subr.bf16.mxu0 %v710
  %1847 = vmatpush1.bf16.msra.mxu0 %v709
  %1848 = vmatprep.subr.bf16.mxu0 %v708
  %1849 = vmatpush1.bf16.msra.mxu0 %v707
  %1850 = vmatprep.subr.bf16.mxu0 %v706
  %1851 = vmatpush1.bf16.msra.mxu0 %v705
  %1852 = vmatprep.subr.bf16.mxu0 %v704
  %1853 = vmatpush1.bf16.msra.mxu0 %v703
  %1854 = vmatprep.subr.bf16.mxu0 %v702
  %1855 = vmatpush1.bf16.msra.mxu0 %v701
  %1856 = vmatprep.subr.bf16.mxu0 %v700
  %1857 = vmatpush1.bf16.msra.mxu0 %v699
  %1858 = vmatprep.subr.bf16.mxu0 %v730
  %1859 = vmatpush2.bf16.msra.mxu0 %v729
  %1860 = vmatprep.subr.bf16.mxu0 %v728
  %1861 = vmatpush2.bf16.msra.mxu0 %v727
  %1862 = vmatprep.subr.bf16.mxu0 %v726
  %1863 = vmatpush2.bf16.msra.mxu0 %v725
  %1864 = vmatprep.subr.bf16.mxu0 %v724
  %1865 = vmatpush2.bf16.msra.mxu0 %v723
  %1866 = vmatprep.subr.bf16.mxu0 %v722
  %1867 = vmatpush2.bf16.msra.mxu0 %v721
  %1868 = vmatprep.subr.bf16.mxu0 %v720
  %1869 = vmatpush2.bf16.msra.mxu0 %v719
  %1870 = vmatprep.subr.bf16.mxu0 %v718
  %1871 = vmatpush2.bf16.msra.mxu0 %v717
  %1872 = vmatprep.subr.bf16.mxu0 %v716
  %1873 = vmatpush2.bf16.msra.mxu0 %v715
  %1874 = vmatprep.mubr.bf16.mxu0 %v1776
  %1875 = vmatmul.mubr.bf16.gmra.mxu0 %v1774
  %v1876 = vpop.f32.mrf.mxu0
  %v1877 = vadd.f32 %v1836, %v1876
  %v1878 = vpop.f32.mrf.mxu0
  %v1879 = vadd.f32 %v1838, %v1878
  %v1880 = vpop.f32.mrf.mxu0
  %v1881 = vpop.f32.mrf.mxu0
  %1882 = vdwg.mxu0
  %1883 = vmatprep.subr.bf16.mxu0 %v746
  %1884 = vmatpush1.bf16.msra.mxu0 %v745
  %1885 = vmatprep.subr.bf16.mxu0 %v744
  %1886 = vmatpush1.bf16.msra.mxu0 %v743
  %1887 = vmatprep.subr.bf16.mxu0 %v742
  %1888 = vmatpush1.bf16.msra.mxu0 %v741
  %1889 = vmatprep.subr.bf16.mxu0 %v740
  %1890 = vmatpush1.bf16.msra.mxu0 %v739
  %1891 = vmatprep.subr.bf16.mxu0 %v738
  %1892 = vmatpush1.bf16.msra.mxu0 %v737
  %1893 = vmatprep.subr.bf16.mxu0 %v736
  %1894 = vmatpush1.bf16.msra.mxu0 %v735
  %1895 = vmatprep.subr.bf16.mxu0 %v734
  %1896 = vmatpush1.bf16.msra.mxu0 %v733
  %1897 = vmatprep.subr.bf16.mxu0 %v732
  %1898 = vmatpush1.bf16.msra.mxu0 %v731
  %1899 = vmatprep.subr.bf16.mxu0 %v762
  %1900 = vmatpush2.bf16.msra.mxu0 %v761
  %1901 = vmatprep.subr.bf16.mxu0 %v760
  %1902 = vmatpush2.bf16.msra.mxu0 %v759
  %1903 = vmatprep.subr.bf16.mxu0 %v758
  %1904 = vmatpush2.bf16.msra.mxu0 %v757
  %1905 = vmatprep.subr.bf16.mxu0 %v756
  %1906 = vmatpush2.bf16.msra.mxu0 %v755
  %1907 = vmatprep.subr.bf16.mxu0 %v754
  %1908 = vmatpush2.bf16.msra.mxu0 %v753
  %1909 = vmatprep.subr.bf16.mxu0 %v752
  %1910 = vmatpush2.bf16.msra.mxu0 %v751
  %1911 = vmatprep.subr.bf16.mxu0 %v750
  %1912 = vmatpush2.bf16.msra.mxu0 %v749
  %1913 = vmatprep.subr.bf16.mxu0 %v748
  %1914 = vmatpush2.bf16.msra.mxu0 %v747
  %1915 = vmatprep.mubr.bf16.mxu0 %v1773
  %1916 = vmatmul.mubr.bf16.gmra.mxu0 %v1759
  %v1917 = vpop.f32.mrf.mxu0
  %v1918 = vadd.f32 %v1877, %v1917
  %v1919 = vpop.f32.mrf.mxu0
  %v1920 = vadd.f32 %v1879, %v1919
  %v1921 = vpop.f32.mrf.mxu0
  %v1922 = vpop.f32.mrf.mxu0
  %1923 = vdwg.mxu0
  %1924 = vmatprep.subr.bf16.mxu0 %v778
  %1925 = vmatpush1.bf16.msra.mxu0 %v777
  %1926 = vmatprep.subr.bf16.mxu0 %v776
  %1927 = vmatpush1.bf16.msra.mxu0 %v775
  %1928 = vmatprep.subr.bf16.mxu0 %v774
  %1929 = vmatpush1.bf16.msra.mxu0 %v773
  %1930 = vmatprep.subr.bf16.mxu0 %v772
  %1931 = vmatpush1.bf16.msra.mxu0 %v771
  %1932 = vmatprep.subr.bf16.mxu0 %v770
  %1933 = vmatpush1.bf16.msra.mxu0 %v769
  %1934 = vmatprep.subr.bf16.mxu0 %v768
  %1935 = vmatpush1.bf16.msra.mxu0 %v767
  %1936 = vmatprep.subr.bf16.mxu0 %v766
  %1937 = vmatpush1.bf16.msra.mxu0 %v765
  %1938 = vmatprep.subr.bf16.mxu0 %v764
  %1939 = vmatpush1.bf16.msra.mxu0 %v763
  %1940 = vmatprep.subr.bf16.mxu0 %v794
  %1941 = vmatpush2.bf16.msra.mxu0 %v793
  %1942 = vmatprep.subr.bf16.mxu0 %v792
  %1943 = vmatpush2.bf16.msra.mxu0 %v791
  %1944 = vmatprep.subr.bf16.mxu0 %v790
  %1945 = vmatpush2.bf16.msra.mxu0 %v789
  %1946 = vmatprep.subr.bf16.mxu0 %v788
  %1947 = vmatpush2.bf16.msra.mxu0 %v787
  %1948 = vmatprep.subr.bf16.mxu0 %v786
  %1949 = vmatpush2.bf16.msra.mxu0 %v785
  %1950 = vmatprep.subr.bf16.mxu0 %v784
  %1951 = vmatpush2.bf16.msra.mxu0 %v783
  %1952 = vmatprep.subr.bf16.mxu0 %v782
  %1953 = vmatpush2.bf16.msra.mxu0 %v781
  %1954 = vmatprep.subr.bf16.mxu0 %v780
  %1955 = vmatpush2.bf16.msra.mxu0 %v779
  %1956 = vmatprep.mubr.bf16.mxu0 %v1777
  %1957 = vmatmul.mubr.bf16.gmra.mxu0 %v1775
  %v1958 = vpop.f32.mrf.mxu0
  %v1959 = vadd.f32 %v1918, %v1958
  %v1960 = vpop.f32.mrf.mxu0
  %v1961 = vadd.f32 %v1920, %v1960
  %v1962 = vpop.f32.mrf.mxu0
  %v1963 = vpop.f32.mrf.mxu0
  %1964 = vdwg.mxu0
  %1965 = vmatprep.subr.bf16.mxu0 %v810
  %1966 = vmatpush1.bf16.msra.mxu0 %v809
  %1967 = vmatprep.subr.bf16.mxu0 %v808
  %1968 = vmatpush1.bf16.msra.mxu0 %v807
  %1969 = vmatprep.subr.bf16.mxu0 %v806
  %1970 = vmatpush1.bf16.msra.mxu0 %v805
  %1971 = vmatprep.subr.bf16.mxu0 %v804
  %1972 = vmatpush1.bf16.msra.mxu0 %v803
  %1973 = vmatprep.subr.bf16.mxu0 %v802
  %1974 = vmatpush1.bf16.msra.mxu0 %v801
  %1975 = vmatprep.subr.bf16.mxu0 %v800
  %1976 = vmatpush1.bf16.msra.mxu0 %v799
  %1977 = vmatprep.subr.bf16.mxu0 %v798
  %1978 = vmatpush1.bf16.msra.mxu0 %v797
  %1979 = vmatprep.subr.bf16.mxu0 %v796
  %1980 = vmatpush1.bf16.msra.mxu0 %v795
  %1981 = vmatprep.subr.bf16.mxu0 0
  %1982 = vmatpush2.bf16.msra.mxu0 0
  %1983 = vmatprep.subr.bf16.mxu0 0
  %1984 = vmatpush2.bf16.msra.mxu0 0
  %1985 = vmatprep.subr.bf16.mxu0 0
  %1986 = vmatpush2.bf16.msra.mxu0 0
  %1987 = vmatprep.subr.bf16.mxu0 0
  %1988 = vmatpush2.bf16.msra.mxu0 0
  %1989 = vmatprep.subr.bf16.mxu0 0
  %1990 = vmatpush2.bf16.msra.mxu0 0
  %1991 = vmatprep.subr.bf16.mxu0 0
  %1992 = vmatpush2.bf16.msra.mxu0 0
  %1993 = vmatprep.subr.bf16.mxu0 0
  %1994 = vmatpush2.bf16.msra.mxu0 0
  %1995 = vmatprep.subr.bf16.mxu0 0
  %1996 = vmatpush2.bf16.msra.mxu0 0
  %1997 = vmatprep.mubr.bf16.mxu0 0
  %1998 = vmatmul.mubr.bf16.gmra.mxu0 %v1791
  %v1999 = vpop.f32.mrf.mxu0
  %v2000 = vadd.f32 %v1959, %v1999
  %v2001 = vpop.f32.mrf.mxu0
  %v2002 = vadd.f32 %v1961, %v2001
  %v2003 = vpop.f32.mrf.mxu0
  %v2004 = vpop.f32.mrf.mxu0
  %2005 = vdwg.mxu0
  %v2006 = vmax.f32 %v1154, %v1436
  %v2007 = vmax.f32 %v1156, %v1438
  %v2008 = vmax.f32 %v2006, %v1718
  %v2009 = vmax.f32 %v2007, %v1720
  %v2010 = vmax.f32 %v2008, %v2000
  %v2011 = vmax.f32 %v2009, %v2002
  %v2012 = vld [vmem:[%s2] sm:$0x3]
  %v2014 = vlaneseq
  %v2015 = vshrl.u32 %v2014, 7
  %v2016 = vsub.s32 0, %v2015
  %v2017 = vrot.slane %v2012, %v2016
  %v2018 = vlaneseq
  %v2019 = vshrl.u32 %v2018, 7
  %v2020 = vsub.s32 1, %v2019
  %v2021 = vrot.slane %v2012, %v2020
  %v2024 = vadd.f32 %v2010, %v2017
  %v2025 = vadd.f32 %v2011, %v2021
  %v2026 = vmax.f32 %v2024, 0.0
  %v2027 = vmax.f32 %v2025, 0.0
  %v2030 = vcombine.low %v2026, %v2027
  %v2032 = vunpack.c.l.s4 1983009808
  %v2033 = vunpack.c.0.s8 %v2032
  %v2034 = vlaneseq
  %v2035 = vshrl.u32 %v2034, 7
  %v2036 = vsub.s32 %v2033, %v2035
  %v2037 = vrot.slane %v2030, %v2036
  %2039 = vst [vmem:[%s3] sm:$0xf] %v2037
  // Predicated region
  $region14: #{forward.10} parent=0 // pred_check
    _
  $region15: #{forward.10} parent=0 // pred_check_branch
    %2041 = sbr.rel (0) target = $region17
  $region16: #{forward.10} parent=0 // pred_region
    _
  $region17: #{forward.10} parent=0 // pred_fallthru
    _
  // Predicated region
  $region18: #{forward.10} parent=0 // pred_check
    _
  $region19: #{forward.10} parent=0 // pred_check_branch
    %2043 = sbr.rel (0) target = $region21
  $region20: #{forward.10} parent=0 // pred_region
    _
  $region21: #{forward.10} parent=0 // pred_fallthru
    _

// kernel: forward.11
$region0: #{forward.11}
  #allocation0 [shape = 'u32[]', space=smem, size = 0x4, offset = 0x4, fixed_abs, tag = 'smem constant byte address 0x4 - core index']
  #allocation1 [shape = 'u32[144,128]{1,0:T(1,128)}', space=vmem, size = 0x12000, scoped, tag = 'internal scratch']
  %s0 = inlined_call_operand.vmem [shape: bf16[2,256], index: 0, kind: input, shape index: {}]
  %s1 = inlined_call_operand.vmem [shape: bf16[256,128], index: 1, kind: input, shape index: {}]
  %s2 = inlined_call_operand.vmem [shape: f32[1,128], index: 2, kind: input, shape index: {}]
  %s3 = inlined_call_operand.vmem [shape: bf16[128,2], index: 3, kind: input, shape index: {}]
  %s4 = inlined_call_operand.vmem [shape: f32[1,2], index: 4, kind: input, shape index: {}]
  %s5 = inlined_call_operand.hbm [shape: f32[2,2], index: 5, kind: output, shape index: {}]
  %s6 = sld [smem:[#allocation0]]
  $region30: #{forward.11} parent=0
    _
  %s8 = ssub.s32 1, %s6
  %s9 = scalar_select 0, %s8, %s6
  $region1: #{forward.11} parent=0
    #allocation2 [shape = 'u8[1024]{0}', space=vmem, size = 0x400, scoped, tag = 'output window, operand 0, single buffered']
    #allocation3 [shape = 's32[1]{0}', space=sflag, size = 0x4, scoped, tag = 'scoped memory for forward.11']
    %10 = vsyncpa [#allocation3], 0
    // Predicated region
    $region2: #{forward.11} parent=1 // pred_check
      _
    $region3: #{forward.11} parent=1 // pred_check_branch
      %12 = sbr.rel (0) target = $region5
    $region4: #{forward.11} parent=1 // pred_region
      _
    $region5: #{forward.11} parent=1 // pred_fallthru
      _
    // Predicated region
    $region6: #{forward.11} parent=1 // pred_check
      _
    $region7: #{forward.11} parent=1 // pred_check_branch
      %14 = sbr.rel (0) target = $region9
    $region8: #{forward.11} parent=1 // pred_region
      _
    $region9: #{forward.11} parent=1 // pred_fallthru
      _
    // Predicated region
    $region10: #{forward.11} parent=1 // pred_check
      _
    $region11: #{forward.11} parent=1 // pred_check_branch
      %16 = sbr.rel (0) target = $region13
    $region12: #{forward.11} parent=1 // pred_region
      _
    $region13: #{forward.11} parent=1 // pred_fallthru
      _
    // Predicated region
    $region14: #{forward.11} parent=1 // pred_check
      _
    $region15: #{forward.11} parent=1 // pred_check_branch
      %18 = sbr.rel (0) target = $region17
    $region16: #{forward.11} parent=1 // pred_region
      _
    $region17: #{forward.11} parent=1 // pred_fallthru
      _
    // Predicated region
    $region18: #{forward.11} parent=1 // pred_check
      _
    $region19: #{forward.11} parent=1 // pred_check_branch
      %20 = sbr.rel (0) target = $region21
    $region20: #{forward.11} parent=1 // pred_region
      _
    $region21: #{forward.11} parent=1 // pred_fallthru
      _
    %v22 = vld [vmem:[%s0] sm:$0x3]
    %v23 = vld [vmem:[%s1] sm:$0xf]
    %v24 = vld [vmem:[%s1 + $0x4] sm:$0xf]
    %v25 = vld [vmem:[%s1 + $0x8] sm:$0xf]
    %v26 = vld [vmem:[%s1 + $0xc] sm:$0xf]
    %v27 = vld [vmem:[%s1 + $0x10] sm:$0xf]
    %v28 = vld [vmem:[%s1 + $0x14] sm:$0xf]
    %v29 = vld [vmem:[%s1 + $0x18] sm:$0xf]
    %v30 = vld [vmem:[%s1 + $0x1c] sm:$0xf]
    %v31 = vld [vmem:[%s1 + $0x20] sm:$0xf]
    %v32 = vld [vmem:[%s1 + $0x24] sm:$0xf]
    %v33 = vld [vmem:[%s1 + $0x28] sm:$0xf]
    %v34 = vld [vmem:[%s1 + $0x2c] sm:$0xf]
    %v35 = vld [vmem:[%s1 + $0x30] sm:$0xf]
    %v36 = vld [vmem:[%s1 + $0x34] sm:$0xf]
    %v37 = vld [vmem:[%s1 + $0x38] sm:$0xf]
    %v38 = vld [vmem:[%s1 + $0x3c] sm:$0xf]
    %v39 = vld [vmem:[%s1 + $0x40] sm:$0xf]
    %v40 = vld [vmem:[%s1 + $0x44] sm:$0xf]
    %v41 = vld [vmem:[%s1 + $0x48] sm:$0xf]
    %v42 = vld [vmem:[%s1 + $0x4c] sm:$0xf]
    %v43 = vld [vmem:[%s1 + $0x50] sm:$0xf]
    %v44 = vld [vmem:[%s1 + $0x54] sm:$0xf]
    %v45 = vld [vmem:[%s1 + $0x58] sm:$0xf]
    %v46 = vld [vmem:[%s1 + $0x5c] sm:$0xf]
    %v47 = vld [vmem:[%s1 + $0x60] sm:$0xf]
    %v48 = vld [vmem:[%s1 + $0x64] sm:$0xf]
    %v49 = vld [vmem:[%s1 + $0x68] sm:$0xf]
    %v50 = vld [vmem:[%s1 + $0x6c] sm:$0xf]
    %v51 = vld [vmem:[%s1 + $0x70] sm:$0xf]
    %v52 = vld [vmem:[%s1 + $0x74] sm:$0xf]
    %v53 = vld [vmem:[%s1 + $0x78] sm:$0xf]
    %v54 = vld [vmem:[%s1 + $0x7c] sm:$0xf]
    %v55 = vld [vmem:[%s2] sm:$0x1]
    %v57 = vlaneseq
    %v58 = vshrl.u32 %v57, 7
    %v59 = vsub.s32 0, %v58
    %v60 = vrot.slane %v55, %v59
    %v64 = vunpack.c.l.s4 1966171168
    %v65 = vunpack.c.0.s8 %v64
    %v66 = vlaneseq
    %v67 = vshrl.u32 %v66, 7
    %v68 = vsub.s32 %v65, %v67
    %v69 = vrot.slane %v22, %v68
    %v70 = vcombine.high %v69, %v69
    %v72 = vunpack.c.l.s4 1966171168
    %v73 = vunpack.c.0.s8 %v72
    %v74 = vlaneseq
    %v75 = vshrl.u32 %v74, 7
    %v76 = vsub.s32 %v73, %v75
    %v77 = vrot.slane %v69, %v76
    %v79 = vunpack.c.l.s4 1966171168
    %v80 = vunpack.c.0.s8 %v79
    %v81 = vlaneseq
    %v82 = vshrl.u32 %v81, 7
    %v83 = vsub.s32 %v80, %v82
    %v84 = vrot.slane %v70, %v83
    %v119 = vunpack.c.l.b16 %v23
    %v120 = vunpack.c.l.b16 %v24
    %v121 = vunpack.c.l.b16 %v25
    %v122 = vunpack.c.l.b16 %v26
    %v123 = vunpack.c.l.b16 %v27
    %v124 = vunpack.c.l.b16 %v28
    %v125 = vunpack.c.l.b16 %v29
    %v126 = vunpack.c.l.b16 %v30
    %v127 = vunpack.c.l.b16 %v31
    %v128 = vunpack.c.l.b16 %v32
    %v129 = vunpack.c.l.b16 %v33
    %v130 = vunpack.c.l.b16 %v34
    %v131 = vunpack.c.l.b16 %v35
    %v132 = vunpack.c.l.b16 %v36
    %v133 = vunpack.c.l.b16 %v37
    %v134 = vunpack.c.l.b16 %v38
    %v135 = vunpack.c.l.b16 %v39
    %v136 = vunpack.c.l.b16 %v40
    %v137 = vunpack.c.l.b16 %v41
    %v138 = vunpack.c.l.b16 %v42
    %v139 = vunpack.c.l.b16 %v43
    %v140 = vunpack.c.l.b16 %v44
    %v141 = vunpack.c.l.b16 %v45
    %v142 = vunpack.c.l.b16 %v46
    %v143 = vunpack.c.l.b16 %v47
    %v144 = vunpack.c.l.b16 %v48
    %v145 = vunpack.c.l.b16 %v49
    %v146 = vunpack.c.l.b16 %v50
    %v147 = vunpack.c.l.b16 %v51
    %v148 = vunpack.c.l.b16 %v52
    %v149 = vunpack.c.l.b16 %v53
    %v150 = vunpack.c.l.b16 %v54
    %v151 = vpack.c.b16 %v120, %v119
    %v152 = vpack.c.b16 %v122, %v121
    %v153 = vpack.c.b16 %v124, %v123
    %v154 = vpack.c.b16 %v126, %v125
    %v155 = vpack.c.b16 %v128, %v127
    %v156 = vpack.c.b16 %v130, %v129
    %v157 = vpack.c.b16 %v132, %v131
    %v158 = vpack.c.b16 %v134, %v133
    %v159 = vpack.c.b16 %v136, %v135
    %v160 = vpack.c.b16 %v138, %v137
    %v161 = vpack.c.b16 %v140, %v139
    %v162 = vpack.c.b16 %v142, %v141
    %v163 = vpack.c.b16 %v144, %v143
    %v164 = vpack.c.b16 %v146, %v145
    %v165 = vpack.c.b16 %v148, %v147
    %v166 = vpack.c.b16 %v150, %v149
    %183 = vmatprep.subr.bf16.mxu0 0
    %184 = vmatpush1.bf16.msra.mxu0 %v158
    %185 = vmatprep.subr.bf16.mxu0 0
    %186 = vmatpush1.bf16.msra.mxu0 %v157
    %187 = vmatprep.subr.bf16.mxu0 0
    %188 = vmatpush1.bf16.msra.mxu0 %v156
    %189 = vmatprep.subr.bf16.mxu0 0
    %190 = vmatpush1.bf16.msra.mxu0 %v155
    %191 = vmatprep.subr.bf16.mxu0 0
    %192 = vmatpush1.bf16.msra.mxu0 %v154
    %193 = vmatprep.subr.bf16.mxu0 0
    %194 = vmatpush1.bf16.msra.mxu0 %v153
    %195 = vmatprep.subr.bf16.mxu0 0
    %196 = vmatpush1.bf16.msra.mxu0 %v152
    %197 = vmatprep.subr.bf16.mxu0 0
    %198 = vmatpush1.bf16.msra.mxu0 %v151
    %199 = vmatprep.subr.bf16.mxu0 0
    %200 = vmatpush2.bf16.msra.mxu0 %v166
    %201 = vmatprep.subr.bf16.mxu0 0
    %202 = vmatpush2.bf16.msra.mxu0 %v165
    %203 = vmatprep.subr.bf16.mxu0 0
    %204 = vmatpush2.bf16.msra.mxu0 %v164
    %205 = vmatprep.subr.bf16.mxu0 0
    %206 = vmatpush2.bf16.msra.mxu0 %v163
    %207 = vmatprep.subr.bf16.mxu0 0
    %208 = vmatpush2.bf16.msra.mxu0 %v162
    %209 = vmatprep.subr.bf16.mxu0 0
    %210 = vmatpush2.bf16.msra.mxu0 %v161
    %211 = vmatprep.subr.bf16.mxu0 0
    %212 = vmatpush2.bf16.msra.mxu0 %v160
    %213 = vmatprep.subr.bf16.mxu0 0
    %214 = vmatpush2.bf16.msra.mxu0 %v159
    %215 = vmatprep.mubr.bf16.mxu0 %v84
    %216 = vmatmul.mubr.bf16.gmra.mxu0 %v77
    %v217 = vpop.f32.mrf.mxu0
    %v218 = vadd.f32 %v60, %v217
    %v219 = vpop.f32.mrf.mxu0
    %v220 = vpop.f32.mrf.mxu0
    %v221 = vpop.f32.mrf.mxu0
    %222 = vdwg.mxu0
    %v223 = vmax.f32 %v218, 0.0
    %v224 = vpack.c.bf16 %v223, %v223
    %v225 = vld [vmem:[%s3] sm:$0xf]
    %v226 = vld [vmem:[%s3 + $0x4] sm:$0xf]
    %v227 = vld [vmem:[%s3 + $0x8] sm:$0xf]
    %v228 = vld [vmem:[%s3 + $0xc] sm:$0xf]
    %v229 = vld [vmem:[%s3 + $0x10] sm:$0xf]
    %v230 = vld [vmem:[%s3 + $0x14] sm:$0xf]
    %v231 = vld [vmem:[%s3 + $0x18] sm:$0xf]
    %v232 = vld [vmem:[%s3 + $0x1c] sm:$0xf]
    %v233 = vld [vmem:[%s3 + $0x20] sm:$0xf]
    %v234 = vld [vmem:[%s3 + $0x24] sm:$0xf]
    %v235 = vld [vmem:[%s3 + $0x28] sm:$0xf]
    %v236 = vld [vmem:[%s3 + $0x2c] sm:$0xf]
    %v237 = vld [vmem:[%s3 + $0x30] sm:$0xf]
    %v238 = vld [vmem:[%s3 + $0x34] sm:$0xf]
    %v239 = vld [vmem:[%s3 + $0x38] sm:$0xf]
    %v240 = vld [vmem:[%s3 + $0x3c] sm:$0xf]
    %v241 = vld [vmem:[%s4] sm:$0x1]
    %v243 = vlaneseq
    %v244 = vshrl.u32 %v243, 7
    %v245 = vsub.s32 0, %v244
    %v246 = vrot.slane %v241, %v245
    %v264 = vunpack.c.l.b16 %v225
    %v265 = vunpack.c.l.b16 %v226
    %v266 = vunpack.c.l.b16 %v227
    %v267 = vunpack.c.l.b16 %v228
    %v268 = vunpack.c.l.b16 %v229
    %v269 = vunpack.c.l.b16 %v230
    %v270 = vunpack.c.l.b16 %v231
    %v271 = vunpack.c.l.b16 %v232
    %v272 = vunpack.c.l.b16 %v233
    %v273 = vunpack.c.l.b16 %v234
    %v274 = vunpack.c.l.b16 %v235
    %v275 = vunpack.c.l.b16 %v236
    %v276 = vunpack.c.l.b16 %v237
    %v277 = vunpack.c.l.b16 %v238
    %v278 = vunpack.c.l.b16 %v239
    %v279 = vunpack.c.l.b16 %v240
    %v280 = vpack.c.b16 %v265, %v264
    %v281 = vpack.c.b16 %v267, %v266
    %v282 = vpack.c.b16 %v269, %v268
    %v283 = vpack.c.b16 %v271, %v270
    %v284 = vpack.c.b16 %v273, %v272
    %v285 = vpack.c.b16 %v275, %v274
    %v286 = vpack.c.b16 %v277, %v276
    %v287 = vpack.c.b16 %v279, %v278
    %296 = vmatprep.subr.bf16.mxu0 0
    %297 = vmatpush1.bf16.msra.mxu0 %v287
    %298 = vmatprep.subr.bf16.mxu0 0
    %299 = vmatpush1.bf16.msra.mxu0 %v286
    %300 = vmatprep.subr.bf16.mxu0 0
    %301 = vmatpush1.bf16.msra.mxu0 %v285
    %302 = vmatprep.subr.bf16.mxu0 0
    %303 = vmatpush1.bf16.msra.mxu0 %v284
    %304 = vmatprep.subr.bf16.mxu0 0
    %305 = vmatpush1.bf16.msra.mxu0 %v283
    %306 = vmatprep.subr.bf16.mxu0 0
    %307 = vmatpush1.bf16.msra.mxu0 %v282
    %308 = vmatprep.subr.bf16.mxu0 0
    %309 = vmatpush1.bf16.msra.mxu0 %v281
    %310 = vmatprep.subr.bf16.mxu0 0
    %311 = vmatpush1.bf16.msra.mxu0 %v280
    %312 = vmatprep.subr.bf16.mxu0 0
    %313 = vmatpush2.bf16.msra.mxu0 0
    %314 = vmatprep.subr.bf16.mxu0 0
    %315 = vmatpush2.bf16.msra.mxu0 0
    %316 = vmatprep.subr.bf16.mxu0 0
    %317 = vmatpush2.bf16.msra.mxu0 0
    %318 = vmatprep.subr.bf16.mxu0 0
    %319 = vmatpush2.bf16.msra.mxu0 0
    %320 = vmatprep.subr.bf16.mxu0 0
    %321 = vmatpush2.bf16.msra.mxu0 0
    %322 = vmatprep.subr.bf16.mxu0 0
    %323 = vmatpush2.bf16.msra.mxu0 0
    %324 = vmatprep.subr.bf16.mxu0 0
    %325 = vmatpush2.bf16.msra.mxu0 0
    %326 = vmatprep.subr.bf16.mxu0 0
    %327 = vmatpush2.bf16.msra.mxu0 0
    %328 = vmatprep.mubr.bf16.mxu0 0
    %329 = vmatmul.mubr.bf16.gmra.mxu0 %v224
    %v330 = vpop.f32.mrf.mxu0
    %v331 = vadd.f32 %v246, %v330
    %v332 = vpop.f32.mrf.mxu0
    %v333 = vpop.f32.mrf.mxu0
    %v334 = vpop.f32.mrf.mxu0
    %335 = vdwg.mxu0
    %v336 = vmul.f32 %v331, 0.5
    %v337 = vtanh.pop %v336
    %v338 = vadd.f32 %v337, 1.0
    %v339 = vmul.f32 %v338, 0.5
    %vm340 = vcmask 9216
    %341 = vst.msk [vmem:[#allocation2] sm:$0x3] %vm340, %v339
    // Predicated region
    $region22: #{forward.11} parent=1 // pred_check
      _
    $region23: #{forward.11} parent=1 // pred_check_branch
      %343 = sbr.rel (0) target = $region25
    $region24: #{forward.11} parent=1 // pred_region
      %s345 = ssub.s32 32, 32
      %346 = vsyncadd [#allocation3], %s345
      %s348 = sshll.u32 [#allocation2], 4
      %s349 = int_to_ptr.vmem [resolvable:$true] %s348
      %351 = dma.vmem_to_hbm [thread:$0]  %s349, 32, %s5, [#allocation3]
    $region25: #{forward.11} parent=1 // pred_fallthru
      _
    // Predicated region
    $region26: #{forward.11} parent=1 // pred_check
      _
    $region27: #{forward.11} parent=1 // pred_check_branch
      %353 = sbr.rel (0) target = $region29
    $region28: #{forward.11} parent=1 // pred_region
      %354 = dma.done [#allocation3], 32
    $region29: #{forward.11} parent=1 // pred_fallthru
      _
    %355 = vsyncpa [#allocation3], 1

</llo_original>
